<compile_context>
chip_gen: v5e
topology: v5e:2x2
jax: 0.10.0
libtpu: 0.0.40
codegen_flags: <defaults>
</compile_context>

<pallas_src>
import functools

import jax
import jax.numpy as jnp
from jax.experimental import pallas as pl
from jax.experimental.pallas import tpu as pltpu


def _round_up(x, m):
    return (x + m - 1) // m * m


# ----------------------------- Pallas kernels ------------------------------- #
def _mm_bn_single_kernel(*refs, apply_relu, has_residual):
    """One-pass matmul (whole K/Cout resident) + shift (+ residual) (+ ReLU)."""
    if has_residual:
        x_ref, w_ref, s_ref, r_ref, o_ref = refs
    else:
        x_ref, w_ref, s_ref, o_ref = refs
        r_ref = None
    out = jnp.dot(x_ref[...], w_ref[...], preferred_element_type=jnp.float32)
    out = out + s_ref[...]
    if r_ref is not None:
        out = out + r_ref[...].astype(jnp.float32)
    if apply_relu:
        out = jnp.maximum(out, 0.0)
    o_ref[...] = out.astype(o_ref.dtype)


def _mm_bn_kloop_kernel(*refs, apply_relu, has_residual):
    """Tiled-K matmul with f32 scratch accumulator (fallback for huge weights)."""
    acc_ref = refs[-1]
    o_ref = refs[-2]
    if has_residual:
        x_ref, w_ref, s_ref, r_ref = refs[:4]
    else:
        x_ref, w_ref, s_ref = refs[:3]
        r_ref = None
    k = pl.program_id(2)

    @pl.when(k == 0)
    def _():
        acc_ref[...] = jnp.zeros_like(acc_ref)

    acc_ref[...] += jnp.dot(x_ref[...], w_ref[...],
                            preferred_element_type=jnp.float32)

    @pl.when(k == pl.num_programs(2) - 1)
    def _():
        out = acc_ref[...] + s_ref[...]
        if r_ref is not None:
            out = out + r_ref[...].astype(jnp.float32)
        if apply_relu:
            out = jnp.maximum(out, 0.0)
        o_ref[...] = out.astype(o_ref.dtype)


def _conv3x3_kernel(x_ref, w_ref, s_ref, o_ref, *, stride):
    """In-kernel 9-tap 3x3 conv over one padded image.

    x_ref: (1, Hp, Wp, C)   spatially padded image slab (bf16)
    w_ref: (9, C, Cout)     BN-scale-folded taps (bf16)
    s_ref: (1, Cout)        BN shift (f32)
    o_ref: (1, Ho, W, Cout) row-strided, column-dense output (bf16)
    """
    _, Ho, W, Cout = o_ref.shape
    C = x_ref.shape[-1]
    x = x_ref[0]                       # (Hp, Wp, C)
    Wp = x.shape[1]

    acc = jnp.zeros((Ho * W, Cout), jnp.float32)
    for kh in range(3):
        if stride == 1:
            rows = x[kh:kh + Ho]                                     # (Ho, Wp, C)
        else:
            # Row subsample via leading-dim reshape (no strided slice needed).
            rows = x[kh:kh + stride * Ho].reshape(Ho, stride, Wp, C)[:, 0]
        for kw in range(3):
            patch = rows[:, kw:kw + W, :].reshape(Ho * W, C)
            acc = acc + jnp.dot(patch, w_ref[kh * 3 + kw],
                                preferred_element_type=jnp.float32)

    out = jnp.maximum(acc + s_ref[...], 0.0)
    o_ref[...] = out.reshape(1, Ho, W, Cout).astype(o_ref.dtype)


# ------------------------------ Pallas wrappers ------------------------------ #
def fused_matmul_bn(x2d, w_mat, shift, residual=None, apply_relu=True,
                    out_dtype=jnp.bfloat16, tm=512):
    """conv-as-matmul with folded-BN shift (+ residual) (+ ReLU)."""
    M, K = x2d.shape
    Kw, Cout = w_mat.shape
    assert K == Kw
    x2d = x2d.astype(jnp.bfloat16)
    w = w_mat.astype(jnp.bfloat16)
    shift2 = shift.astype(jnp.float32).reshape(1, Cout)

    # Never pad M: ragged last tile is handled by Pallas masked stores.
    tm = min(tm, _round_up(M, 8))
    if pl.cdiv(M, tm) < 2 and M >= 16:          # keep >= 2 parallel blocks (v7x: 2 TCs)
        tm = _round_up(pl.cdiv(M, 2), 8)
    gm = pl.cdiv(M, tm)

    has_res = residual is not None
    flops = 2 * M * K * Cout
    bytes_accessed = (M * K * 2 + K * Cout * 2 + Cout * 4
                      + M * Cout * jnp.dtype(out_dtype).itemsize
                      + (M * Cout * 2 if has_res else 0))
    cost = pl.CostEstimate(flops=flops, transcendentals=0,
                           bytes_accessed=bytes_accessed)

    # Bottleneck 1x1 weights always fit VMEM -> weight-resident, no K loop.
    if K * Cout * 2 <= 8 * 1024 * 1024:
        in_specs = [pl.BlockSpec((tm, K), lambda i: (i, 0)),
                    pl.BlockSpec((K, Cout), lambda i: (0, 0)),   # grid-invariant
                    pl.BlockSpec((1, Cout), lambda i: (0, 0))]
        operands = [x2d, w, shift2]
        if has_res:
            in_specs.append(pl.BlockSpec((tm, Cout), lambda i: (i, 0)))
            operands.append(residual.astype(jnp.bfloat16))
        kernel = functools.partial(_mm_bn_single_kernel,
                                   apply_relu=apply_relu, has_residual=has_res)
        return pl.pallas_call(
            kernel,
            out_shape=jax.ShapeDtypeStruct((M, Cout), out_dtype),
            grid=(gm,),
            in_specs=in_specs,
            out_specs=pl.BlockSpec((tm, Cout), lambda i: (i, 0)),
            compiler_params=pltpu.CompilerParams(
                dimension_semantics=("parallel",)),
            cost_estimate=cost,
        )(*operands)

    # Fallback: K-tiled accumulation (zero-padded K for reduction correctness);
    # grid ordered (j, i, k) so the big activation stripe streams once and the
    # small weight is the operand that gets re-streamed.
    tk = min(512, _round_up(K, 128))
    Kp = _round_up(_round_up(K, 128), tk)
    tn = min(512, _round_up(Cout, 128))
    gn, gk = pl.cdiv(Cout, tn), Kp // tk
    x_p = jnp.pad(x2d, ((0, 0), (0, Kp - K)))
    w_p = jnp.pad(w, ((0, Kp - K), (0, 0)))
    in_specs = [pl.BlockSpec((tm, tk), lambda j, i, k: (i, k)),
                pl.BlockSpec((tk, tn), lambda j, i, k: (k, j)),
                pl.BlockSpec((1, tn), lambda j, i, k: (0, j))]
    operands = [x_p, w_p, shift2]
    if has_res:
        in_specs.append(pl.BlockSpec((tm, tn), lambda j, i, k: (i, j)))
        operands.append(residual.astype(jnp.bfloat16))
    kernel = functools.partial(_mm_bn_kloop_kernel,
                               apply_relu=apply_relu, has_residual=has_res)
    return pl.pallas_call(
        kernel,
        out_shape=jax.ShapeDtypeStruct((M, Cout), out_dtype),
        grid=(gn, gm, gk),
        in_specs=in_specs,
        out_specs=pl.BlockSpec((tm, tn), lambda j, i, k: (i, j)),
        scratch_shapes=[pltpu.VMEM((tm, tn), jnp.float32)],
        compiler_params=pltpu.CompilerParams(
            dimension_semantics=("parallel", "parallel", "arbitrary")),
        cost_estimate=cost,
    )(*operands)


def conv3x3_bn_relu(x_nhwc, w_oihw, bn_stats, stride):
    """3x3 conv (pad=1, stride) + folded BN + ReLU with in-kernel taps."""
    N, H, W, C = x_nhwc.shape
    Cout = w_oihw.shape[0]
    scale, shift = fold_bn(*bn_stats)
    w9 = (jnp.transpose(w_oihw, (2, 3, 1, 0)).reshape(9, C, Cout)
          * scale[None, None, :]).astype(jnp.bfloat16)
    shift2 = shift.astype(jnp.float32).reshape(1, Cout)

    Ho = (H - 1) // stride + 1
    Hp = stride * Ho + 2            # enough rows for kh + stride*Ho slices
    Wp = W + 2
    xpad = jnp.pad(x_nhwc.astype(jnp.bfloat16),
                   ((0, 0), (1, Hp - H - 1), (1, 1), (0, 0)))

    kernel = functools.partial(_conv3x3_kernel, stride=stride)
    z = pl.pallas_call(
        kernel,
        out_shape=jax.ShapeDtypeStruct((N, Ho, W, Cout), jnp.bfloat16),
        grid=(N,),
        in_specs=[pl.BlockSpec((1, Hp, Wp, C), lambda n: (n, 0, 0, 0)),
                  pl.BlockSpec((9, C, Cout), lambda n: (0, 0, 0)),
                  pl.BlockSpec((1, Cout), lambda n: (0, 0))],
        out_specs=pl.BlockSpec((1, Ho, W, Cout), lambda n: (n, 0, 0, 0)),
        compiler_params=pltpu.CompilerParams(dimension_semantics=("parallel",)),
        cost_estimate=pl.CostEstimate(
            flops=2 * N * Ho * W * 9 * C * Cout, transcendentals=0,
            bytes_accessed=(N * Hp * Wp * C * 2 + 9 * C * Cout * 2
                            + N * Ho * W * Cout * 2 + Cout * 4)),
    )(xpad, w9, shift2)

    if stride > 1:
        # TODO(synk): fold this small column subsample into the kernel epilogue.
        z = z[:, :, ::stride, :]
    return z  # (N, Ho, Wo, Cout) bf16


# --------------------------------- JAX glue ---------------------------------- #
def fold_bn(gamma, beta, mean, var, eps=1e-5):
    scale = gamma / jnp.sqrt(var + eps)
    shift = beta - mean * scale
    return scale, shift


def bottleneck_forward(x_nchw, params, stride):
    """Pallas implementation of Bottleneck.forward (inference-mode BN)."""
    expansion = 4
    x = jnp.transpose(x_nchw, (0, 2, 3, 1)).astype(jnp.bfloat16)   # NCHW -> NHWC
    N, H, W, Cin = x.shape
    planes = params["w1"].shape[0]
    Cout = expansion * planes

    # conv1 (1x1) + bn1 + relu (weight-resident matmul, BN scale folded into W)
    s1, b1 = fold_bn(*params["bn1"])
    w1 = params["w1"].reshape(planes, Cin).T * s1[None, :]
    o1 = fused_matmul_bn(x.reshape(N * H * W, Cin), w1, b1, apply_relu=True)
    o1 = o1.reshape(N, H, W, planes)

    # conv2 (3x3, stride, pad=1) + bn2 + relu (in-kernel 9-tap accumulation)
    o2 = conv3x3_bn_relu(o1, params["w2"], params["bn2"], stride)
    Ho, Wo = o2.shape[1], o2.shape[2]
    o2 = o2.reshape(N * Ho * Wo, planes)

    # shortcut branch
    if stride != 1 or Cin != Cout:
        # TODO(synk): fold the spatial subsample into the shortcut matmul BlockSpec.
        xs = x[:, ::stride, ::stride, :].reshape(N * Ho * Wo, Cin)
        ss, bs = fold_bn(*params["bns"])
        ws = params["ws"].reshape(Cout, Cin).T * ss[None, :]
        shortcut = fused_matmul_bn(xs, ws, bs, apply_relu=False)
    else:
        shortcut = x.reshape(N * Ho * Wo, Cin)

    # conv3 (1x1) + bn3 + residual add + relu, bf16 writeback, all fused
    s3, b3 = fold_bn(*params["bn3"])
    w3 = params["w3"].reshape(Cout, planes).T * s3[None, :]
    o3 = fused_matmul_bn(o2, w3, b3, residual=shortcut, apply_relu=True,
                         out_dtype=jnp.bfloat16)

    out = o3.reshape(N, Ho, Wo, Cout)
    return jnp.transpose(out, (0, 3, 1, 2)).astype(jnp.float32)   # NCHW f32


# ----------------------------- pure-JAX reference ---------------------------- #
def ref_forward(x, p, stride, eps=1e-5):
    def conv(x, w, s, pad):
        return jax.lax.conv_general_dilated(
            x, w, (s, s), [(pad, pad), (pad, pad)],
            dimension_numbers=("NCHW", "OIHW", "NCHW"))

    def bn(x, stats):
        g, b, m, v = stats
        return ((x - m[None, :, None, None])
                / jnp.sqrt(v[None, :, None, None] + eps)
                * g[None, :, None, None] + b[None, :, None, None])

    out = jax.nn.relu(bn(conv(x, p["w1"], 1, 0), p["bn1"]))
    out = jax.nn.relu(bn(conv(out, p["w2"], stride, 1), p["bn2"]))
    out = bn(conv(out, p["w3"], 1, 0), p["bn3"])
    Cout = p["w3"].shape[0]
    if stride != 1 or x.shape[1] != Cout:
        sc = bn(conv(x, p["ws"], stride, 0), p["bns"])
    else:
        sc = x
    return jax.nn.relu(out + sc)


# ------------------------------------ main ----------------------------------- #
if __name__ == "__main__":
    N, in_planes, planes, stride, H = 2, 8, 4, 2, 16
    expansion = 4
    Cout = expansion * planes

    key = jax.random.PRNGKey(0)
    ks = jax.random.split(key, 5)

    def bn_params(c):
        gamma = 1.0 + 0.1 * jnp.arange(c, dtype=jnp.float32)
        beta = 0.05 * jnp.arange(c, dtype=jnp.float32)
        mean = 0.01 * jnp.arange(c, dtype=jnp.float32)
        var = 1.0 + 0.02 * jnp.arange(c, dtype=jnp.float32)
        return (gamma, beta, mean, var)

    params = {
        "w1": 0.2 * jax.random.normal(ks[0], (planes, in_planes, 1, 1), jnp.float32),
        "w2": 0.2 * jax.random.normal(ks[1], (planes, planes, 3, 3), jnp.float32),
        "w3": 0.2 * jax.random.normal(ks[2], (Cout, planes, 1, 1), jnp.float32),
        "ws": 0.2 * jax.random.normal(ks[3], (Cout, in_planes, 1, 1), jnp.float32),
        "bn1": bn_params(planes),
        "bn2": bn_params(planes),
        "bn3": bn_params(Cout),
        "bns": bn_params(Cout),
    }

    x = jax.random.normal(ks[4], (N, in_planes, H, H), jnp.float32)

    fwd = jax.jit(bottleneck_forward, static_argnums=(2,))
    out = fwd(x, params, stride)
    out = jax.block_until_ready(out)

    assert out.shape == (N, Cout, H // stride, H // stride), out.shape

    ref = ref_forward(x, params, stride)
    max_err = float(jnp.max(jnp.abs(out - ref)))
    # bf16 MXU operands / bf16 activations -> loosened tolerance vs f32 reference.
    assert jnp.allclose(out, ref, atol=1e-1, rtol=1e-1), max_err

    print("KERNEL_OK")
</pallas_src>

<mosaic_0001>
module attributes {stable_mosaic.version = 11 : i64} {
  func.func @_mm_bn_single_kernel(%arg0: i32, %arg1: memref<64x8xbf16, #tpu.memory_space<vmem>>, %arg2: memref<8x16xbf16, #tpu.memory_space<vmem>>, %arg3: memref<1x16xf32, #tpu.memory_space<vmem>>, %arg4: memref<64x16xbf16, #tpu.memory_space<vmem>>) attributes {dimension_semantics = [#tpu.dimension_semantics<parallel>], iteration_bounds = array<i64: 2>, scalar_prefetch = 0 : i64, scratch_operands = 0 : i64, tpu.core_type = #tpu.core_type<tc>, window_params = [{transform_indices = @transform_0, window_bounds = array<i64: 64, 8>}, {pipeline_mode = #tpu.pipeline_mode<synchronous>, transform_indices = @transform_1, window_bounds = array<i64: 8, 16>}, {pipeline_mode = #tpu.pipeline_mode<synchronous>, transform_indices = @transform_2, window_bounds = array<i64: 1, 16>}, {transform_indices = @transform_3, window_bounds = array<i64: 64, 16>}]} {
    %c0 = arith.constant 0 : index
    %c0_0 = arith.constant 0 : index
    %0 = vector.load %arg1[%c0, %c0_0] : memref<64x8xbf16, #tpu.memory_space<vmem>>, vector<64x8xbf16>
    %c0_1 = arith.constant 0 : index
    %c0_2 = arith.constant 0 : index
    %1 = vector.load %arg2[%c0_1, %c0_2] : memref<8x16xbf16, #tpu.memory_space<vmem>>, vector<8x16xbf16>
    %cst = arith.constant dense<0.000000e+00> : vector<64x16xf32>
    %2 = tpu.matmul %0, %1, %cst {dimension_numbers = #tpu.dot_dimension_numbers<[1], [0], [0], [1], [0, 0, 1, 1], [], []>} : vector<64x8xbf16>, vector<8x16xbf16>, vector<64x16xf32> -> vector<64x16xf32>
    %c0_3 = arith.constant 0 : index
    %c0_4 = arith.constant 0 : index
    %3 = vector.load %arg3[%c0_3, %c0_4] : memref<1x16xf32, #tpu.memory_space<vmem>>, vector<1x16xf32>
    %4 = vector.broadcast %3 : vector<1x16xf32> to vector<64x16xf32>
    %5 = arith.addf %2, %4 : vector<64x16xf32>
    %6 = arith.truncf %5 : vector<64x16xf32> to vector<64x16xbf16>
    %c0_5 = arith.constant 0 : index
    %c0_6 = arith.constant 0 : index
    %7 = vector.load %arg4[%c0_5, %c0_6] : memref<64x16xbf16, #tpu.memory_space<vmem>>, vector<64x16xbf16>
    tpu.vector_store %arg4[%c0_5, %c0_6], %6 {strides = array<i32>} : memref<64x16xbf16, #tpu.memory_space<vmem>>, vector<64x16xbf16>,
    return
  }
  func.func @transform_0(%arg0: i32) -> (i32, i32) {
    %c0_i32 = arith.constant 0 : i32
    %c0_i32_0 = arith.constant 0 : i32
    return %arg0, %c0_i32 : i32, i32
  }
  func.func @transform_1(%arg0: i32) -> (i32, i32) {
    %c0_i32 = arith.constant 0 : i32
    %c0_i32_0 = arith.constant 0 : i32
    %c0_i32_1 = arith.constant 0 : i32
    return %c0_i32, %c0_i32_0 : i32, i32
  }
  func.func @transform_2(%arg0: i32) -> (i32, i32) {
    %c0_i32 = arith.constant 0 : i32
    %c0_i32_0 = arith.constant 0 : i32
    %c0_i32_1 = arith.constant 0 : i32
    return %c0_i32, %c0_i32_0 : i32, i32
  }
  func.func @transform_3(%arg0: i32) -> (i32, i32) {
    %c0_i32 = arith.constant 0 : i32
    %c0_i32_0 = arith.constant 0 : i32
    return %arg0, %c0_i32 : i32, i32
  }
}

module attributes {stable_mosaic.version = 11 : i64} {
  func.func @_mm_bn_single_kernel(%arg0: i32, %arg1: memref<256x8xbf16, #tpu.memory_space<vmem>>, %arg2: memref<8x4xbf16, #tpu.memory_space<vmem>>, %arg3: memref<1x4xf32, #tpu.memory_space<vmem>>, %arg4: memref<256x4xbf16, #tpu.memory_space<vmem>>) attributes {dimension_semantics = [#tpu.dimension_semantics<parallel>], iteration_bounds = array<i64: 2>, scalar_prefetch = 0 : i64, scratch_operands = 0 : i64, tpu.core_type = #tpu.core_type<tc>, window_params = [{transform_indices = @transform_0, window_bounds = array<i64: 256, 8>}, {pipeline_mode = #tpu.pipeline_mode<synchronous>, transform_indices = @transform_1, window_bounds = array<i64: 8, 4>}, {pipeline_mode = #tpu.pipeline_mode<synchronous>, transform_indices = @transform_2, window_bounds = array<i64: 1, 4>}, {transform_indices = @transform_3, window_bounds = array<i64: 256, 4>}]} {
    %c0 = arith.constant 0 : index
    %c0_0 = arith.constant 0 : index
    %0 = vector.load %arg1[%c0, %c0_0] : memref<256x8xbf16, #tpu.memory_space<vmem>>, vector<256x8xbf16>
    %c0_1 = arith.constant 0 : index
    %c0_2 = arith.constant 0 : index
    %1 = vector.load %arg2[%c0_1, %c0_2] : memref<8x4xbf16, #tpu.memory_space<vmem>>, vector<8x4xbf16>
    %cst = arith.constant dense<0.000000e+00> : vector<256x4xf32>
    %2 = tpu.matmul %0, %1, %cst {dimension_numbers = #tpu.dot_dimension_numbers<[1], [0], [0], [1], [0, 0, 1, 1], [], []>} : vector<256x8xbf16>, vector<8x4xbf16>, vector<256x4xf32> -> vector<256x4xf32>
    %c0_3 = arith.constant 0 : index
    %c0_4 = arith.constant 0 : index
    %3 = vector.load %arg3[%c0_3, %c0_4] : memref<1x4xf32, #tpu.memory_space<vmem>>, vector<1x4xf32>
    %4 = vector.broadcast %3 : vector<1x4xf32> to vector<256x4xf32>
    %5 = arith.addf %2, %4 : vector<256x4xf32>
    %cst_5 = arith.constant 0.000000e+00 : f32
    %6 = vector.broadcast %cst_5 : f32 to vector<256x4xf32>
    %7 = arith.maximumf %5, %6 : vector<256x4xf32>
    %8 = arith.truncf %7 : vector<256x4xf32> to vector<256x4xbf16>
    %c0_6 = arith.constant 0 : index
    %c0_7 = arith.constant 0 : index
    %9 = vector.load %arg4[%c0_6, %c0_7] : memref<256x4xbf16, #tpu.memory_space<vmem>>, vector<256x4xbf16>
    tpu.vector_store %arg4[%c0_6, %c0_7], %8 {strides = array<i32>} : memref<256x4xbf16, #tpu.memory_space<vmem>>, vector<256x4xbf16>,
    return
  }
  func.func @transform_0(%arg0: i32) -> (i32, i32) {
    %c0_i32 = arith.constant 0 : i32
    %c0_i32_0 = arith.constant 0 : i32
    return %arg0, %c0_i32 : i32, i32
  }
  func.func @transform_1(%arg0: i32) -> (i32, i32) {
    %c0_i32 = arith.constant 0 : i32
    %c0_i32_0 = arith.constant 0 : i32
    %c0_i32_1 = arith.constant 0 : i32
    return %c0_i32, %c0_i32_0 : i32, i32
  }
  func.func @transform_2(%arg0: i32) -> (i32, i32) {
    %c0_i32 = arith.constant 0 : i32
    %c0_i32_0 = arith.constant 0 : i32
    %c0_i32_1 = arith.constant 0 : i32
    return %c0_i32, %c0_i32_0 : i32, i32
  }
  func.func @transform_3(%arg0: i32) -> (i32, i32) {
    %c0_i32 = arith.constant 0 : i32
    %c0_i32_0 = arith.constant 0 : i32
    return %arg0, %c0_i32 : i32, i32
  }
}

module attributes {stable_mosaic.version = 11 : i64} {
  func.func @_conv3x3_kernel(%arg0: i32, %arg1: memref<1x18x18x4xbf16, #tpu.memory_space<vmem>>, %arg2: memref<9x4x4xbf16, #tpu.memory_space<vmem>>, %arg3: memref<1x4xf32, #tpu.memory_space<vmem>>, %arg4: memref<1x8x16x4xbf16, #tpu.memory_space<vmem>>) attributes {dimension_semantics = [#tpu.dimension_semantics<parallel>], iteration_bounds = array<i64: 2>, scalar_prefetch = 0 : i64, scratch_operands = 0 : i64, tpu.core_type = #tpu.core_type<tc>, window_params = [{transform_indices = @transform_0, window_bounds = array<i64: 1, 18, 18, 4>}, {pipeline_mode = #tpu.pipeline_mode<synchronous>, transform_indices = @transform_1, window_bounds = array<i64: 9, 4, 4>}, {pipeline_mode = #tpu.pipeline_mode<synchronous>, transform_indices = @transform_2, window_bounds = array<i64: 1, 4>}, {transform_indices = @transform_3, window_bounds = array<i64: 1, 8, 16, 4>}]} {
    %c0 = arith.constant 0 : index
    %c0_0 = arith.constant 0 : index
    %c0_1 = arith.constant 0 : index
    %c0_2 = arith.constant 0 : index
    %0 = vector.load %arg1[%c0, %c0_0, %c0_1, %c0_2] : memref<1x18x18x4xbf16, #tpu.memory_space<vmem>>, vector<1x18x18x4xbf16>
    %1 = vector.shape_cast %0 : vector<1x18x18x4xbf16> to vector<18x18x4xbf16>
    %cst = arith.constant 0.000000e+00 : f32
    %2 = vector.broadcast %cst : f32 to vector<128x4xf32>
    %3 = vector.extract_strided_slice %1 {offsets = [0, 0, 0], sizes = [16, 18, 4], strides = [1, 1, 1]} : vector<18x18x4xbf16> to vector<16x18x4xbf16>
    %4 = vector.shape_cast %3 : vector<16x18x4xbf16> to vector<8x2x18x4xbf16>
    %5 = vector.extract_strided_slice %4 {offsets = [0, 0, 0, 0], sizes = [8, 1, 18, 4], strides = [1, 1, 1, 1]} : vector<8x2x18x4xbf16> to vector<8x1x18x4xbf16>
    %6 = vector.shape_cast %5 : vector<8x1x18x4xbf16> to vector<8x18x4xbf16>
    %7 = vector.extract_strided_slice %6 {offsets = [0, 0, 0], sizes = [8, 16, 4], strides = [1, 1, 1]} : vector<8x18x4xbf16> to vector<8x16x4xbf16>
    %8 = vector.shape_cast %7 : vector<8x16x4xbf16> to vector<128x4xbf16>
    %c0_3 = arith.constant 0 : index
    %c0_4 = arith.constant 0 : index
    %c0_5 = arith.constant 0 : index
    %9 = vector.load %arg2[%c0_3, %c0_4, %c0_5] : memref<9x4x4xbf16, #tpu.memory_space<vmem>>, vector<1x4x4xbf16>
    %10 = vector.shape_cast %9 : vector<1x4x4xbf16> to vector<4x4xbf16>
    %cst_6 = arith.constant dense<0.000000e+00> : vector<128x4xf32>
    %11 = tpu.matmul %8, %10, %cst_6 {dimension_numbers = #tpu.dot_dimension_numbers<[1], [0], [0], [1], [0, 0, 1, 1], [], []>} : vector<128x4xbf16>, vector<4x4xbf16>, vector<128x4xf32> -> vector<128x4xf32>
    %12 = arith.addf %2, %11 : vector<128x4xf32>
    %13 = vector.extract_strided_slice %6 {offsets = [0, 1, 0], sizes = [8, 16, 4], strides = [1, 1, 1]} : vector<8x18x4xbf16> to vector<8x16x4xbf16>
    %14 = vector.shape_cast %13 : vector<8x16x4xbf16> to vector<128x4xbf16>
    %c1 = arith.constant 1 : index
    %c0_7 = arith.constant 0 : index
    %c0_8 = arith.constant 0 : index
    %15 = vector.load %arg2[%c1, %c0_7, %c0_8] : memref<9x4x4xbf16, #tpu.memory_space<vmem>>, vector<1x4x4xbf16>
    %16 = vector.shape_cast %15 : vector<1x4x4xbf16> to vector<4x4xbf16>
    %cst_9 = arith.constant dense<0.000000e+00> : vector<128x4xf32>
    %17 = tpu.matmul %14, %16, %cst_9 {dimension_numbers = #tpu.dot_dimension_numbers<[1], [0], [0], [1], [0, 0, 1, 1], [], []>} : vector<128x4xbf16>, vector<4x4xbf16>, vector<128x4xf32> -> vector<128x4xf32>
    %18 = arith.addf %12, %17 : vector<128x4xf32>
    %19 = vector.extract_strided_slice %6 {offsets = [0, 2, 0], sizes = [8, 16, 4], strides = [1, 1, 1]} : vector<8x18x4xbf16> to vector<8x16x4xbf16>
    %20 = vector.shape_cast %19 : vector<8x16x4xbf16> to vector<128x4xbf16>
    %c2 = arith.constant 2 : index
    %c0_10 = arith.constant 0 : index
    %c0_11 = arith.constant 0 : index
    %21 = vector.load %arg2[%c2, %c0_10, %c0_11] : memref<9x4x4xbf16, #tpu.memory_space<vmem>>, vector<1x4x4xbf16>
    %22 = vector.shape_cast %21 : vector<1x4x4xbf16> to vector<4x4xbf16>
    %cst_12 = arith.constant dense<0.000000e+00> : vector<128x4xf32>
    %23 = tpu.matmul %20, %22, %cst_12 {dimension_numbers = #tpu.dot_dimension_numbers<[1], [0], [0], [1], [0, 0, 1, 1], [], []>} : vector<128x4xbf16>, vector<4x4xbf16>, vector<128x4xf32> -> vector<128x4xf32>
    %24 = arith.addf %18, %23 : vector<128x4xf32>
    %25 = vector.extract_strided_slice %1 {offsets = [1, 0, 0], sizes = [16, 18, 4], strides = [1, 1, 1]} : vector<18x18x4xbf16> to vector<16x18x4xbf16>
    %26 = vector.shape_cast %25 : vector<16x18x4xbf16> to vector<8x2x18x4xbf16>
    %27 = vector.extract_strided_slice %26 {offsets = [0, 0, 0, 0], sizes = [8, 1, 18, 4], strides = [1, 1, 1, 1]} : vector<8x2x18x4xbf16> to vector<8x1x18x4xbf16>
    %28 = vector.shape_cast %27 : vector<8x1x18x4xbf16> to vector<8x18x4xbf16>
    %29 = vector.extract_strided_slice %28 {offsets = [0, 0, 0], sizes = [8, 16, 4], strides = [1, 1, 1]} : vector<8x18x4xbf16> to vector<8x16x4xbf16>
    %30 = vector.shape_cast %29 : vector<8x16x4xbf16> to vector<128x4xbf16>
    %c3 = arith.constant 3 : index
    %c0_13 = arith.constant 0 : index
    %c0_14 = arith.constant 0 : index
    %31 = vector.load %arg2[%c3, %c0_13, %c0_14] : memref<9x4x4xbf16, #tpu.memory_space<vmem>>, vector<1x4x4xbf16>
    %32 = vector.shape_cast %31 : vector<1x4x4xbf16> to vector<4x4xbf16>
    %cst_15 = arith.constant dense<0.000000e+00> : vector<128x4xf32>
    %33 = tpu.matmul %30, %32, %cst_15 {dimension_numbers = #tpu.dot_dimension_numbers<[1], [0], [0], [1], [0, 0, 1, 1], [], []>} : vector<128x4xbf16>, vector<4x4xbf16>, vector<128x4xf32> -> vector<128x4xf32>
    %34 = arith.addf %24, %33 : vector<128x4xf32>
    %35 = vector.extract_strided_slice %28 {offsets = [0, 1, 0], sizes = [8, 16, 4], strides = [1, 1, 1]} : vector<8x18x4xbf16> to vector<8x16x4xbf16>
    %36 = vector.shape_cast %35 : vector<8x16x4xbf16> to vector<128x4xbf16>
    %c4 = arith.constant 4 : index
    %c0_16 = arith.constant 0 : index
    %c0_17 = arith.constant 0 : index
    %37 = vector.load %arg2[%c4, %c0_16, %c0_17] : memref<9x4x4xbf16, #tpu.memory_space<vmem>>, vector<1x4x4xbf16>
    %38 = vector.shape_cast %37 : vector<1x4x4xbf16> to vector<4x4xbf16>
    %cst_18 = arith.constant dense<0.000000e+00> : vector<128x4xf32>
    %39 = tpu.matmul %36, %38, %cst_18 {dimension_numbers = #tpu.dot_dimension_numbers<[1], [0], [0], [1], [0, 0, 1, 1], [], []>} : vector<128x4xbf16>, vector<4x4xbf16>, vector<128x4xf32> -> vector<128x4xf32>
    %40 = arith.addf %34, %39 : vector<128x4xf32>
    %41 = vector.extract_strided_slice %28 {offsets = [0, 2, 0], sizes = [8, 16, 4], strides = [1, 1, 1]} : vector<8x18x4xbf16> to vector<8x16x4xbf16>
    %42 = vector.shape_cast %41 : vector<8x16x4xbf16> to vector<128x4xbf16>
    %c5 = arith.constant 5 : index
    %c0_19 = arith.constant 0 : index
    %c0_20 = arith.constant 0 : index
    %43 = vector.load %arg2[%c5, %c0_19, %c0_20] : memref<9x4x4xbf16, #tpu.memory_space<vmem>>, vector<1x4x4xbf16>
    %44 = vector.shape_cast %43 : vector<1x4x4xbf16> to vector<4x4xbf16>
    %cst_21 = arith.constant dense<0.000000e+00> : vector<128x4xf32>
    %45 = tpu.matmul %42, %44, %cst_21 {dimension_numbers = #tpu.dot_dimension_numbers<[1], [0], [0], [1], [0, 0, 1, 1], [], []>} : vector<128x4xbf16>, vector<4x4xbf16>, vector<128x4xf32> -> vector<128x4xf32>
    %46 = arith.addf %40, %45 : vector<128x4xf32>
    %47 = vector.extract_strided_slice %1 {offsets = [2, 0, 0], sizes = [16, 18, 4], strides = [1, 1, 1]} : vector<18x18x4xbf16> to vector<16x18x4xbf16>
    %48 = vector.shape_cast %47 : vector<16x18x4xbf16> to vector<8x2x18x4xbf16>
    %49 = vector.extract_strided_slice %48 {offsets = [0, 0, 0, 0], sizes = [8, 1, 18, 4], strides = [1, 1, 1, 1]} : vector<8x2x18x4xbf16> to vector<8x1x18x4xbf16>
    %50 = vector.shape_cast %49 : vector<8x1x18x4xbf16> to vector<8x18x4xbf16>
    %51 = vector.extract_strided_slice %50 {offsets = [0, 0, 0], sizes = [8, 16, 4], strides = [1, 1, 1]} : vector<8x18x4xbf16> to vector<8x16x4xbf16>
    %52 = vector.shape_cast %51 : vector<8x16x4xbf16> to vector<128x4xbf16>
    %c6 = arith.constant 6 : index
    %c0_22 = arith.constant 0 : index
    %c0_23 = arith.constant 0 : index
    %53 = vector.load %arg2[%c6, %c0_22, %c0_23] : memref<9x4x4xbf16, #tpu.memory_space<vmem>>, vector<1x4x4xbf16>
    %54 = vector.shape_cast %53 : vector<1x4x4xbf16> to vector<4x4xbf16>
    %cst_24 = arith.constant dense<0.000000e+00> : vector<128x4xf32>
    %55 = tpu.matmul %52, %54, %cst_24 {dimension_numbers = #tpu.dot_dimension_numbers<[1], [0], [0], [1], [0, 0, 1, 1], [], []>} : vector<128x4xbf16>, vector<4x4xbf16>, vector<128x4xf32> -> vector<128x4xf32>
    %56 = arith.addf %46, %55 : vector<128x4xf32>
    %57 = vector.extract_strided_slice %50 {offsets = [0, 1, 0], sizes = [8, 16, 4], strides = [1, 1, 1]} : vector<8x18x4xbf16> to vector<8x16x4xbf16>
    %58 = vector.shape_cast %57 : vector<8x16x4xbf16> to vector<128x4xbf16>
    %c7 = arith.constant 7 : index
    %c0_25 = arith.constant 0 : index
    %c0_26 = arith.constant 0 : index
    %59 = vector.load %arg2[%c7, %c0_25, %c0_26] : memref<9x4x4xbf16, #tpu.memory_space<vmem>>, vector<1x4x4xbf16>
    %60 = vector.shape_cast %59 : vector<1x4x4xbf16> to vector<4x4xbf16>
    %cst_27 = arith.constant dense<0.000000e+00> : vector<128x4xf32>
    %61 = tpu.matmul %58, %60, %cst_27 {dimension_numbers = #tpu.dot_dimension_numbers<[1], [0], [0], [1], [0, 0, 1, 1], [], []>} : vector<128x4xbf16>, vector<4x4xbf16>, vector<128x4xf32> -> vector<128x4xf32>
    %62 = arith.addf %56, %61 : vector<128x4xf32>
    %63 = vector.extract_strided_slice %50 {offsets = [0, 2, 0], sizes = [8, 16, 4], strides = [1, 1, 1]} : vector<8x18x4xbf16> to vector<8x16x4xbf16>
    %64 = vector.shape_cast %63 : vector<8x16x4xbf16> to vector<128x4xbf16>
    %c8 = arith.constant 8 : index
    %c0_28 = arith.constant 0 : index
    %c0_29 = arith.constant 0 : index
    %65 = vector.load %arg2[%c8, %c0_28, %c0_29] : memref<9x4x4xbf16, #tpu.memory_space<vmem>>, vector<1x4x4xbf16>
    %66 = vector.shape_cast %65 : vector<1x4x4xbf16> to vector<4x4xbf16>
    %cst_30 = arith.constant dense<0.000000e+00> : vector<128x4xf32>
    %67 = tpu.matmul %64, %66, %cst_30 {dimension_numbers = #tpu.dot_dimension_numbers<[1], [0], [0], [1], [0, 0, 1, 1], [], []>} : vector<128x4xbf16>, vector<4x4xbf16>, vector<128x4xf32> -> vector<128x4xf32>
    %68 = arith.addf %62, %67 : vector<128x4xf32>
    %c0_31 = arith.constant 0 : index
    %c0_32 = arith.constant 0 : index
    %69 = vector.load %arg3[%c0_31, %c0_32] : memref<1x4xf32, #tpu.memory_space<vmem>>, vector<1x4xf32>
    %70 = vector.broadcast %69 : vector<1x4xf32> to vector<128x4xf32>
    %71 = arith.addf %68, %70 : vector<128x4xf32>
    %cst_33 = arith.constant 0.000000e+00 : f32
    %72 = vector.broadcast %cst_33 : f32 to vector<128x4xf32>
    %73 = arith.maximumf %71, %72 : vector<128x4xf32>
    %74 = vector.shape_cast %73 : vector<128x4xf32> to vector<1x8x16x4xf32>
    %75 = arith.truncf %74 : vector<1x8x16x4xf32> to vector<1x8x16x4xbf16>
    %c0_34 = arith.constant 0 : index
    %c0_35 = arith.constant 0 : index
    %c0_36 = arith.constant 0 : index
    %c0_37 = arith.constant 0 : index
    %76 = vector.load %arg4[%c0_34, %c0_35, %c0_36, %c0_37] : memref<1x8x16x4xbf16, #tpu.memory_space<vmem>>, vector<1x8x16x4xbf16>
    tpu.vector_store %arg4[%c0_34, %c0_35, %c0_36, %c0_37], %75 {strides = array<i32>} : memref<1x8x16x4xbf16, #tpu.memory_space<vmem>>, vector<1x8x16x4xbf16>,
    return
  }
  func.func @transform_0(%arg0: i32) -> (i32, i32, i32, i32) {
    %c0_i32 = arith.constant 0 : i32
    %c0_i32_0 = arith.constant 0 : i32
    %c0_i32_1 = arith.constant 0 : i32
    %c0_i32_2 = arith.constant 0 : i32
    return %arg0, %c0_i32, %c0_i32_0, %c0_i32_1 : i32, i32, i32, i32
  }
  func.func @transform_1(%arg0: i32) -> (i32, i32, i32) {
    %c0_i32 = arith.constant 0 : i32
    %c0_i32_0 = arith.constant 0 : i32
    %c0_i32_1 = arith.constant 0 : i32
    %c0_i32_2 = arith.constant 0 : i32
    return %c0_i32, %c0_i32_0, %c0_i32_1 : i32, i32, i32
  }
  func.func @transform_2(%arg0: i32) -> (i32, i32) {
    %c0_i32 = arith.constant 0 : i32
    %c0_i32_0 = arith.constant 0 : i32
    %c0_i32_1 = arith.constant 0 : i32
    return %c0_i32, %c0_i32_0 : i32, i32
  }
  func.func @transform_3(%arg0: i32) -> (i32, i32, i32, i32) {
    %c0_i32 = arith.constant 0 : i32
    %c0_i32_0 = arith.constant 0 : i32
    %c0_i32_1 = arith.constant 0 : i32
    %c0_i32_2 = arith.constant 0 : i32
    return %arg0, %c0_i32, %c0_i32_0, %c0_i32_1 : i32, i32, i32, i32
  }
}

module attributes {stable_mosaic.version = 11 : i64} {
  func.func @_mm_bn_single_kernel(%arg0: i32, %arg1: memref<64x4xbf16, #tpu.memory_space<vmem>>, %arg2: memref<4x16xbf16, #tpu.memory_space<vmem>>, %arg3: memref<1x16xf32, #tpu.memory_space<vmem>>, %arg4: memref<64x16xbf16, #tpu.memory_space<vmem>>, %arg5: memref<64x16xbf16, #tpu.memory_space<vmem>>) attributes {dimension_semantics = [#tpu.dimension_semantics<parallel>], iteration_bounds = array<i64: 2>, scalar_prefetch = 0 : i64, scratch_operands = 0 : i64, tpu.core_type = #tpu.core_type<tc>, window_params = [{transform_indices = @transform_0, window_bounds = array<i64: 64, 4>}, {pipeline_mode = #tpu.pipeline_mode<synchronous>, transform_indices = @transform_1, window_bounds = array<i64: 4, 16>}, {pipeline_mode = #tpu.pipeline_mode<synchronous>, transform_indices = @transform_2, window_bounds = array<i64: 1, 16>}, {transform_indices = @transform_3, window_bounds = array<i64: 64, 16>}, {transform_indices = @transform_4, window_bounds = array<i64: 64, 16>}]} {
    %c0 = arith.constant 0 : index
    %c0_0 = arith.constant 0 : index
    %0 = vector.load %arg1[%c0, %c0_0] : memref<64x4xbf16, #tpu.memory_space<vmem>>, vector<64x4xbf16>
    %c0_1 = arith.constant 0 : index
    %c0_2 = arith.constant 0 : index
    %1 = vector.load %arg2[%c0_1, %c0_2] : memref<4x16xbf16, #tpu.memory_space<vmem>>, vector<4x16xbf16>
    %cst = arith.constant dense<0.000000e+00> : vector<64x16xf32>
    %2 = tpu.matmul %0, %1, %cst {dimension_numbers = #tpu.dot_dimension_numbers<[1], [0], [0], [1], [0, 0, 1, 1], [], []>} : vector<64x4xbf16>, vector<4x16xbf16>, vector<64x16xf32> -> vector<64x16xf32>
    %c0_3 = arith.constant 0 : index
    %c0_4 = arith.constant 0 : index
    %3 = vector.load %arg3[%c0_3, %c0_4] : memref<1x16xf32, #tpu.memory_space<vmem>>, vector<1x16xf32>
    %4 = vector.broadcast %3 : vector<1x16xf32> to vector<64x16xf32>
    %5 = arith.addf %2, %4 : vector<64x16xf32>
    %c0_5 = arith.constant 0 : index
    %c0_6 = arith.constant 0 : index
    %6 = vector.load %arg4[%c0_5, %c0_6] : memref<64x16xbf16, #tpu.memory_space<vmem>>, vector<64x16xbf16>
    %7 = arith.extf %6 : vector<64x16xbf16> to vector<64x16xf32>
    %8 = arith.addf %5, %7 : vector<64x16xf32>
    %cst_7 = arith.constant 0.000000e+00 : f32
    %9 = vector.broadcast %cst_7 : f32 to vector<64x16xf32>
    %10 = arith.maximumf %8, %9 : vector<64x16xf32>
    %11 = arith.truncf %10 : vector<64x16xf32> to vector<64x16xbf16>
    %c0_8 = arith.constant 0 : index
    %c0_9 = arith.constant 0 : index
    %12 = vector.load %arg5[%c0_8, %c0_9] : memref<64x16xbf16, #tpu.memory_space<vmem>>, vector<64x16xbf16>
    tpu.vector_store %arg5[%c0_8, %c0_9], %11 {strides = array<i32>} : memref<64x16xbf16, #tpu.memory_space<vmem>>, vector<64x16xbf16>,
    return
  }
  func.func @transform_0(%arg0: i32) -> (i32, i32) {
    %c0_i32 = arith.constant 0 : i32
    %c0_i32_0 = arith.constant 0 : i32
    return %arg0, %c0_i32 : i32, i32
  }
  func.func @transform_1(%arg0: i32) -> (i32, i32) {
    %c0_i32 = arith.constant 0 : i32
    %c0_i32_0 = arith.constant 0 : i32
    %c0_i32_1 = arith.constant 0 : i32
    return %c0_i32, %c0_i32_0 : i32, i32
  }
  func.func @transform_2(%arg0: i32) -> (i32, i32) {
    %c0_i32 = arith.constant 0 : i32
    %c0_i32_0 = arith.constant 0 : i32
    %c0_i32_1 = arith.constant 0 : i32
    return %c0_i32, %c0_i32_0 : i32, i32
  }
  func.func @transform_3(%arg0: i32) -> (i32, i32) {
    %c0_i32 = arith.constant 0 : i32
    %c0_i32_0 = arith.constant 0 : i32
    return %arg0, %c0_i32 : i32, i32
  }
  func.func @transform_4(%arg0: i32) -> (i32, i32) {
    %c0_i32 = arith.constant 0 : i32
    %c0_i32_0 = arith.constant 0 : i32
    return %arg0, %c0_i32 : i32, i32
  }
}

</mosaic_0001>

<llo_original>
// kernel: bottleneck_forward.6
$region0: #{bottleneck_forward.6}
  #allocation0 [shape = 'u32[]', space=smem, size = 0x4, offset = 0x4, fixed_abs, tag = 'smem constant byte address 0x4 - core index']
  #allocation1 [shape = 'u32[72,128]{1,0:T(1,128)}', space=vmem, size = 0x9000, scoped, tag = 'internal scratch']
  %s0 = inlined_call_operand.vmem [shape: bf16[128,8], index: 0, kind: input, shape index: {}]
  %s1 = inlined_call_operand.vmem [shape: bf16[8,16], index: 1, kind: input, shape index: {}]
  %s2 = inlined_call_operand.vmem [shape: f32[1,16], index: 2, kind: input, shape index: {}]
  %s3 = inlined_call_operand.vmem [shape: bf16[128,16], index: 3, kind: output, shape index: {}]
  %s4 = sld [smem:[#allocation0]]
  $region45: #{bottleneck_forward.6} parent=0
    _
  %s6 = ssub.s32 1, %s4
  %s7 = scalar_select 0, %s6, %s4
  loop: start=0, step=1, limit=4
  $region2: #{bottleneck_forward.6} parent=0 // loop_pre_header
    _
  $region3: #{bottleneck_forward.6} parent=0 // loop_header
    %s9 = sphi 0, %s13
    %p10 = scmp.ge.s32.totalorder %s9, 4
    %s19 = sphi 0, %s21
    %s22 = sphi 0, %s19
    %s23 = sphi 0, %s22
    %s39 = sphi 0, %s23
    %s43 = sphi 0, %s43
    %s45 = sphi 0, %s43
    %s46 = sphi 0, %s45
    %s60 = sphi 0, %s46
    %s64 = sphi 0, %s64
    %s66 = sphi 0, %s64
    %s67 = sphi 0, %s66
    %s81 = sphi 0, %s67
    %s87 = sphi 0, %s89
    %s90 = sphi 0, %s87
    %s91 = sphi 0, %s90
    %s107 = sphi 0, %s91
  $region4: #{bottleneck_forward.6} parent=0 // loop_header_branch
    %12 = sbr.rel (%p10) target = $region8
  $region5: #{bottleneck_forward.6} parent=0 // loop_body
    %s14 = ssub.s32 %s9, 1
    %s15 = ssub.s32 %s9, 2
    %s16 = sadd.s32 %s9, 1
    %s17 = ssub.s32 %s9, %s16
    %p18 = scmp.eq.s32.totalorder %s17, 0
    %s20 = sadd.s32 %s19, 1
    %s21 = scalar_select %p18, %s19, %s20
    %p24 = pneg %p18
    %p25 = scmp.eq.s32.totalorder %s9, 1
    %p26 = por %p24, %p25
    %p27 = scmp.ne.s32.totalorder %s19, %s22
    %p28 = scmp.eq.s32.totalorder %s9, 0
    %p29 = por %p27, %p28
    %p30 = scmp.ne.s32.totalorder %s19, %s22
    %p31 = scmp.eq.s32.totalorder %s14, 1
    %p32 = por %p30, %p31
    %p33 = scmp.ne.s32.totalorder %s22, %s23
    %p34 = scmp.eq.s32.totalorder %s14, 0
    %p35 = por %p33, %p34
    %p36 = scmp.ne.s32.totalorder %s22, %s23
    %p37 = scmp.eq.s32.totalorder %s15, 1
    %p38 = por %p36, %p37
    %p40 = scmp.ne.s32.totalorder %s23, %s39
    %p41 = scmp.eq.s32.totalorder %s15, 0
    %p42 = por %p40, %p41
    %s44 = sadd.s32 %s43, 1
    %p47 = scmp.eq.s32.totalorder %s9, 1
    %p48 = scmp.ne.s32.totalorder %s43, %s45
    %p49 = scmp.eq.s32.totalorder %s9, 0
    %p50 = por %p48, %p49
    %p51 = scmp.ne.s32.totalorder %s43, %s45
    %p52 = scmp.eq.s32.totalorder %s14, 1
    %p53 = por %p51, %p52
    %p54 = scmp.ne.s32.totalorder %s45, %s46
    %p55 = scmp.eq.s32.totalorder %s14, 0
    %p56 = por %p54, %p55
    %p57 = scmp.ne.s32.totalorder %s45, %s46
    %p58 = scmp.eq.s32.totalorder %s15, 1
    %p59 = por %p57, %p58
    %p61 = scmp.ne.s32.totalorder %s46, %s60
    %p62 = scmp.eq.s32.totalorder %s15, 0
    %p63 = por %p61, %p62
    %s65 = sadd.s32 %s64, 1
    %p68 = scmp.eq.s32.totalorder %s9, 1
    %p69 = scmp.ne.s32.totalorder %s64, %s66
    %p70 = scmp.eq.s32.totalorder %s9, 0
    %p71 = por %p69, %p70
    %p72 = scmp.ne.s32.totalorder %s64, %s66
    %p73 = scmp.eq.s32.totalorder %s14, 1
    %p74 = por %p72, %p73
    %p75 = scmp.ne.s32.totalorder %s66, %s67
    %p76 = scmp.eq.s32.totalorder %s14, 0
    %p77 = por %p75, %p76
    %p78 = scmp.ne.s32.totalorder %s66, %s67
    %p79 = scmp.eq.s32.totalorder %s15, 1
    %p80 = por %p78, %p79
    %p82 = scmp.ne.s32.totalorder %s67, %s81
    %p83 = scmp.eq.s32.totalorder %s15, 0
    %p84 = por %p82, %p83
    %s85 = ssub.s32 %s9, %s16
    %p86 = scmp.eq.s32.totalorder %s85, 0
    %s88 = sadd.s32 %s87, 1
    %s89 = scalar_select %p86, %s87, %s88
    %p92 = pneg %p86
    %p93 = scmp.eq.s32.totalorder %s9, 1
    %p94 = por %p92, %p93
    %p95 = scmp.ne.s32.totalorder %s87, %s90
    %p96 = scmp.eq.s32.totalorder %s9, 0
    %p97 = por %p95, %p96
    %p98 = scmp.ne.s32.totalorder %s87, %s90
    %p99 = scmp.eq.s32.totalorder %s14, 1
    %p100 = por %p98, %p99
    %p101 = scmp.ne.s32.totalorder %s90, %s91
    %p102 = scmp.eq.s32.totalorder %s14, 0
    %p103 = por %p101, %p102
    %p104 = scmp.ne.s32.totalorder %s90, %s91
    %p105 = scmp.eq.s32.totalorder %s15, 1
    %p106 = por %p104, %p105
    %p108 = scmp.ne.s32.totalorder %s91, %s107
    %p109 = scmp.eq.s32.totalorder %s15, 0
    %p110 = por %p108, %p109
    %p111 = scmp.le.s32.totalorder 1, %s9
    %p112 = scmp.lt.s32.totalorder %s9, 3
    %p113 = pnand %p111, %p112
    %p114 = pneg %p113
    // Predicated region
    $region9: #{bottleneck_forward.6} parent=5 // pred_check
      _
    $region10: #{bottleneck_forward.6} parent=5 // pred_check_branch
      %116 = sbr.rel (%p113) target = $region12
    $region11: #{bottleneck_forward.6} parent=5 // pred_region
      %s117 = ssub.s32 %s9, 1
      // Predicated region
      $region13: #{bottleneck_forward.6} parent=11 // pred_check
        %p118 = pneg %p56
      $region14: #{bottleneck_forward.6} parent=11 // pred_check_branch
        %120 = sbr.rel (%p118) target = $region16
      $region15: #{bottleneck_forward.6} parent=11 // pred_region
        _
      $region16: #{bottleneck_forward.6} parent=11 // pred_fallthru
        _
      // Predicated region
      $region17: #{bottleneck_forward.6} parent=11 // pred_check
        %p121 = pneg %p77
      $region18: #{bottleneck_forward.6} parent=11 // pred_check_branch
        %123 = sbr.rel (%p121) target = $region20
      $region19: #{bottleneck_forward.6} parent=11 // pred_region
        _
      $region20: #{bottleneck_forward.6} parent=11 // pred_fallthru
        _
    $region12: #{bottleneck_forward.6} parent=5 // pred_fallthru
      _
    %p124 = scmp.lt.s32.totalorder %s9, 2
    // Predicated region
    $region21: #{bottleneck_forward.6} parent=5 // pred_check
      %p125 = pneg %p124
    $region22: #{bottleneck_forward.6} parent=5 // pred_check_branch
      %127 = sbr.rel (%p125) target = $region24
    $region23: #{bottleneck_forward.6} parent=5 // pred_region
      // Predicated region
      $region25: #{bottleneck_forward.6} parent=23 // pred_check
        %p128 = pneg %p29
      $region26: #{bottleneck_forward.6} parent=23 // pred_check_branch
        %130 = sbr.rel (%p128) target = $region28
      $region27: #{bottleneck_forward.6} parent=23 // pred_region
        %s131 = smul.u32 8, %s9
        %p132 = scmp.lt.s32.totalorder %s131, 15
        %s133 = scalar_select %p132, %s131, 15
        %s134 = smul.addr %s133, 4
        %s135 = scalar_lea.vmem %s0, %s134
        %s136 = smul.u32 8, %s9
      $region28: #{bottleneck_forward.6} parent=23 // pred_fallthru
        _
    $region24: #{bottleneck_forward.6} parent=5 // pred_fallthru
      _
    %p137 = scmp.le.s32.totalorder 1, %s9
    %p138 = scmp.lt.s32.totalorder %s9, 3
    %p139 = pnand %p137, %p138
    %p140 = pneg %p139
    // Predicated region
    $region29: #{bottleneck_forward.6} parent=5 // pred_check
      _
    $region30: #{bottleneck_forward.6} parent=5 // pred_check_branch
      %142 = sbr.rel (%p139) target = $region32
    $region31: #{bottleneck_forward.6} parent=5 // pred_region
      %s143 = ssub.s32 %s9, 1
      %s144 = smul.u32 8, %s14
      %p145 = scmp.lt.s32.totalorder %s144, 15
      %s146 = scalar_select %p145, %s144, 15
      %s147 = smul.addr %s146, 4
      %s148 = scalar_lea.vmem %s0, %s147
      %p149 = pneg %p35
      %p150 = pneg %p32
      %p151 = pneg %p56
      %p152 = pneg %p53
      %p153 = pneg %p77
      %p154 = pneg %p74
      %p155 = pneg %p103
      %p156 = pneg %p100
      %s157 = smul.u32 8, %s14
      %p158 = scmp.lt.s32.totalorder %s157, 15
      %s159 = scalar_select %p158, %s157, 15
      %s160 = smul.addr %s159, 4
      %s161 = scalar_lea.vmem %s3, %s160
      %s162 = smul.u32 8, %s14
      %p163 = scmp.lt.s32.totalorder %s162, 15
      %s164 = scalar_select %p163, %s162, 15
      %s165 = smul.addr %s164, 4
      %s166 = scalar_lea.vmem %s0, %s165
      %s167 = smul.u32 8, %s14
      %s168 = smul.u32 8, %s14
      %p169 = scmp.lt.s32.totalorder %s168, 15
      %s170 = scalar_select %p169, %s168, 15
      %s171 = smul.addr %s170, 4
      %s172 = scalar_lea.vmem %s3, %s171
      %s173 = smul.u32 8, %s14
      %v175 = vld [vmem:[%s166] sm:$0xf]
      %v176 = vld [vmem:[%s166 + $0x4] sm:$0xf]
      %v177 = vld [vmem:[%s166 + $0x8] sm:$0xf]
      %v178 = vld [vmem:[%s166 + $0xc] sm:$0xf]
      %v179 = vld [vmem:[%s166 + $0x10] sm:$0xf]
      %v180 = vld [vmem:[%s166 + $0x14] sm:$0xf]
      %v181 = vld [vmem:[%s166 + $0x18] sm:$0xf]
      %v182 = vld [vmem:[%s166 + $0x1c] sm:$0xf]
      %v183 = vld [vmem:[%s1] sm:$0xf]
      %v184 = vld [vmem:[%s2] sm:$0x1]
      %v186 = vperm.slane %v184, 0
      %v196 = vunpack.c.l.b16 %v175
      %v197 = vunpack.c.l.b16 %v176
      %v198 = vunpack.c.l.b16 %v177
      %v199 = vunpack.c.l.b16 %v178
      %v200 = vunpack.c.l.b16 %v179
      %v201 = vunpack.c.l.b16 %v180
      %v202 = vunpack.c.l.b16 %v181
      %v203 = vunpack.c.l.b16 %v182
      %v204 = vpack.c.b16 %v197, %v196
      %v205 = vpack.c.b16 %v199, %v198
      %v206 = vpack.c.b16 %v201, %v200
      %v207 = vpack.c.b16 %v203, %v202
      %vm208 = vcmask 64512
      %v210 = vsel %vm208, %v204, 0
      %v213 = vsel %vm208, %v205, 0
      %v216 = vsel %vm208, %v206, 0
      %v219 = vsel %vm208, %v207, 0
      %vm221 = vcmask 1043456
      %v223 = vsel %vm221, %v183, 0
      %225 = vmatpush.bf16.msra.mxu0 0
      %226 = vmatpush.bf16.msra.mxu0 0
      %227 = vmatpush.bf16.msra.mxu0 0
      %228 = vmatpush.bf16.msra.mxu0 0
      %229 = vmatpush.bf16.msra.mxu0 0
      %230 = vmatpush.bf16.msra.mxu0 0
      %231 = vmatpush.bf16.msra.mxu0 0
      %232 = vmatpush.bf16.msra.mxu0 %v223
      %233 = vmatmul.bf16.gmra.mxu0 %v210
      %v234 = vpop.f32.mrf.mxu0
      %v235 = vadd.f32 %v186, %v234
      %v236 = vpop.f32.mrf.mxu0
      %v237 = vadd.f32 %v186, %v236
      %238 = vmatmul.bf16.gmra.mxu0 %v213
      %v239 = vpop.f32.mrf.mxu0
      %v240 = vadd.f32 %v186, %v239
      %v241 = vpop.f32.mrf.mxu0
      %v242 = vadd.f32 %v186, %v241
      %243 = vmatmul.bf16.gmra.mxu0 %v216
      %v244 = vpop.f32.mrf.mxu0
      %v245 = vadd.f32 %v186, %v244
      %v246 = vpop.f32.mrf.mxu0
      %v247 = vadd.f32 %v186, %v246
      %248 = vmatmul.bf16.gmra.mxu0 %v219
      %v249 = vpop.f32.mrf.mxu0
      %v250 = vadd.f32 %v186, %v249
      %v251 = vpop.f32.mrf.mxu0
      %v252 = vadd.f32 %v186, %v251
      %253 = vdwg.mxu0
      %v254 = vpack.c.bf16 %v235, %v235
      %v255 = vpack.c.bf16 %v237, %v237
      %v256 = vpack.c.bf16 %v240, %v240
      %v257 = vpack.c.bf16 %v242, %v242
      %v258 = vpack.c.bf16 %v245, %v245
      %v259 = vpack.c.bf16 %v247, %v247
      %v260 = vpack.c.bf16 %v250, %v250
      %v261 = vpack.c.bf16 %v252, %v252
      %vm262 = vcmask 125952
      %263 = vst.msk [vmem:[%s172] sm:$0xf] %vm262, %v254
      %264 = vst.msk [vmem:[%s172 + $0x4] sm:$0xf] %vm262, %v255
      %265 = vst.msk [vmem:[%s172 + $0x8] sm:$0xf] %vm262, %v256
      %266 = vst.msk [vmem:[%s172 + $0xc] sm:$0xf] %vm262, %v257
      %267 = vst.msk [vmem:[%s172 + $0x10] sm:$0xf] %vm262, %v258
      %268 = vst.msk [vmem:[%s172 + $0x14] sm:$0xf] %vm262, %v259
      %269 = vst.msk [vmem:[%s172 + $0x18] sm:$0xf] %vm262, %v260
      %270 = vst.msk [vmem:[%s172 + $0x1c] sm:$0xf] %vm262, %v261
      %s271 = smul.u32 8, %s14
      %p272 = scmp.lt.s32.totalorder %s271, 15
      %s273 = scalar_select %p272, %s271, 15
      %s274 = smul.addr %s273, 4
      %s275 = scalar_lea.vmem %s3, %s274
      // Predicated region
      $region33: #{bottleneck_forward.6} parent=31 // pred_check
        %p276 = pneg %p100
      $region34: #{bottleneck_forward.6} parent=31 // pred_check_branch
        %278 = sbr.rel (%p276) target = $region36
      $region35: #{bottleneck_forward.6} parent=31 // pred_region
        %s279 = smul.u32 8, %s14
      $region36: #{bottleneck_forward.6} parent=31 // pred_fallthru
        _
    $region32: #{bottleneck_forward.6} parent=5 // pred_fallthru
      _
    %p280 = scmp.le.s32.totalorder 2, %s9
    // Predicated region
    $region37: #{bottleneck_forward.6} parent=5 // pred_check
      %p281 = pneg %p280
    $region38: #{bottleneck_forward.6} parent=5 // pred_check_branch
      %283 = sbr.rel (%p281) target = $region40
    $region39: #{bottleneck_forward.6} parent=5 // pred_region
      %s284 = ssub.s32 %s9, 2
      // Predicated region
      $region41: #{bottleneck_forward.6} parent=39 // pred_check
        %p285 = pneg %p106
      $region42: #{bottleneck_forward.6} parent=39 // pred_check_branch
        %287 = sbr.rel (%p285) target = $region44
      $region43: #{bottleneck_forward.6} parent=39 // pred_region
        %s288 = smul.u32 8, %s15
        %p289 = scmp.lt.s32.totalorder %s288, 15
        %s290 = scalar_select %p289, %s288, 15
        %s291 = smul.addr %s290, 4
        %s292 = scalar_lea.vmem %s3, %s291
      $region44: #{bottleneck_forward.6} parent=39 // pred_fallthru
        _
    $region40: #{bottleneck_forward.6} parent=5 // pred_fallthru
      _
  $region6: #{bottleneck_forward.6} parent=0 // loop_footer
    %s13 = sadd.s32 1, %s9
  $region7: #{bottleneck_forward.6} parent=0 // loop_footer_branch
    %8 = sbr.rel target = $region3
  $region8: #{bottleneck_forward.6} parent=0 // loop_exit
    _

// kernel: bottleneck_forward.4
$region0: #{bottleneck_forward.4}
  #allocation0 [shape = 'u32[]', space=smem, size = 0x4, offset = 0x4, fixed_abs, tag = 'smem constant byte address 0x4 - core index']
  #allocation1 [shape = 'u32[72,128]{1,0:T(1,128)}', space=vmem, size = 0x9000, scoped, tag = 'internal scratch']
  %s0 = inlined_call_operand.vmem [shape: bf16[512,8], index: 0, kind: input, shape index: {}]
  %s1 = inlined_call_operand.vmem [shape: bf16[8,4], index: 1, kind: input, shape index: {}]
  %s2 = inlined_call_operand.vmem [shape: f32[1,4], index: 2, kind: input, shape index: {}]
  %s3 = inlined_call_operand.vmem [shape: bf16[512,4], index: 3, kind: output, shape index: {}]
  %s4 = sld [smem:[#allocation0]]
  $region45: #{bottleneck_forward.4} parent=0
    _
  %s6 = ssub.s32 1, %s4
  %s7 = scalar_select 0, %s6, %s4
  loop: start=0, step=1, limit=4
  $region2: #{bottleneck_forward.4} parent=0 // loop_pre_header
    _
  $region3: #{bottleneck_forward.4} parent=0 // loop_header
    %s9 = sphi 0, %s13
    %p10 = scmp.ge.s32.totalorder %s9, 4
    %s19 = sphi 0, %s21
    %s22 = sphi 0, %s19
    %s23 = sphi 0, %s22
    %s39 = sphi 0, %s23
    %s43 = sphi 0, %s43
    %s45 = sphi 0, %s43
    %s46 = sphi 0, %s45
    %s60 = sphi 0, %s46
    %s64 = sphi 0, %s64
    %s66 = sphi 0, %s64
    %s67 = sphi 0, %s66
    %s81 = sphi 0, %s67
    %s87 = sphi 0, %s89
    %s90 = sphi 0, %s87
    %s91 = sphi 0, %s90
    %s107 = sphi 0, %s91
  $region4: #{bottleneck_forward.4} parent=0 // loop_header_branch
    %12 = sbr.rel (%p10) target = $region8
  $region5: #{bottleneck_forward.4} parent=0 // loop_body
    %s14 = ssub.s32 %s9, 1
    %s15 = ssub.s32 %s9, 2
    %s16 = sadd.s32 %s9, 1
    %s17 = ssub.s32 %s9, %s16
    %p18 = scmp.eq.s32.totalorder %s17, 0
    %s20 = sadd.s32 %s19, 1
    %s21 = scalar_select %p18, %s19, %s20
    %p24 = pneg %p18
    %p25 = scmp.eq.s32.totalorder %s9, 1
    %p26 = por %p24, %p25
    %p27 = scmp.ne.s32.totalorder %s19, %s22
    %p28 = scmp.eq.s32.totalorder %s9, 0
    %p29 = por %p27, %p28
    %p30 = scmp.ne.s32.totalorder %s19, %s22
    %p31 = scmp.eq.s32.totalorder %s14, 1
    %p32 = por %p30, %p31
    %p33 = scmp.ne.s32.totalorder %s22, %s23
    %p34 = scmp.eq.s32.totalorder %s14, 0
    %p35 = por %p33, %p34
    %p36 = scmp.ne.s32.totalorder %s22, %s23
    %p37 = scmp.eq.s32.totalorder %s15, 1
    %p38 = por %p36, %p37
    %p40 = scmp.ne.s32.totalorder %s23, %s39
    %p41 = scmp.eq.s32.totalorder %s15, 0
    %p42 = por %p40, %p41
    %s44 = sadd.s32 %s43, 1
    %p47 = scmp.eq.s32.totalorder %s9, 1
    %p48 = scmp.ne.s32.totalorder %s43, %s45
    %p49 = scmp.eq.s32.totalorder %s9, 0
    %p50 = por %p48, %p49
    %p51 = scmp.ne.s32.totalorder %s43, %s45
    %p52 = scmp.eq.s32.totalorder %s14, 1
    %p53 = por %p51, %p52
    %p54 = scmp.ne.s32.totalorder %s45, %s46
    %p55 = scmp.eq.s32.totalorder %s14, 0
    %p56 = por %p54, %p55
    %p57 = scmp.ne.s32.totalorder %s45, %s46
    %p58 = scmp.eq.s32.totalorder %s15, 1
    %p59 = por %p57, %p58
    %p61 = scmp.ne.s32.totalorder %s46, %s60
    %p62 = scmp.eq.s32.totalorder %s15, 0
    %p63 = por %p61, %p62
    %s65 = sadd.s32 %s64, 1
    %p68 = scmp.eq.s32.totalorder %s9, 1
    %p69 = scmp.ne.s32.totalorder %s64, %s66
    %p70 = scmp.eq.s32.totalorder %s9, 0
    %p71 = por %p69, %p70
    %p72 = scmp.ne.s32.totalorder %s64, %s66
    %p73 = scmp.eq.s32.totalorder %s14, 1
    %p74 = por %p72, %p73
    %p75 = scmp.ne.s32.totalorder %s66, %s67
    %p76 = scmp.eq.s32.totalorder %s14, 0
    %p77 = por %p75, %p76
    %p78 = scmp.ne.s32.totalorder %s66, %s67
    %p79 = scmp.eq.s32.totalorder %s15, 1
    %p80 = por %p78, %p79
    %p82 = scmp.ne.s32.totalorder %s67, %s81
    %p83 = scmp.eq.s32.totalorder %s15, 0
    %p84 = por %p82, %p83
    %s85 = ssub.s32 %s9, %s16
    %p86 = scmp.eq.s32.totalorder %s85, 0
    %s88 = sadd.s32 %s87, 1
    %s89 = scalar_select %p86, %s87, %s88
    %p92 = pneg %p86
    %p93 = scmp.eq.s32.totalorder %s9, 1
    %p94 = por %p92, %p93
    %p95 = scmp.ne.s32.totalorder %s87, %s90
    %p96 = scmp.eq.s32.totalorder %s9, 0
    %p97 = por %p95, %p96
    %p98 = scmp.ne.s32.totalorder %s87, %s90
    %p99 = scmp.eq.s32.totalorder %s14, 1
    %p100 = por %p98, %p99
    %p101 = scmp.ne.s32.totalorder %s90, %s91
    %p102 = scmp.eq.s32.totalorder %s14, 0
    %p103 = por %p101, %p102
    %p104 = scmp.ne.s32.totalorder %s90, %s91
    %p105 = scmp.eq.s32.totalorder %s15, 1
    %p106 = por %p104, %p105
    %p108 = scmp.ne.s32.totalorder %s91, %s107
    %p109 = scmp.eq.s32.totalorder %s15, 0
    %p110 = por %p108, %p109
    %p111 = scmp.le.s32.totalorder 1, %s9
    %p112 = scmp.lt.s32.totalorder %s9, 3
    %p113 = pnand %p111, %p112
    %p114 = pneg %p113
    // Predicated region
    $region9: #{bottleneck_forward.4} parent=5 // pred_check
      _
    $region10: #{bottleneck_forward.4} parent=5 // pred_check_branch
      %116 = sbr.rel (%p113) target = $region12
    $region11: #{bottleneck_forward.4} parent=5 // pred_region
      %s117 = ssub.s32 %s9, 1
      // Predicated region
      $region13: #{bottleneck_forward.4} parent=11 // pred_check
        %p118 = pneg %p56
      $region14: #{bottleneck_forward.4} parent=11 // pred_check_branch
        %120 = sbr.rel (%p118) target = $region16
      $region15: #{bottleneck_forward.4} parent=11 // pred_region
        _
      $region16: #{bottleneck_forward.4} parent=11 // pred_fallthru
        _
      // Predicated region
      $region17: #{bottleneck_forward.4} parent=11 // pred_check
        %p121 = pneg %p77
      $region18: #{bottleneck_forward.4} parent=11 // pred_check_branch
        %123 = sbr.rel (%p121) target = $region20
      $region19: #{bottleneck_forward.4} parent=11 // pred_region
        _
      $region20: #{bottleneck_forward.4} parent=11 // pred_fallthru
        _
    $region12: #{bottleneck_forward.4} parent=5 // pred_fallthru
      _
    %p124 = scmp.lt.s32.totalorder %s9, 2
    // Predicated region
    $region21: #{bottleneck_forward.4} parent=5 // pred_check
      %p125 = pneg %p124
    $region22: #{bottleneck_forward.4} parent=5 // pred_check_branch
      %127 = sbr.rel (%p125) target = $region24
    $region23: #{bottleneck_forward.4} parent=5 // pred_region
      // Predicated region
      $region25: #{bottleneck_forward.4} parent=23 // pred_check
        %p128 = pneg %p29
      $region26: #{bottleneck_forward.4} parent=23 // pred_check_branch
        %130 = sbr.rel (%p128) target = $region28
      $region27: #{bottleneck_forward.4} parent=23 // pred_region
        %s131 = smul.u32 32, %s9
        %p132 = scmp.lt.s32.totalorder %s131, 63
        %s133 = scalar_select %p132, %s131, 63
        %s134 = smul.addr %s133, 4
        %s135 = scalar_lea.vmem %s0, %s134
        %s136 = smul.u32 32, %s9
      $region28: #{bottleneck_forward.4} parent=23 // pred_fallthru
        _
    $region24: #{bottleneck_forward.4} parent=5 // pred_fallthru
      _
    %p137 = scmp.le.s32.totalorder 1, %s9
    %p138 = scmp.lt.s32.totalorder %s9, 3
    %p139 = pnand %p137, %p138
    %p140 = pneg %p139
    // Predicated region
    $region29: #{bottleneck_forward.4} parent=5 // pred_check
      _
    $region30: #{bottleneck_forward.4} parent=5 // pred_check_branch
      %142 = sbr.rel (%p139) target = $region32
    $region31: #{bottleneck_forward.4} parent=5 // pred_region
      %s143 = ssub.s32 %s9, 1
      %s144 = smul.u32 32, %s14
      %p145 = scmp.lt.s32.totalorder %s144, 63
      %s146 = scalar_select %p145, %s144, 63
      %s147 = smul.addr %s146, 4
      %s148 = scalar_lea.vmem %s0, %s147
      %p149 = pneg %p35
      %p150 = pneg %p32
      %p151 = pneg %p56
      %p152 = pneg %p53
      %p153 = pneg %p77
      %p154 = pneg %p74
      %p155 = pneg %p103
      %p156 = pneg %p100
      %s157 = smul.u32 32, %s14
      %p158 = scmp.lt.s32.totalorder %s157, 63
      %s159 = scalar_select %p158, %s157, 63
      %s160 = smul.addr %s159, 4
      %s161 = scalar_lea.vmem %s3, %s160
      %s162 = smul.u32 32, %s14
      %p163 = scmp.lt.s32.totalorder %s162, 63
      %s164 = scalar_select %p163, %s162, 63
      %s165 = smul.addr %s164, 4
      %s166 = scalar_lea.vmem %s0, %s165
      %s167 = smul.u32 32, %s14
      %s168 = smul.u32 32, %s14
      %p169 = scmp.lt.s32.totalorder %s168, 63
      %s170 = scalar_select %p169, %s168, 63
      %s171 = smul.addr %s170, 4
      %s172 = scalar_lea.vmem %s3, %s171
      %s173 = smul.u32 32, %s14
      %v175 = vld [vmem:[%s166] sm:$0xf]
      %v176 = vld [vmem:[%s166 + $0x4] sm:$0xf]
      %v177 = vld [vmem:[%s166 + $0x8] sm:$0xf]
      %v178 = vld [vmem:[%s166 + $0xc] sm:$0xf]
      %v179 = vld [vmem:[%s166 + $0x10] sm:$0xf]
      %v180 = vld [vmem:[%s166 + $0x14] sm:$0xf]
      %v181 = vld [vmem:[%s166 + $0x18] sm:$0xf]
      %v182 = vld [vmem:[%s166 + $0x1c] sm:$0xf]
      %v183 = vld [vmem:[%s166 + $0x20] sm:$0xf]
      %v184 = vld [vmem:[%s166 + $0x24] sm:$0xf]
      %v185 = vld [vmem:[%s166 + $0x28] sm:$0xf]
      %v186 = vld [vmem:[%s166 + $0x2c] sm:$0xf]
      %v187 = vld [vmem:[%s166 + $0x30] sm:$0xf]
      %v188 = vld [vmem:[%s166 + $0x34] sm:$0xf]
      %v189 = vld [vmem:[%s166 + $0x38] sm:$0xf]
      %v190 = vld [vmem:[%s166 + $0x3c] sm:$0xf]
      %v191 = vld [vmem:[%s166 + $0x40] sm:$0xf]
      %v192 = vld [vmem:[%s166 + $0x44] sm:$0xf]
      %v193 = vld [vmem:[%s166 + $0x48] sm:$0xf]
      %v194 = vld [vmem:[%s166 + $0x4c] sm:$0xf]
      %v195 = vld [vmem:[%s166 + $0x50] sm:$0xf]
      %v196 = vld [vmem:[%s166 + $0x54] sm:$0xf]
      %v197 = vld [vmem:[%s166 + $0x58] sm:$0xf]
      %v198 = vld [vmem:[%s166 + $0x5c] sm:$0xf]
      %v199 = vld [vmem:[%s166 + $0x60] sm:$0xf]
      %v200 = vld [vmem:[%s166 + $0x64] sm:$0xf]
      %v201 = vld [vmem:[%s166 + $0x68] sm:$0xf]
      %v202 = vld [vmem:[%s166 + $0x6c] sm:$0xf]
      %v203 = vld [vmem:[%s166 + $0x70] sm:$0xf]
      %v204 = vld [vmem:[%s166 + $0x74] sm:$0xf]
      %v205 = vld [vmem:[%s166 + $0x78] sm:$0xf]
      %v206 = vld [vmem:[%s166 + $0x7c] sm:$0xf]
      %v207 = vld [vmem:[%s1] sm:$0xf]
      %v208 = vld [vmem:[%s2] sm:$0x1]
      %v210 = vperm.slane %v208, 0
      %v244 = vunpack.c.l.b16 %v175
      %v245 = vunpack.c.l.b16 %v176
      %v246 = vunpack.c.l.b16 %v177
      %v247 = vunpack.c.l.b16 %v178
      %v248 = vunpack.c.l.b16 %v179
      %v249 = vunpack.c.l.b16 %v180
      %v250 = vunpack.c.l.b16 %v181
      %v251 = vunpack.c.l.b16 %v182
      %v252 = vunpack.c.l.b16 %v183
      %v253 = vunpack.c.l.b16 %v184
      %v254 = vunpack.c.l.b16 %v185
      %v255 = vunpack.c.l.b16 %v186
      %v256 = vunpack.c.l.b16 %v187
      %v257 = vunpack.c.l.b16 %v188
      %v258 = vunpack.c.l.b16 %v189
      %v259 = vunpack.c.l.b16 %v190
      %v260 = vunpack.c.l.b16 %v191
      %v261 = vunpack.c.l.b16 %v192
      %v262 = vunpack.c.l.b16 %v193
      %v263 = vunpack.c.l.b16 %v194
      %v264 = vunpack.c.l.b16 %v195
      %v265 = vunpack.c.l.b16 %v196
      %v266 = vunpack.c.l.b16 %v197
      %v267 = vunpack.c.l.b16 %v198
      %v268 = vunpack.c.l.b16 %v199
      %v269 = vunpack.c.l.b16 %v200
      %v270 = vunpack.c.l.b16 %v201
      %v271 = vunpack.c.l.b16 %v202
      %v272 = vunpack.c.l.b16 %v203
      %v273 = vunpack.c.l.b16 %v204
      %v274 = vunpack.c.l.b16 %v205
      %v275 = vunpack.c.l.b16 %v206
      %v276 = vpack.c.b16 %v245, %v244
      %v277 = vpack.c.b16 %v247, %v246
      %v278 = vpack.c.b16 %v249, %v248
      %v279 = vpack.c.b16 %v251, %v250
      %v280 = vpack.c.b16 %v253, %v252
      %v281 = vpack.c.b16 %v255, %v254
      %v282 = vpack.c.b16 %v257, %v256
      %v283 = vpack.c.b16 %v259, %v258
      %v284 = vpack.c.b16 %v261, %v260
      %v285 = vpack.c.b16 %v263, %v262
      %v286 = vpack.c.b16 %v265, %v264
      %v287 = vpack.c.b16 %v267, %v266
      %v288 = vpack.c.b16 %v269, %v268
      %v289 = vpack.c.b16 %v271, %v270
      %v290 = vpack.c.b16 %v273, %v272
      %v291 = vpack.c.b16 %v275, %v274
      %vm292 = vcmask 64512
      %v294 = vsel %vm292, %v276, 0
      %v297 = vsel %vm292, %v277, 0
      %v300 = vsel %vm292, %v278, 0
      %v303 = vsel %vm292, %v279, 0
      %v306 = vsel %vm292, %v280, 0
      %v309 = vsel %vm292, %v281, 0
      %v312 = vsel %vm292, %v282, 0
      %v315 = vsel %vm292, %v283, 0
      %v318 = vsel %vm292, %v284, 0
      %v321 = vsel %vm292, %v285, 0
      %v324 = vsel %vm292, %v286, 0
      %v327 = vsel %vm292, %v287, 0
      %v330 = vsel %vm292, %v288, 0
      %v333 = vsel %vm292, %v289, 0
      %v336 = vsel %vm292, %v290, 0
      %v339 = vsel %vm292, %v291, 0
      %vm341 = vcmask 1043456
      %v343 = vsel %vm341, %v207, 0
      %345 = vmatpush.bf16.msra.mxu0 0
      %346 = vmatpush.bf16.msra.mxu0 0
      %347 = vmatpush.bf16.msra.mxu0 0
      %348 = vmatpush.bf16.msra.mxu0 0
      %349 = vmatpush.bf16.msra.mxu0 0
      %350 = vmatpush.bf16.msra.mxu0 0
      %351 = vmatpush.bf16.msra.mxu0 0
      %352 = vmatpush.bf16.msra.mxu0 %v343
      %353 = vmatmul.bf16.gmra.mxu0 %v294
      %v354 = vpop.f32.mrf.mxu0
      %v355 = vadd.f32 %v210, %v354
      %v356 = vpop.f32.mrf.mxu0
      %v357 = vadd.f32 %v210, %v356
      %358 = vmatmul.bf16.gmra.mxu0 %v297
      %v359 = vpop.f32.mrf.mxu0
      %v360 = vadd.f32 %v210, %v359
      %v361 = vpop.f32.mrf.mxu0
      %v362 = vadd.f32 %v210, %v361
      %363 = vmatmul.bf16.gmra.mxu0 %v300
      %v364 = vpop.f32.mrf.mxu0
      %v365 = vadd.f32 %v210, %v364
      %v366 = vpop.f32.mrf.mxu0
      %v367 = vadd.f32 %v210, %v366
      %368 = vmatmul.bf16.gmra.mxu0 %v303
      %v369 = vpop.f32.mrf.mxu0
      %v370 = vadd.f32 %v210, %v369
      %v371 = vpop.f32.mrf.mxu0
      %v372 = vadd.f32 %v210, %v371
      %373 = vmatmul.bf16.gmra.mxu0 %v306
      %v374 = vpop.f32.mrf.mxu0
      %v375 = vadd.f32 %v210, %v374
      %v376 = vpop.f32.mrf.mxu0
      %v377 = vadd.f32 %v210, %v376
      %378 = vmatmul.bf16.gmra.mxu0 %v309
      %v379 = vpop.f32.mrf.mxu0
      %v380 = vadd.f32 %v210, %v379
      %v381 = vpop.f32.mrf.mxu0
      %v382 = vadd.f32 %v210, %v381
      %383 = vmatmul.bf16.gmra.mxu0 %v312
      %v384 = vpop.f32.mrf.mxu0
      %v385 = vadd.f32 %v210, %v384
      %v386 = vpop.f32.mrf.mxu0
      %v387 = vadd.f32 %v210, %v386
      %388 = vmatmul.bf16.gmra.mxu0 %v315
      %v389 = vpop.f32.mrf.mxu0
      %v390 = vadd.f32 %v210, %v389
      %v391 = vpop.f32.mrf.mxu0
      %v392 = vadd.f32 %v210, %v391
      %393 = vmatmul.bf16.gmra.mxu0 %v318
      %v394 = vpop.f32.mrf.mxu0
      %v395 = vadd.f32 %v210, %v394
      %v396 = vpop.f32.mrf.mxu0
      %v397 = vadd.f32 %v210, %v396
      %398 = vmatmul.bf16.gmra.mxu0 %v321
      %v399 = vpop.f32.mrf.mxu0
      %v400 = vadd.f32 %v210, %v399
      %v401 = vpop.f32.mrf.mxu0
      %v402 = vadd.f32 %v210, %v401
      %403 = vmatmul.bf16.gmra.mxu0 %v324
      %v404 = vpop.f32.mrf.mxu0
      %v405 = vadd.f32 %v210, %v404
      %v406 = vpop.f32.mrf.mxu0
      %v407 = vadd.f32 %v210, %v406
      %408 = vmatmul.bf16.gmra.mxu0 %v327
      %v409 = vpop.f32.mrf.mxu0
      %v410 = vadd.f32 %v210, %v409
      %v411 = vpop.f32.mrf.mxu0
      %v412 = vadd.f32 %v210, %v411
      %413 = vmatmul.bf16.gmra.mxu0 %v330
      %v414 = vpop.f32.mrf.mxu0
      %v415 = vadd.f32 %v210, %v414
      %v416 = vpop.f32.mrf.mxu0
      %v417 = vadd.f32 %v210, %v416
      %418 = vmatmul.bf16.gmra.mxu0 %v333
      %v419 = vpop.f32.mrf.mxu0
      %v420 = vadd.f32 %v210, %v419
      %v421 = vpop.f32.mrf.mxu0
      %v422 = vadd.f32 %v210, %v421
      %423 = vmatmul.bf16.gmra.mxu0 %v336
      %v424 = vpop.f32.mrf.mxu0
      %v425 = vadd.f32 %v210, %v424
      %v426 = vpop.f32.mrf.mxu0
      %v427 = vadd.f32 %v210, %v426
      %428 = vmatmul.bf16.gmra.mxu0 %v339
      %v429 = vpop.f32.mrf.mxu0
      %v430 = vadd.f32 %v210, %v429
      %v431 = vpop.f32.mrf.mxu0
      %v432 = vadd.f32 %v210, %v431
      %433 = vdwg.mxu0
      %v434 = vmax.f32 %v355, 0.0
      %v435 = vmax.f32 %v357, 0.0
      %v436 = vmax.f32 %v360, 0.0
      %v437 = vmax.f32 %v362, 0.0
      %v438 = vmax.f32 %v365, 0.0
      %v439 = vmax.f32 %v367, 0.0
      %v440 = vmax.f32 %v370, 0.0
      %v441 = vmax.f32 %v372, 0.0
      %v442 = vmax.f32 %v375, 0.0
      %v443 = vmax.f32 %v377, 0.0
      %v444 = vmax.f32 %v380, 0.0
      %v445 = vmax.f32 %v382, 0.0
      %v446 = vmax.f32 %v385, 0.0
      %v447 = vmax.f32 %v387, 0.0
      %v448 = vmax.f32 %v390, 0.0
      %v449 = vmax.f32 %v392, 0.0
      %v450 = vmax.f32 %v395, 0.0
      %v451 = vmax.f32 %v397, 0.0
      %v452 = vmax.f32 %v400, 0.0
      %v453 = vmax.f32 %v402, 0.0
      %v454 = vmax.f32 %v405, 0.0
      %v455 = vmax.f32 %v407, 0.0
      %v456 = vmax.f32 %v410, 0.0
      %v457 = vmax.f32 %v412, 0.0
      %v458 = vmax.f32 %v415, 0.0
      %v459 = vmax.f32 %v417, 0.0
      %v460 = vmax.f32 %v420, 0.0
      %v461 = vmax.f32 %v422, 0.0
      %v462 = vmax.f32 %v425, 0.0
      %v463 = vmax.f32 %v427, 0.0
      %v464 = vmax.f32 %v430, 0.0
      %v465 = vmax.f32 %v432, 0.0
      %v466 = vpack.c.bf16 %v434, %v434
      %v467 = vpack.c.bf16 %v435, %v435
      %v468 = vpack.c.bf16 %v436, %v436
      %v469 = vpack.c.bf16 %v437, %v437
      %v470 = vpack.c.bf16 %v438, %v438
      %v471 = vpack.c.bf16 %v439, %v439
      %v472 = vpack.c.bf16 %v440, %v440
      %v473 = vpack.c.bf16 %v441, %v441
      %v474 = vpack.c.bf16 %v442, %v442
      %v475 = vpack.c.bf16 %v443, %v443
      %v476 = vpack.c.bf16 %v444, %v444
      %v477 = vpack.c.bf16 %v445, %v445
      %v478 = vpack.c.bf16 %v446, %v446
      %v479 = vpack.c.bf16 %v447, %v447
      %v480 = vpack.c.bf16 %v448, %v448
      %v481 = vpack.c.bf16 %v449, %v449
      %v482 = vpack.c.bf16 %v450, %v450
      %v483 = vpack.c.bf16 %v451, %v451
      %v484 = vpack.c.bf16 %v452, %v452
      %v485 = vpack.c.bf16 %v453, %v453
      %v486 = vpack.c.bf16 %v454, %v454
      %v487 = vpack.c.bf16 %v455, %v455
      %v488 = vpack.c.bf16 %v456, %v456
      %v489 = vpack.c.bf16 %v457, %v457
      %v490 = vpack.c.bf16 %v458, %v458
      %v491 = vpack.c.bf16 %v459, %v459
      %v492 = vpack.c.bf16 %v460, %v460
      %v493 = vpack.c.bf16 %v461, %v461
      %v494 = vpack.c.bf16 %v462, %v462
      %v495 = vpack.c.bf16 %v463, %v463
      %v496 = vpack.c.bf16 %v464, %v464
      %v497 = vpack.c.bf16 %v465, %v465
      %vm498 = vcmask 27648
      %499 = vst.msk [vmem:[%s172] sm:$0xf] %vm498, %v466
      %500 = vst.msk [vmem:[%s172 + $0x4] sm:$0xf] %vm498, %v467
      %501 = vst.msk [vmem:[%s172 + $0x8] sm:$0xf] %vm498, %v468
      %502 = vst.msk [vmem:[%s172 + $0xc] sm:$0xf] %vm498, %v469
      %503 = vst.msk [vmem:[%s172 + $0x10] sm:$0xf] %vm498, %v470
      %504 = vst.msk [vmem:[%s172 + $0x14] sm:$0xf] %vm498, %v471
      %505 = vst.msk [vmem:[%s172 + $0x18] sm:$0xf] %vm498, %v472
      %506 = vst.msk [vmem:[%s172 + $0x1c] sm:$0xf] %vm498, %v473
      %507 = vst.msk [vmem:[%s172 + $0x20] sm:$0xf] %vm498, %v474
      %508 = vst.msk [vmem:[%s172 + $0x24] sm:$0xf] %vm498, %v475
      %509 = vst.msk [vmem:[%s172 + $0x28] sm:$0xf] %vm498, %v476
      %510 = vst.msk [vmem:[%s172 + $0x2c] sm:$0xf] %vm498, %v477
      %511 = vst.msk [vmem:[%s172 + $0x30] sm:$0xf] %vm498, %v478
      %512 = vst.msk [vmem:[%s172 + $0x34] sm:$0xf] %vm498, %v479
      %513 = vst.msk [vmem:[%s172 + $0x38] sm:$0xf] %vm498, %v480
      %514 = vst.msk [vmem:[%s172 + $0x3c] sm:$0xf] %vm498, %v481
      %515 = vst.msk [vmem:[%s172 + $0x40] sm:$0xf] %vm498, %v482
      %516 = vst.msk [vmem:[%s172 + $0x44] sm:$0xf] %vm498, %v483
      %517 = vst.msk [vmem:[%s172 + $0x48] sm:$0xf] %vm498, %v484
      %518 = vst.msk [vmem:[%s172 + $0x4c] sm:$0xf] %vm498, %v485
      %519 = vst.msk [vmem:[%s172 + $0x50] sm:$0xf] %vm498, %v486
      %520 = vst.msk [vmem:[%s172 + $0x54] sm:$0xf] %vm498, %v487
      %521 = vst.msk [vmem:[%s172 + $0x58] sm:$0xf] %vm498, %v488
      %522 = vst.msk [vmem:[%s172 + $0x5c] sm:$0xf] %vm498, %v489
      %523 = vst.msk [vmem:[%s172 + $0x60] sm:$0xf] %vm498, %v490
      %524 = vst.msk [vmem:[%s172 + $0x64] sm:$0xf] %vm498, %v491
      %525 = vst.msk [vmem:[%s172 + $0x68] sm:$0xf] %vm498, %v492
      %526 = vst.msk [vmem:[%s172 + $0x6c] sm:$0xf] %vm498, %v493
      %527 = vst.msk [vmem:[%s172 + $0x70] sm:$0xf] %vm498, %v494
      %528 = vst.msk [vmem:[%s172 + $0x74] sm:$0xf] %vm498, %v495
      %529 = vst.msk [vmem:[%s172 + $0x78] sm:$0xf] %vm498, %v496
      %530 = vst.msk [vmem:[%s172 + $0x7c] sm:$0xf] %vm498, %v497
      %s531 = smul.u32 32, %s14
      %p532 = scmp.lt.s32.totalorder %s531, 63
      %s533 = scalar_select %p532, %s531, 63
      %s534 = smul.addr %s533, 4
      %s535 = scalar_lea.vmem %s3, %s534
      // Predicated region
      $region33: #{bottleneck_forward.4} parent=31 // pred_check
        %p536 = pneg %p100
      $region34: #{bottleneck_forward.4} parent=31 // pred_check_branch
        %538 = sbr.rel (%p536) target = $region36
      $region35: #{bottleneck_forward.4} parent=31 // pred_region
        %s539 = smul.u32 32, %s14
      $region36: #{bottleneck_forward.4} parent=31 // pred_fallthru
        _
    $region32: #{bottleneck_forward.4} parent=5 // pred_fallthru
      _
    %p540 = scmp.le.s32.totalorder 2, %s9
    // Predicated region
    $region37: #{bottleneck_forward.4} parent=5 // pred_check
      %p541 = pneg %p540
    $region38: #{bottleneck_forward.4} parent=5 // pred_check_branch
      %543 = sbr.rel (%p541) target = $region40
    $region39: #{bottleneck_forward.4} parent=5 // pred_region
      %s544 = ssub.s32 %s9, 2
      // Predicated region
      $region41: #{bottleneck_forward.4} parent=39 // pred_check
        %p545 = pneg %p106
      $region42: #{bottleneck_forward.4} parent=39 // pred_check_branch
        %547 = sbr.rel (%p545) target = $region44
      $region43: #{bottleneck_forward.4} parent=39 // pred_region
        %s548 = smul.u32 32, %s15
        %p549 = scmp.lt.s32.totalorder %s548, 63
        %s550 = scalar_select %p549, %s548, 63
        %s551 = smul.addr %s550, 4
        %s552 = scalar_lea.vmem %s3, %s551
      $region44: #{bottleneck_forward.4} parent=39 // pred_fallthru
        _
    $region40: #{bottleneck_forward.4} parent=5 // pred_fallthru
      _
  $region6: #{bottleneck_forward.4} parent=0 // loop_footer
    %s13 = sadd.s32 1, %s9
  $region7: #{bottleneck_forward.4} parent=0 // loop_footer_branch
    %8 = sbr.rel target = $region3
  $region8: #{bottleneck_forward.4} parent=0 // loop_exit
    _

// kernel: bottleneck_forward.7
$region0: #{bottleneck_forward.7}
  #allocation0 [shape = 'u32[]', space=smem, size = 0x4, offset = 0x4, fixed_abs, tag = 'smem constant byte address 0x4 - core index']
  #allocation1 [shape = 'u32[72,128]{1,0:T(1,128)}', space=vmem, size = 0x9000, scoped, tag = 'internal scratch']
  %s0 = inlined_call_operand.vmem [shape: bf16[128,4], index: 0, kind: input, shape index: {}]
  %s1 = inlined_call_operand.vmem [shape: bf16[4,16], index: 1, kind: input, shape index: {}]
  %s2 = inlined_call_operand.vmem [shape: f32[1,16], index: 2, kind: input, shape index: {}]
  %s3 = inlined_call_operand.vmem [shape: bf16[128,16], index: 3, kind: input, shape index: {}]
  %s4 = inlined_call_operand.vmem [shape: bf16[128,16], index: 4, kind: output, shape index: {}]
  %s5 = sld [smem:[#allocation0]]
  $region49: #{bottleneck_forward.7} parent=0
    _
  %s7 = ssub.s32 1, %s5
  %s8 = scalar_select 0, %s7, %s5
  loop: start=0, step=1, limit=4
  $region2: #{bottleneck_forward.7} parent=0 // loop_pre_header
    _
  $region3: #{bottleneck_forward.7} parent=0 // loop_header
    %s10 = sphi 0, %s14
    %p11 = scmp.ge.s32.totalorder %s10, 4
    %s20 = sphi 0, %s22
    %s23 = sphi 0, %s20
    %s24 = sphi 0, %s23
    %s40 = sphi 0, %s24
    %s44 = sphi 0, %s44
    %s46 = sphi 0, %s44
    %s47 = sphi 0, %s46
    %s61 = sphi 0, %s47
    %s65 = sphi 0, %s65
    %s67 = sphi 0, %s65
    %s68 = sphi 0, %s67
    %s82 = sphi 0, %s68
    %s88 = sphi 0, %s90
    %s91 = sphi 0, %s88
    %s92 = sphi 0, %s91
    %s108 = sphi 0, %s92
    %s114 = sphi 0, %s116
    %s117 = sphi 0, %s114
    %s118 = sphi 0, %s117
    %s134 = sphi 0, %s118
  $region4: #{bottleneck_forward.7} parent=0 // loop_header_branch
    %13 = sbr.rel (%p11) target = $region8
  $region5: #{bottleneck_forward.7} parent=0 // loop_body
    %s15 = ssub.s32 %s10, 1
    %s16 = ssub.s32 %s10, 2
    %s17 = sadd.s32 %s10, 1
    %s18 = ssub.s32 %s10, %s17
    %p19 = scmp.eq.s32.totalorder %s18, 0
    %s21 = sadd.s32 %s20, 1
    %s22 = scalar_select %p19, %s20, %s21
    %p25 = pneg %p19
    %p26 = scmp.eq.s32.totalorder %s10, 1
    %p27 = por %p25, %p26
    %p28 = scmp.ne.s32.totalorder %s20, %s23
    %p29 = scmp.eq.s32.totalorder %s10, 0
    %p30 = por %p28, %p29
    %p31 = scmp.ne.s32.totalorder %s20, %s23
    %p32 = scmp.eq.s32.totalorder %s15, 1
    %p33 = por %p31, %p32
    %p34 = scmp.ne.s32.totalorder %s23, %s24
    %p35 = scmp.eq.s32.totalorder %s15, 0
    %p36 = por %p34, %p35
    %p37 = scmp.ne.s32.totalorder %s23, %s24
    %p38 = scmp.eq.s32.totalorder %s16, 1
    %p39 = por %p37, %p38
    %p41 = scmp.ne.s32.totalorder %s24, %s40
    %p42 = scmp.eq.s32.totalorder %s16, 0
    %p43 = por %p41, %p42
    %s45 = sadd.s32 %s44, 1
    %p48 = scmp.eq.s32.totalorder %s10, 1
    %p49 = scmp.ne.s32.totalorder %s44, %s46
    %p50 = scmp.eq.s32.totalorder %s10, 0
    %p51 = por %p49, %p50
    %p52 = scmp.ne.s32.totalorder %s44, %s46
    %p53 = scmp.eq.s32.totalorder %s15, 1
    %p54 = por %p52, %p53
    %p55 = scmp.ne.s32.totalorder %s46, %s47
    %p56 = scmp.eq.s32.totalorder %s15, 0
    %p57 = por %p55, %p56
    %p58 = scmp.ne.s32.totalorder %s46, %s47
    %p59 = scmp.eq.s32.totalorder %s16, 1
    %p60 = por %p58, %p59
    %p62 = scmp.ne.s32.totalorder %s47, %s61
    %p63 = scmp.eq.s32.totalorder %s16, 0
    %p64 = por %p62, %p63
    %s66 = sadd.s32 %s65, 1
    %p69 = scmp.eq.s32.totalorder %s10, 1
    %p70 = scmp.ne.s32.totalorder %s65, %s67
    %p71 = scmp.eq.s32.totalorder %s10, 0
    %p72 = por %p70, %p71
    %p73 = scmp.ne.s32.totalorder %s65, %s67
    %p74 = scmp.eq.s32.totalorder %s15, 1
    %p75 = por %p73, %p74
    %p76 = scmp.ne.s32.totalorder %s67, %s68
    %p77 = scmp.eq.s32.totalorder %s15, 0
    %p78 = por %p76, %p77
    %p79 = scmp.ne.s32.totalorder %s67, %s68
    %p80 = scmp.eq.s32.totalorder %s16, 1
    %p81 = por %p79, %p80
    %p83 = scmp.ne.s32.totalorder %s68, %s82
    %p84 = scmp.eq.s32.totalorder %s16, 0
    %p85 = por %p83, %p84
    %s86 = ssub.s32 %s10, %s17
    %p87 = scmp.eq.s32.totalorder %s86, 0
    %s89 = sadd.s32 %s88, 1
    %s90 = scalar_select %p87, %s88, %s89
    %p93 = pneg %p87
    %p94 = scmp.eq.s32.totalorder %s10, 1
    %p95 = por %p93, %p94
    %p96 = scmp.ne.s32.totalorder %s88, %s91
    %p97 = scmp.eq.s32.totalorder %s10, 0
    %p98 = por %p96, %p97
    %p99 = scmp.ne.s32.totalorder %s88, %s91
    %p100 = scmp.eq.s32.totalorder %s15, 1
    %p101 = por %p99, %p100
    %p102 = scmp.ne.s32.totalorder %s91, %s92
    %p103 = scmp.eq.s32.totalorder %s15, 0
    %p104 = por %p102, %p103
    %p105 = scmp.ne.s32.totalorder %s91, %s92
    %p106 = scmp.eq.s32.totalorder %s16, 1
    %p107 = por %p105, %p106
    %p109 = scmp.ne.s32.totalorder %s92, %s108
    %p110 = scmp.eq.s32.totalorder %s16, 0
    %p111 = por %p109, %p110
    %s112 = ssub.s32 %s10, %s17
    %p113 = scmp.eq.s32.totalorder %s112, 0
    %s115 = sadd.s32 %s114, 1
    %s116 = scalar_select %p113, %s114, %s115
    %p119 = pneg %p113
    %p120 = scmp.eq.s32.totalorder %s10, 1
    %p121 = por %p119, %p120
    %p122 = scmp.ne.s32.totalorder %s114, %s117
    %p123 = scmp.eq.s32.totalorder %s10, 0
    %p124 = por %p122, %p123
    %p125 = scmp.ne.s32.totalorder %s114, %s117
    %p126 = scmp.eq.s32.totalorder %s15, 1
    %p127 = por %p125, %p126
    %p128 = scmp.ne.s32.totalorder %s117, %s118
    %p129 = scmp.eq.s32.totalorder %s15, 0
    %p130 = por %p128, %p129
    %p131 = scmp.ne.s32.totalorder %s117, %s118
    %p132 = scmp.eq.s32.totalorder %s16, 1
    %p133 = por %p131, %p132
    %p135 = scmp.ne.s32.totalorder %s118, %s134
    %p136 = scmp.eq.s32.totalorder %s16, 0
    %p137 = por %p135, %p136
    %p138 = scmp.le.s32.totalorder 1, %s10
    %p139 = scmp.lt.s32.totalorder %s10, 3
    %p140 = pnand %p138, %p139
    %p141 = pneg %p140
    // Predicated region
    $region9: #{bottleneck_forward.7} parent=5 // pred_check
      _
    $region10: #{bottleneck_forward.7} parent=5 // pred_check_branch
      %143 = sbr.rel (%p140) target = $region12
    $region11: #{bottleneck_forward.7} parent=5 // pred_region
      %s144 = ssub.s32 %s10, 1
      // Predicated region
      $region13: #{bottleneck_forward.7} parent=11 // pred_check
        %p145 = pneg %p57
      $region14: #{bottleneck_forward.7} parent=11 // pred_check_branch
        %147 = sbr.rel (%p145) target = $region16
      $region15: #{bottleneck_forward.7} parent=11 // pred_region
        _
      $region16: #{bottleneck_forward.7} parent=11 // pred_fallthru
        _
      // Predicated region
      $region17: #{bottleneck_forward.7} parent=11 // pred_check
        %p148 = pneg %p78
      $region18: #{bottleneck_forward.7} parent=11 // pred_check_branch
        %150 = sbr.rel (%p148) target = $region20
      $region19: #{bottleneck_forward.7} parent=11 // pred_region
        _
      $region20: #{bottleneck_forward.7} parent=11 // pred_fallthru
        _
    $region12: #{bottleneck_forward.7} parent=5 // pred_fallthru
      _
    %p151 = scmp.lt.s32.totalorder %s10, 2
    // Predicated region
    $region21: #{bottleneck_forward.7} parent=5 // pred_check
      %p152 = pneg %p151
    $region22: #{bottleneck_forward.7} parent=5 // pred_check_branch
      %154 = sbr.rel (%p152) target = $region24
    $region23: #{bottleneck_forward.7} parent=5 // pred_region
      // Predicated region
      $region25: #{bottleneck_forward.7} parent=23 // pred_check
        %p155 = pneg %p30
      $region26: #{bottleneck_forward.7} parent=23 // pred_check_branch
        %157 = sbr.rel (%p155) target = $region28
      $region27: #{bottleneck_forward.7} parent=23 // pred_region
        %s158 = smul.u32 8, %s10
        %p159 = scmp.lt.s32.totalorder %s158, 15
        %s160 = scalar_select %p159, %s158, 15
        %s161 = smul.addr %s160, 4
        %s162 = scalar_lea.vmem %s0, %s161
        %s163 = smul.u32 8, %s10
      $region28: #{bottleneck_forward.7} parent=23 // pred_fallthru
        _
      // Predicated region
      $region29: #{bottleneck_forward.7} parent=23 // pred_check
        %p164 = pneg %p98
      $region30: #{bottleneck_forward.7} parent=23 // pred_check_branch
        %166 = sbr.rel (%p164) target = $region32
      $region31: #{bottleneck_forward.7} parent=23 // pred_region
        %s167 = smul.u32 8, %s10
        %p168 = scmp.lt.s32.totalorder %s167, 15
        %s169 = scalar_select %p168, %s167, 15
        %s170 = smul.addr %s169, 4
        %s171 = scalar_lea.vmem %s3, %s170
        %s172 = smul.u32 8, %s10
      $region32: #{bottleneck_forward.7} parent=23 // pred_fallthru
        _
    $region24: #{bottleneck_forward.7} parent=5 // pred_fallthru
      _
    %p173 = scmp.le.s32.totalorder 1, %s10
    %p174 = scmp.lt.s32.totalorder %s10, 3
    %p175 = pnand %p173, %p174
    %p176 = pneg %p175
    // Predicated region
    $region33: #{bottleneck_forward.7} parent=5 // pred_check
      _
    $region34: #{bottleneck_forward.7} parent=5 // pred_check_branch
      %178 = sbr.rel (%p175) target = $region36
    $region35: #{bottleneck_forward.7} parent=5 // pred_region
      %s179 = ssub.s32 %s10, 1
      %s180 = smul.u32 8, %s15
      %p181 = scmp.lt.s32.totalorder %s180, 15
      %s182 = scalar_select %p181, %s180, 15
      %s183 = smul.addr %s182, 4
      %s184 = scalar_lea.vmem %s0, %s183
      %p185 = pneg %p36
      %p186 = pneg %p33
      %p187 = pneg %p57
      %p188 = pneg %p54
      %p189 = pneg %p78
      %p190 = pneg %p75
      %s191 = smul.u32 8, %s15
      %p192 = scmp.lt.s32.totalorder %s191, 15
      %s193 = scalar_select %p192, %s191, 15
      %s194 = smul.addr %s193, 4
      %s195 = scalar_lea.vmem %s3, %s194
      %p196 = pneg %p104
      %p197 = pneg %p101
      %p198 = pneg %p130
      %p199 = pneg %p127
      %s200 = smul.u32 8, %s15
      %p201 = scmp.lt.s32.totalorder %s200, 15
      %s202 = scalar_select %p201, %s200, 15
      %s203 = smul.addr %s202, 4
      %s204 = scalar_lea.vmem %s4, %s203
      %s205 = smul.u32 8, %s15
      %p206 = scmp.lt.s32.totalorder %s205, 15
      %s207 = scalar_select %p206, %s205, 15
      %s208 = smul.addr %s207, 4
      %s209 = scalar_lea.vmem %s0, %s208
      %s210 = smul.u32 8, %s15
      %s211 = smul.u32 8, %s15
      %p212 = scmp.lt.s32.totalorder %s211, 15
      %s213 = scalar_select %p212, %s211, 15
      %s214 = smul.addr %s213, 4
      %s215 = scalar_lea.vmem %s3, %s214
      %s216 = smul.u32 8, %s15
      %s217 = smul.u32 8, %s15
      %p218 = scmp.lt.s32.totalorder %s217, 15
      %s219 = scalar_select %p218, %s217, 15
      %s220 = smul.addr %s219, 4
      %s221 = scalar_lea.vmem %s4, %s220
      %s222 = smul.u32 8, %s15
      %v224 = vld [vmem:[%s209] sm:$0xf]
      %v225 = vld [vmem:[%s209 + $0x4] sm:$0xf]
      %v226 = vld [vmem:[%s209 + $0x8] sm:$0xf]
      %v227 = vld [vmem:[%s209 + $0xc] sm:$0xf]
      %v228 = vld [vmem:[%s209 + $0x10] sm:$0xf]
      %v229 = vld [vmem:[%s209 + $0x14] sm:$0xf]
      %v230 = vld [vmem:[%s209 + $0x18] sm:$0xf]
      %v231 = vld [vmem:[%s209 + $0x1c] sm:$0xf]
      %v232 = vld [vmem:[%s1] sm:$0x3]
      %v233 = vld [vmem:[%s2] sm:$0x1]
      %v235 = vperm.slane %v233, 0
      %v245 = vunpack.c.l.b16 %v224
      %v246 = vunpack.c.l.b16 %v225
      %v247 = vunpack.c.l.b16 %v226
      %v248 = vunpack.c.l.b16 %v227
      %v249 = vunpack.c.l.b16 %v228
      %v250 = vunpack.c.l.b16 %v229
      %v251 = vunpack.c.l.b16 %v230
      %v252 = vunpack.c.l.b16 %v231
      %v253 = vpack.c.b16 %v246, %v245
      %v254 = vpack.c.b16 %v248, %v247
      %v255 = vpack.c.b16 %v250, %v249
      %v256 = vpack.c.b16 %v252, %v251
      %vm257 = vcmask 31744
      %v259 = vsel %vm257, %v253, 0
      %v262 = vsel %vm257, %v254, 0
      %v265 = vsel %vm257, %v255, 0
      %v268 = vsel %vm257, %v256, 0
      %vm270 = vcmask 1041408
      %v272 = vsel %vm270, %v232, 0
      %274 = vmatpush.bf16.msra.mxu0 0
      %275 = vmatpush.bf16.msra.mxu0 0
      %276 = vmatpush.bf16.msra.mxu0 0
      %277 = vmatpush.bf16.msra.mxu0 0
      %278 = vmatpush.bf16.msra.mxu0 0
      %279 = vmatpush.bf16.msra.mxu0 0
      %280 = vmatpush.bf16.msra.mxu0 0
      %281 = vmatpush.bf16.msra.mxu0 %v272
      %282 = vmatmul.bf16.gmra.mxu0 %v259
      %v283 = vpop.f32.mrf.mxu0
      %v284 = vadd.f32 %v235, %v283
      %v285 = vpop.f32.mrf.mxu0
      %v286 = vadd.f32 %v235, %v285
      %287 = vmatmul.bf16.gmra.mxu0 %v262
      %v288 = vpop.f32.mrf.mxu0
      %v289 = vadd.f32 %v235, %v288
      %v290 = vpop.f32.mrf.mxu0
      %v291 = vadd.f32 %v235, %v290
      %292 = vmatmul.bf16.gmra.mxu0 %v265
      %v293 = vpop.f32.mrf.mxu0
      %v294 = vadd.f32 %v235, %v293
      %v295 = vpop.f32.mrf.mxu0
      %v296 = vadd.f32 %v235, %v295
      %297 = vmatmul.bf16.gmra.mxu0 %v268
      %v298 = vpop.f32.mrf.mxu0
      %v299 = vadd.f32 %v235, %v298
      %v300 = vpop.f32.mrf.mxu0
      %v301 = vadd.f32 %v235, %v300
      %302 = vdwg.mxu0
      %v303 = vld [vmem:[%s215] sm:$0xf]
      %v304 = vld [vmem:[%s215 + $0x4] sm:$0xf]
      %v305 = vld [vmem:[%s215 + $0x8] sm:$0xf]
      %v306 = vld [vmem:[%s215 + $0xc] sm:$0xf]
      %v307 = vld [vmem:[%s215 + $0x10] sm:$0xf]
      %v308 = vld [vmem:[%s215 + $0x14] sm:$0xf]
      %v309 = vld [vmem:[%s215 + $0x18] sm:$0xf]
      %v310 = vld [vmem:[%s215 + $0x1c] sm:$0xf]
      %v311 = vunpack.c.l.bf16 %v303
      %v312 = vunpack.c.l.bf16 %v304
      %v313 = vunpack.c.l.bf16 %v305
      %v314 = vunpack.c.l.bf16 %v306
      %v315 = vunpack.c.l.bf16 %v307
      %v316 = vunpack.c.l.bf16 %v308
      %v317 = vunpack.c.l.bf16 %v309
      %v318 = vunpack.c.l.bf16 %v310
      %v319 = vadd.f32 %v284, %v311
      %v320 = vadd.f32 %v286, %v312
      %v321 = vadd.f32 %v289, %v313
      %v322 = vadd.f32 %v291, %v314
      %v323 = vadd.f32 %v294, %v315
      %v324 = vadd.f32 %v296, %v316
      %v325 = vadd.f32 %v299, %v317
      %v326 = vadd.f32 %v301, %v318
      %v327 = vmax.f32 %v319, 0.0
      %v328 = vmax.f32 %v320, 0.0
      %v329 = vmax.f32 %v321, 0.0
      %v330 = vmax.f32 %v322, 0.0
      %v331 = vmax.f32 %v323, 0.0
      %v332 = vmax.f32 %v324, 0.0
      %v333 = vmax.f32 %v325, 0.0
      %v334 = vmax.f32 %v326, 0.0
      %v335 = vpack.c.bf16 %v327, %v327
      %v336 = vpack.c.bf16 %v328, %v328
      %v337 = vpack.c.bf16 %v329, %v329
      %v338 = vpack.c.bf16 %v330, %v330
      %v339 = vpack.c.bf16 %v331, %v331
      %v340 = vpack.c.bf16 %v332, %v332
      %v341 = vpack.c.bf16 %v333, %v333
      %v342 = vpack.c.bf16 %v334, %v334
      %vm343 = vcmask 125952
      %344 = vst.msk [vmem:[%s221] sm:$0xf] %vm343, %v335
      %345 = vst.msk [vmem:[%s221 + $0x4] sm:$0xf] %vm343, %v336
      %346 = vst.msk [vmem:[%s221 + $0x8] sm:$0xf] %vm343, %v337
      %347 = vst.msk [vmem:[%s221 + $0xc] sm:$0xf] %vm343, %v338
      %348 = vst.msk [vmem:[%s221 + $0x10] sm:$0xf] %vm343, %v339
      %349 = vst.msk [vmem:[%s221 + $0x14] sm:$0xf] %vm343, %v340
      %350 = vst.msk [vmem:[%s221 + $0x18] sm:$0xf] %vm343, %v341
      %351 = vst.msk [vmem:[%s221 + $0x1c] sm:$0xf] %vm343, %v342
      %s352 = smul.u32 8, %s15
      %p353 = scmp.lt.s32.totalorder %s352, 15
      %s354 = scalar_select %p353, %s352, 15
      %s355 = smul.addr %s354, 4
      %s356 = scalar_lea.vmem %s4, %s355
      // Predicated region
      $region37: #{bottleneck_forward.7} parent=35 // pred_check
        %p357 = pneg %p127
      $region38: #{bottleneck_forward.7} parent=35 // pred_check_branch
        %359 = sbr.rel (%p357) target = $region40
      $region39: #{bottleneck_forward.7} parent=35 // pred_region
        %s360 = smul.u32 8, %s15
      $region40: #{bottleneck_forward.7} parent=35 // pred_fallthru
        _
    $region36: #{bottleneck_forward.7} parent=5 // pred_fallthru
      _
    %p361 = scmp.le.s32.totalorder 2, %s10
    // Predicated region
    $region41: #{bottleneck_forward.7} parent=5 // pred_check
      %p362 = pneg %p361
    $region42: #{bottleneck_forward.7} parent=5 // pred_check_branch
      %364 = sbr.rel (%p362) target = $region44
    $region43: #{bottleneck_forward.7} parent=5 // pred_region
      %s365 = ssub.s32 %s10, 2
      // Predicated region
      $region45: #{bottleneck_forward.7} parent=43 // pred_check
        %p366 = pneg %p133
      $region46: #{bottleneck_forward.7} parent=43 // pred_check_branch
        %368 = sbr.rel (%p366) target = $region48
      $region47: #{bottleneck_forward.7} parent=43 // pred_region
        %s369 = smul.u32 8, %s16
        %p370 = scmp.lt.s32.totalorder %s369, 15
        %s371 = scalar_select %p370, %s369, 15
        %s372 = smul.addr %s371, 4
        %s373 = scalar_lea.vmem %s4, %s372
      $region48: #{bottleneck_forward.7} parent=43 // pred_fallthru
        _
    $region44: #{bottleneck_forward.7} parent=5 // pred_fallthru
      _
  $region6: #{bottleneck_forward.7} parent=0 // loop_footer
    %s14 = sadd.s32 1, %s10
  $region7: #{bottleneck_forward.7} parent=0 // loop_footer_branch
    %9 = sbr.rel target = $region3
  $region8: #{bottleneck_forward.7} parent=0 // loop_exit
    _

// kernel: bottleneck_forward.5
$region0: #{bottleneck_forward.5}
  #allocation0 [shape = 'u32[]', space=smem, size = 0x4, offset = 0x4, fixed_abs, tag = 'smem constant byte address 0x4 - core index']
  #allocation1 [shape = 'u32[72,128]{1,0:T(1,128)}', space=vmem, size = 0x9000, scoped, tag = 'internal scratch']
  %s0 = inlined_call_operand.vmem [shape: bf16[2,18,18,4], index: 0, kind: input, shape index: {}]
  %s1 = inlined_call_operand.vmem [shape: bf16[9,4,4], index: 1, kind: input, shape index: {}]
  %s2 = inlined_call_operand.vmem [shape: f32[1,4], index: 2, kind: input, shape index: {}]
  %s3 = inlined_call_operand.vmem [shape: bf16[2,8,16,4], index: 3, kind: output, shape index: {}]
  %s4 = sld [smem:[#allocation0]]
  $region45: #{bottleneck_forward.5} parent=0
    _
  %s6 = ssub.s32 1, %s4
  %s7 = scalar_select 0, %s6, %s4
  loop: start=0, step=1, limit=4
  $region2: #{bottleneck_forward.5} parent=0 // loop_pre_header
    _
  $region3: #{bottleneck_forward.5} parent=0 // loop_header
    %s9 = sphi 0, %s13
    %p10 = scmp.ge.s32.totalorder %s9, 4
    %s19 = sphi 0, %s21
    %s22 = sphi 0, %s19
    %s23 = sphi 0, %s22
    %s39 = sphi 0, %s23
    %s43 = sphi 0, %s43
    %s45 = sphi 0, %s43
    %s46 = sphi 0, %s45
    %s60 = sphi 0, %s46
    %s64 = sphi 0, %s64
    %s66 = sphi 0, %s64
    %s67 = sphi 0, %s66
    %s81 = sphi 0, %s67
    %s87 = sphi 0, %s89
    %s90 = sphi 0, %s87
    %s91 = sphi 0, %s90
    %s107 = sphi 0, %s91
  $region4: #{bottleneck_forward.5} parent=0 // loop_header_branch
    %12 = sbr.rel (%p10) target = $region8
  $region5: #{bottleneck_forward.5} parent=0 // loop_body
    %s14 = ssub.s32 %s9, 1
    %s15 = ssub.s32 %s9, 2
    %s16 = sadd.s32 %s9, 1
    %s17 = ssub.s32 %s9, %s16
    %p18 = scmp.eq.s32.totalorder %s17, 0
    %s20 = sadd.s32 %s19, 1
    %s21 = scalar_select %p18, %s19, %s20
    %p24 = pneg %p18
    %p25 = scmp.eq.s32.totalorder %s9, 1
    %p26 = por %p24, %p25
    %p27 = scmp.ne.s32.totalorder %s19, %s22
    %p28 = scmp.eq.s32.totalorder %s9, 0
    %p29 = por %p27, %p28
    %p30 = scmp.ne.s32.totalorder %s19, %s22
    %p31 = scmp.eq.s32.totalorder %s14, 1
    %p32 = por %p30, %p31
    %p33 = scmp.ne.s32.totalorder %s22, %s23
    %p34 = scmp.eq.s32.totalorder %s14, 0
    %p35 = por %p33, %p34
    %p36 = scmp.ne.s32.totalorder %s22, %s23
    %p37 = scmp.eq.s32.totalorder %s15, 1
    %p38 = por %p36, %p37
    %p40 = scmp.ne.s32.totalorder %s23, %s39
    %p41 = scmp.eq.s32.totalorder %s15, 0
    %p42 = por %p40, %p41
    %s44 = sadd.s32 %s43, 1
    %p47 = scmp.eq.s32.totalorder %s9, 1
    %p48 = scmp.ne.s32.totalorder %s43, %s45
    %p49 = scmp.eq.s32.totalorder %s9, 0
    %p50 = por %p48, %p49
    %p51 = scmp.ne.s32.totalorder %s43, %s45
    %p52 = scmp.eq.s32.totalorder %s14, 1
    %p53 = por %p51, %p52
    %p54 = scmp.ne.s32.totalorder %s45, %s46
    %p55 = scmp.eq.s32.totalorder %s14, 0
    %p56 = por %p54, %p55
    %p57 = scmp.ne.s32.totalorder %s45, %s46
    %p58 = scmp.eq.s32.totalorder %s15, 1
    %p59 = por %p57, %p58
    %p61 = scmp.ne.s32.totalorder %s46, %s60
    %p62 = scmp.eq.s32.totalorder %s15, 0
    %p63 = por %p61, %p62
    %s65 = sadd.s32 %s64, 1
    %p68 = scmp.eq.s32.totalorder %s9, 1
    %p69 = scmp.ne.s32.totalorder %s64, %s66
    %p70 = scmp.eq.s32.totalorder %s9, 0
    %p71 = por %p69, %p70
    %p72 = scmp.ne.s32.totalorder %s64, %s66
    %p73 = scmp.eq.s32.totalorder %s14, 1
    %p74 = por %p72, %p73
    %p75 = scmp.ne.s32.totalorder %s66, %s67
    %p76 = scmp.eq.s32.totalorder %s14, 0
    %p77 = por %p75, %p76
    %p78 = scmp.ne.s32.totalorder %s66, %s67
    %p79 = scmp.eq.s32.totalorder %s15, 1
    %p80 = por %p78, %p79
    %p82 = scmp.ne.s32.totalorder %s67, %s81
    %p83 = scmp.eq.s32.totalorder %s15, 0
    %p84 = por %p82, %p83
    %s85 = ssub.s32 %s9, %s16
    %p86 = scmp.eq.s32.totalorder %s85, 0
    %s88 = sadd.s32 %s87, 1
    %s89 = scalar_select %p86, %s87, %s88
    %p92 = pneg %p86
    %p93 = scmp.eq.s32.totalorder %s9, 1
    %p94 = por %p92, %p93
    %p95 = scmp.ne.s32.totalorder %s87, %s90
    %p96 = scmp.eq.s32.totalorder %s9, 0
    %p97 = por %p95, %p96
    %p98 = scmp.ne.s32.totalorder %s87, %s90
    %p99 = scmp.eq.s32.totalorder %s14, 1
    %p100 = por %p98, %p99
    %p101 = scmp.ne.s32.totalorder %s90, %s91
    %p102 = scmp.eq.s32.totalorder %s14, 0
    %p103 = por %p101, %p102
    %p104 = scmp.ne.s32.totalorder %s90, %s91
    %p105 = scmp.eq.s32.totalorder %s15, 1
    %p106 = por %p104, %p105
    %p108 = scmp.ne.s32.totalorder %s91, %s107
    %p109 = scmp.eq.s32.totalorder %s15, 0
    %p110 = por %p108, %p109
    %p111 = scmp.le.s32.totalorder 1, %s9
    %p112 = scmp.lt.s32.totalorder %s9, 3
    %p113 = pnand %p111, %p112
    %p114 = pneg %p113
    // Predicated region
    $region9: #{bottleneck_forward.5} parent=5 // pred_check
      _
    $region10: #{bottleneck_forward.5} parent=5 // pred_check_branch
      %116 = sbr.rel (%p113) target = $region12
    $region11: #{bottleneck_forward.5} parent=5 // pred_region
      %s117 = ssub.s32 %s9, 1
      // Predicated region
      $region13: #{bottleneck_forward.5} parent=11 // pred_check
        %p118 = pneg %p56
      $region14: #{bottleneck_forward.5} parent=11 // pred_check_branch
        %120 = sbr.rel (%p118) target = $region16
      $region15: #{bottleneck_forward.5} parent=11 // pred_region
        _
      $region16: #{bottleneck_forward.5} parent=11 // pred_fallthru
        _
      // Predicated region
      $region17: #{bottleneck_forward.5} parent=11 // pred_check
        %p121 = pneg %p77
      $region18: #{bottleneck_forward.5} parent=11 // pred_check_branch
        %123 = sbr.rel (%p121) target = $region20
      $region19: #{bottleneck_forward.5} parent=11 // pred_region
        _
      $region20: #{bottleneck_forward.5} parent=11 // pred_fallthru
        _
    $region12: #{bottleneck_forward.5} parent=5 // pred_fallthru
      _
    %p124 = scmp.lt.s32.totalorder %s9, 2
    // Predicated region
    $region21: #{bottleneck_forward.5} parent=5 // pred_check
      %p125 = pneg %p124
    $region22: #{bottleneck_forward.5} parent=5 // pred_check_branch
      %127 = sbr.rel (%p125) target = $region24
    $region23: #{bottleneck_forward.5} parent=5 // pred_region
      // Predicated region
      $region25: #{bottleneck_forward.5} parent=23 // pred_check
        %p128 = pneg %p29
      $region26: #{bottleneck_forward.5} parent=23 // pred_check_branch
        %130 = sbr.rel (%p128) target = $region28
      $region27: #{bottleneck_forward.5} parent=23 // pred_region
        %p131 = scmp.lt.s32.totalorder %s9, 1
        %s132 = scalar_select %p131, %s9, 1
        %s133 = smul.addr %s132, 54
        %s134 = smul.addr %s133, 4
        %s135 = scalar_lea.vmem %s0, %s134
      $region28: #{bottleneck_forward.5} parent=23 // pred_fallthru
        _
    $region24: #{bottleneck_forward.5} parent=5 // pred_fallthru
      _
    %p136 = scmp.le.s32.totalorder 1, %s9
    %p137 = scmp.lt.s32.totalorder %s9, 3
    %p138 = pnand %p136, %p137
    %p139 = pneg %p138
    // Predicated region
    $region29: #{bottleneck_forward.5} parent=5 // pred_check
      _
    $region30: #{bottleneck_forward.5} parent=5 // pred_check_branch
      %141 = sbr.rel (%p138) target = $region32
    $region31: #{bottleneck_forward.5} parent=5 // pred_region
      %s142 = ssub.s32 %s9, 1
      %p143 = scmp.lt.s32.totalorder %s14, 1
      %s144 = scalar_select %p143, %s14, 1
      %s145 = smul.addr %s144, 54
      %s146 = smul.addr %s145, 4
      %s147 = scalar_lea.vmem %s0, %s146
      %p148 = pneg %p35
      %p149 = pneg %p32
      %p150 = pneg %p56
      %p151 = pneg %p53
      %p152 = pneg %p77
      %p153 = pneg %p74
      %p154 = pneg %p103
      %p155 = pneg %p100
      %p156 = scmp.lt.s32.totalorder %s14, 1
      %s157 = scalar_select %p156, %s14, 1
      %s158 = smul.addr %s157, 16
      %s159 = smul.addr %s158, 4
      %s160 = scalar_lea.vmem %s3, %s159
      %p161 = scmp.lt.s32.totalorder %s14, 1
      %s162 = scalar_select %p161, %s14, 1
      %s163 = smul.addr %s162, 54
      %s164 = smul.addr %s163, 4
      %s165 = scalar_lea.vmem %s0, %s164
      %p166 = scmp.lt.s32.totalorder %s14, 1
      %s167 = scalar_select %p166, %s14, 1
      %s168 = smul.addr %s167, 16
      %s169 = smul.addr %s168, 4
      %s170 = scalar_lea.vmem %s3, %s169
      %v172 = vld [vmem:[%s165] sm:$0xf]
      %v173 = vld [vmem:[%s165 + $0x4] sm:$0xf]
      %v174 = vld [vmem:[%s165 + $0x8] sm:$0x1]
      %v175 = vld [vmem:[%s165 + $0xc] sm:$0xf]
      %v176 = vld [vmem:[%s165 + $0x10] sm:$0xf]
      %v177 = vld [vmem:[%s165 + $0x14] sm:$0x1]
      %v178 = vld [vmem:[%s165 + $0x18] sm:$0xf]
      %v179 = vld [vmem:[%s165 + $0x1c] sm:$0xf]
      %v180 = vld [vmem:[%s165 + $0x20] sm:$0x1]
      %v181 = vld [vmem:[%s165 + $0x24] sm:$0xf]
      %v182 = vld [vmem:[%s165 + $0x28] sm:$0xf]
      %v183 = vld [vmem:[%s165 + $0x2c] sm:$0x1]
      %v184 = vld [vmem:[%s165 + $0x30] sm:$0xf]
      %v185 = vld [vmem:[%s165 + $0x34] sm:$0xf]
      %v186 = vld [vmem:[%s165 + $0x38] sm:$0x1]
      %v187 = vld [vmem:[%s165 + $0x3c] sm:$0xf]
      %v188 = vld [vmem:[%s165 + $0x40] sm:$0xf]
      %v189 = vld [vmem:[%s165 + $0x44] sm:$0x1]
      %v190 = vld [vmem:[%s165 + $0x48] sm:$0xf]
      %v191 = vld [vmem:[%s165 + $0x4c] sm:$0xf]
      %v192 = vld [vmem:[%s165 + $0x50] sm:$0x1]
      %v193 = vld [vmem:[%s165 + $0x54] sm:$0xf]
      %v194 = vld [vmem:[%s165 + $0x58] sm:$0xf]
      %v195 = vld [vmem:[%s165 + $0x5c] sm:$0x1]
      %v196 = vld [vmem:[%s165 + $0x60] sm:$0xf]
      %v197 = vld [vmem:[%s165 + $0x64] sm:$0xf]
      %v198 = vld [vmem:[%s165 + $0x68] sm:$0x1]
      %v199 = vld [vmem:[%s165 + $0x6c] sm:$0xf]
      %v200 = vld [vmem:[%s165 + $0x70] sm:$0xf]
      %v201 = vld [vmem:[%s165 + $0x74] sm:$0x1]
      %v202 = vld [vmem:[%s165 + $0x78] sm:$0xf]
      %v203 = vld [vmem:[%s165 + $0x7c] sm:$0xf]
      %v204 = vld [vmem:[%s165 + $0x80] sm:$0x1]
      %v205 = vld [vmem:[%s165 + $0x84] sm:$0xf]
      %v206 = vld [vmem:[%s165 + $0x88] sm:$0xf]
      %v207 = vld [vmem:[%s165 + $0x8c] sm:$0x1]
      %v208 = vld [vmem:[%s165 + $0x90] sm:$0xf]
      %v209 = vld [vmem:[%s165 + $0x94] sm:$0xf]
      %v210 = vld [vmem:[%s165 + $0x98] sm:$0x1]
      %v211 = vld [vmem:[%s165 + $0x9c] sm:$0xf]
      %v212 = vld [vmem:[%s165 + $0xa0] sm:$0xf]
      %v213 = vld [vmem:[%s165 + $0xa4] sm:$0x1]
      %v214 = vld [vmem:[%s165 + $0xa8] sm:$0xf]
      %v215 = vld [vmem:[%s165 + $0xac] sm:$0xf]
      %v216 = vld [vmem:[%s165 + $0xb0] sm:$0x1]
      %v217 = vld [vmem:[%s165 + $0xb4] sm:$0xf]
      %v218 = vld [vmem:[%s165 + $0xb8] sm:$0xf]
      %v219 = vld [vmem:[%s165 + $0xbc] sm:$0x1]
      %v220 = vld [vmem:[%s165 + $0xc0] sm:$0xf]
      %v221 = vld [vmem:[%s165 + $0xc4] sm:$0xf]
      %v222 = vld [vmem:[%s165 + $0xc8] sm:$0x1]
      %v223 = vld [vmem:[%s1] sm:$0x3]
      %vm224 = vsmask.f32 3328
      %vm225 = vsmask.f32 7440
      %vm226 = vmor %vm224, %vm225
      %v228 = vshrl.u32 %v172, 16
      %v230 = vrot.slane %v228, 4
      %v231 = vshll.u32 %v172, 16
      %v233 = vrot.slane %v231, 5
      %v234 = vor.u32 %v230, %v233
      %v235 = vrot.slane %v234, 4
      %v237 = vshll.u32 %v173, 16
      %v239 = vrot.slane %v237, 5
      %v240 = vsel %vm226, %v235, %v239
      %v241 = vshrl.u32 %v173, 16
      %v243 = vrot.slane %v241, 4
      %v244 = vor.u32 %v243, %v239
      %v245 = vrot.slane %v244, 4
      %v247 = vshll.u32 %v174, 16
      %v249 = vrot.slane %v247, 5
      %v250 = vsel %vm226, %v245, %v249
      %v252 = vshrl.u32 %v178, 16
      %v254 = vrot.slane %v252, 4
      %v255 = vshll.u32 %v178, 16
      %v257 = vrot.slane %v255, 5
      %v258 = vor.u32 %v254, %v257
      %v259 = vrot.slane %v258, 4
      %v261 = vshll.u32 %v179, 16
      %v263 = vrot.slane %v261, 5
      %v264 = vsel %vm226, %v259, %v263
      %v265 = vshrl.u32 %v179, 16
      %v267 = vrot.slane %v265, 4
      %v268 = vor.u32 %v267, %v263
      %v269 = vrot.slane %v268, 4
      %v271 = vshll.u32 %v180, 16
      %v273 = vrot.slane %v271, 5
      %v274 = vsel %vm226, %v269, %v273
      %v276 = vshrl.u32 %v184, 16
      %v278 = vrot.slane %v276, 4
      %v279 = vshll.u32 %v184, 16
      %v281 = vrot.slane %v279, 5
      %v282 = vor.u32 %v278, %v281
      %v283 = vrot.slane %v282, 4
      %v285 = vshll.u32 %v185, 16
      %v287 = vrot.slane %v285, 5
      %v288 = vsel %vm226, %v283, %v287
      %v289 = vshrl.u32 %v185, 16
      %v291 = vrot.slane %v289, 4
      %v292 = vor.u32 %v291, %v287
      %v293 = vrot.slane %v292, 4
      %v295 = vshll.u32 %v186, 16
      %v297 = vrot.slane %v295, 5
      %v298 = vsel %vm226, %v293, %v297
      %v300 = vshrl.u32 %v190, 16
      %v302 = vrot.slane %v300, 4
      %v303 = vshll.u32 %v190, 16
      %v305 = vrot.slane %v303, 5
      %v306 = vor.u32 %v302, %v305
      %v307 = vrot.slane %v306, 4
      %v309 = vshll.u32 %v191, 16
      %v311 = vrot.slane %v309, 5
      %v312 = vsel %vm226, %v307, %v311
      %v313 = vshrl.u32 %v191, 16
      %v315 = vrot.slane %v313, 4
      %v316 = vor.u32 %v315, %v311
      %v317 = vrot.slane %v316, 4
      %v319 = vshll.u32 %v192, 16
      %v321 = vrot.slane %v319, 5
      %v322 = vsel %vm226, %v317, %v321
      %v324 = vshrl.u32 %v196, 16
      %v326 = vrot.slane %v324, 4
      %v327 = vshll.u32 %v196, 16
      %v329 = vrot.slane %v327, 5
      %v330 = vor.u32 %v326, %v329
      %v331 = vrot.slane %v330, 4
      %v333 = vshll.u32 %v197, 16
      %v335 = vrot.slane %v333, 5
      %v336 = vsel %vm226, %v331, %v335
      %v337 = vshrl.u32 %v197, 16
      %v339 = vrot.slane %v337, 4
      %v340 = vor.u32 %v339, %v335
      %v341 = vrot.slane %v340, 4
      %v343 = vshll.u32 %v198, 16
      %v345 = vrot.slane %v343, 5
      %v346 = vsel %vm226, %v341, %v345
      %v348 = vshrl.u32 %v202, 16
      %v350 = vrot.slane %v348, 4
      %v351 = vshll.u32 %v202, 16
      %v353 = vrot.slane %v351, 5
      %v354 = vor.u32 %v350, %v353
      %v355 = vrot.slane %v354, 4
      %v357 = vshll.u32 %v203, 16
      %v359 = vrot.slane %v357, 5
      %v360 = vsel %vm226, %v355, %v359
      %v361 = vshrl.u32 %v203, 16
      %v363 = vrot.slane %v361, 4
      %v364 = vor.u32 %v363, %v359
      %v365 = vrot.slane %v364, 4
      %v367 = vshll.u32 %v204, 16
      %v369 = vrot.slane %v367, 5
      %v370 = vsel %vm226, %v365, %v369
      %v372 = vshrl.u32 %v208, 16
      %v374 = vrot.slane %v372, 4
      %v375 = vshll.u32 %v208, 16
      %v377 = vrot.slane %v375, 5
      %v378 = vor.u32 %v374, %v377
      %v379 = vrot.slane %v378, 4
      %v381 = vshll.u32 %v209, 16
      %v383 = vrot.slane %v381, 5
      %v384 = vsel %vm226, %v379, %v383
      %v385 = vshrl.u32 %v209, 16
      %v387 = vrot.slane %v385, 4
      %v388 = vor.u32 %v387, %v383
      %v389 = vrot.slane %v388, 4
      %v391 = vshll.u32 %v210, 16
      %v393 = vrot.slane %v391, 5
      %v394 = vsel %vm226, %v389, %v393
      %v396 = vshrl.u32 %v214, 16
      %v398 = vrot.slane %v396, 4
      %v399 = vshll.u32 %v214, 16
      %v401 = vrot.slane %v399, 5
      %v402 = vor.u32 %v398, %v401
      %v403 = vrot.slane %v402, 4
      %v405 = vshll.u32 %v215, 16
      %v407 = vrot.slane %v405, 5
      %v408 = vsel %vm226, %v403, %v407
      %v409 = vshrl.u32 %v215, 16
      %v411 = vrot.slane %v409, 4
      %v412 = vor.u32 %v411, %v407
      %v413 = vrot.slane %v412, 4
      %v415 = vshll.u32 %v216, 16
      %v417 = vrot.slane %v415, 5
      %v418 = vsel %vm226, %v413, %v417
      %s419 = scalar_lea.vmem %s1, 2
      %v420 = vld [vmem:[%s419] sm:$0x3]
      %v421 = vunpack.c.l.b16 %v240
      %v422 = vunpack.c.l.b16 %v250
      %v423 = vunpack.c.l.b16 %v264
      %v424 = vunpack.c.l.b16 %v274
      %v425 = vunpack.c.l.b16 %v288
      %v426 = vunpack.c.l.b16 %v298
      %v427 = vunpack.c.l.b16 %v312
      %v428 = vunpack.c.l.b16 %v322
      %v429 = vunpack.c.l.b16 %v336
      %v430 = vunpack.c.l.b16 %v346
      %v431 = vunpack.c.l.b16 %v360
      %v432 = vunpack.c.l.b16 %v370
      %v433 = vunpack.c.l.b16 %v384
      %v434 = vunpack.c.l.b16 %v394
      %v435 = vunpack.c.l.b16 %v408
      %v436 = vunpack.c.l.b16 %v418
      %v437 = vpack.c.b16 %v422, %v421
      %v438 = vpack.c.b16 %v424, %v423
      %v439 = vpack.c.b16 %v426, %v425
      %v440 = vpack.c.b16 %v428, %v427
      %v441 = vpack.c.b16 %v430, %v429
      %v442 = vpack.c.b16 %v432, %v431
      %v443 = vpack.c.b16 %v434, %v433
      %v444 = vpack.c.b16 %v436, %v435
      %vm445 = vcmask 31744
      %v447 = vsel %vm445, %v437, 0
      %v450 = vsel %vm445, %v438, 0
      %v453 = vsel %vm445, %v439, 0
      %v456 = vsel %vm445, %v440, 0
      %v459 = vsel %vm445, %v441, 0
      %v462 = vsel %vm445, %v442, 0
      %v465 = vsel %vm445, %v443, 0
      %v468 = vsel %vm445, %v444, 0
      %vm470 = vcmask 1041408
      %v472 = vsel %vm470, %v420, 0
      %474 = vmatpush.bf16.msra.mxu0 0
      %475 = vmatpush.bf16.msra.mxu0 0
      %476 = vmatpush.bf16.msra.mxu0 0
      %477 = vmatpush.bf16.msra.mxu0 0
      %478 = vmatpush.bf16.msra.mxu0 0
      %479 = vmatpush.bf16.msra.mxu0 0
      %480 = vmatpush.bf16.msra.mxu0 0
      %481 = vmatpush.bf16.msra.mxu0 %v472
      %482 = vmatmul.bf16.gmra.mxu0 %v447
      %v483 = vpop.f32.mrf.mxu0
      %v484 = vadd.f32 0.0, %v483
      %v485 = vpop.f32.mrf.mxu0
      %v486 = vadd.f32 0.0, %v485
      %487 = vmatmul.bf16.gmra.mxu0 %v450
      %v488 = vpop.f32.mrf.mxu0
      %v489 = vadd.f32 0.0, %v488
      %v490 = vpop.f32.mrf.mxu0
      %v491 = vadd.f32 0.0, %v490
      %492 = vmatmul.bf16.gmra.mxu0 %v453
      %v493 = vpop.f32.mrf.mxu0
      %v494 = vadd.f32 0.0, %v493
      %v495 = vpop.f32.mrf.mxu0
      %v496 = vadd.f32 0.0, %v495
      %497 = vmatmul.bf16.gmra.mxu0 %v456
      %v498 = vpop.f32.mrf.mxu0
      %v499 = vadd.f32 0.0, %v498
      %v500 = vpop.f32.mrf.mxu0
      %v501 = vadd.f32 0.0, %v500
      %502 = vmatmul.bf16.gmra.mxu0 %v459
      %v503 = vpop.f32.mrf.mxu0
      %v504 = vadd.f32 0.0, %v503
      %v505 = vpop.f32.mrf.mxu0
      %v506 = vadd.f32 0.0, %v505
      %507 = vmatmul.bf16.gmra.mxu0 %v462
      %v508 = vpop.f32.mrf.mxu0
      %v509 = vadd.f32 0.0, %v508
      %v510 = vpop.f32.mrf.mxu0
      %v511 = vadd.f32 0.0, %v510
      %512 = vmatmul.bf16.gmra.mxu0 %v465
      %v513 = vpop.f32.mrf.mxu0
      %v514 = vadd.f32 0.0, %v513
      %v515 = vpop.f32.mrf.mxu0
      %v516 = vadd.f32 0.0, %v515
      %517 = vmatmul.bf16.gmra.mxu0 %v468
      %v518 = vpop.f32.mrf.mxu0
      %v519 = vadd.f32 0.0, %v518
      %v520 = vpop.f32.mrf.mxu0
      %v521 = vadd.f32 0.0, %v520
      %522 = vdwg.mxu0
      %v539 = vunpack.c.l.b16 %v172
      %v540 = vunpack.c.l.b16 %v173
      %v541 = vunpack.c.l.b16 %v178
      %v542 = vunpack.c.l.b16 %v179
      %v543 = vunpack.c.l.b16 %v184
      %v544 = vunpack.c.l.b16 %v185
      %v545 = vunpack.c.l.b16 %v190
      %v546 = vunpack.c.l.b16 %v191
      %v547 = vunpack.c.l.b16 %v196
      %v548 = vunpack.c.l.b16 %v197
      %v549 = vunpack.c.l.b16 %v202
      %v550 = vunpack.c.l.b16 %v203
      %v551 = vunpack.c.l.b16 %v208
      %v552 = vunpack.c.l.b16 %v209
      %v553 = vunpack.c.l.b16 %v214
      %v554 = vunpack.c.l.b16 %v215
      %v555 = vpack.c.b16 %v540, %v539
      %v556 = vpack.c.b16 %v542, %v541
      %v557 = vpack.c.b16 %v544, %v543
      %v558 = vpack.c.b16 %v546, %v545
      %v559 = vpack.c.b16 %v548, %v547
      %v560 = vpack.c.b16 %v550, %v549
      %v561 = vpack.c.b16 %v552, %v551
      %v562 = vpack.c.b16 %v554, %v553
      %v564 = vsel %vm445, %v555, 0
      %v567 = vsel %vm445, %v556, 0
      %v570 = vsel %vm445, %v557, 0
      %v573 = vsel %vm445, %v558, 0
      %v576 = vsel %vm445, %v559, 0
      %v579 = vsel %vm445, %v560, 0
      %v582 = vsel %vm445, %v561, 0
      %v585 = vsel %vm445, %v562, 0
      %v588 = vsel %vm470, %v223, 0
      %590 = vmatpush.bf16.msra.mxu0 0
      %591 = vmatpush.bf16.msra.mxu0 0
      %592 = vmatpush.bf16.msra.mxu0 0
      %593 = vmatpush.bf16.msra.mxu0 0
      %594 = vmatpush.bf16.msra.mxu0 0
      %595 = vmatpush.bf16.msra.mxu0 0
      %596 = vmatpush.bf16.msra.mxu0 0
      %597 = vmatpush.bf16.msra.mxu0 %v588
      %598 = vmatmul.bf16.gmra.mxu0 %v564
      %v599 = vpop.f32.mrf.mxu0
      %v600 = vadd.f32 %v484, %v599
      %v601 = vpop.f32.mrf.mxu0
      %v602 = vadd.f32 %v486, %v601
      %603 = vmatmul.bf16.gmra.mxu0 %v567
      %v604 = vpop.f32.mrf.mxu0
      %v605 = vadd.f32 %v489, %v604
      %v606 = vpop.f32.mrf.mxu0
      %v607 = vadd.f32 %v491, %v606
      %608 = vmatmul.bf16.gmra.mxu0 %v570
      %v609 = vpop.f32.mrf.mxu0
      %v610 = vadd.f32 %v494, %v609
      %v611 = vpop.f32.mrf.mxu0
      %v612 = vadd.f32 %v496, %v611
      %613 = vmatmul.bf16.gmra.mxu0 %v573
      %v614 = vpop.f32.mrf.mxu0
      %v615 = vadd.f32 %v499, %v614
      %v616 = vpop.f32.mrf.mxu0
      %v617 = vadd.f32 %v501, %v616
      %618 = vmatmul.bf16.gmra.mxu0 %v576
      %v619 = vpop.f32.mrf.mxu0
      %v620 = vadd.f32 %v504, %v619
      %v621 = vpop.f32.mrf.mxu0
      %v622 = vadd.f32 %v506, %v621
      %623 = vmatmul.bf16.gmra.mxu0 %v579
      %v624 = vpop.f32.mrf.mxu0
      %v625 = vadd.f32 %v509, %v624
      %v626 = vpop.f32.mrf.mxu0
      %v627 = vadd.f32 %v511, %v626
      %628 = vmatmul.bf16.gmra.mxu0 %v582
      %v629 = vpop.f32.mrf.mxu0
      %v630 = vadd.f32 %v514, %v629
      %v631 = vpop.f32.mrf.mxu0
      %v632 = vadd.f32 %v516, %v631
      %633 = vmatmul.bf16.gmra.mxu0 %v585
      %v634 = vpop.f32.mrf.mxu0
      %v635 = vadd.f32 %v519, %v634
      %v636 = vpop.f32.mrf.mxu0
      %v637 = vadd.f32 %v521, %v636
      %638 = vdwg.mxu0
      %vm647 = vcmask 1042432
      %vm648 = vcmask 1046532
      %vm649 = vmor %vm647, %vm648
      %v650 = vrot.slane %v172, 5
      %v651 = vrot.slane %v650, 4
      %v652 = vrot.slane %v173, 5
      %v653 = vsel %vm649, %v651, %v652
      %v654 = vrot.slane %v652, 4
      %v655 = vrot.slane %v174, 5
      %v656 = vsel %vm649, %v654, %v655
      %v657 = vrot.slane %v178, 5
      %v658 = vrot.slane %v657, 4
      %v659 = vrot.slane %v179, 5
      %v660 = vsel %vm649, %v658, %v659
      %v661 = vrot.slane %v659, 4
      %v662 = vrot.slane %v180, 5
      %v663 = vsel %vm649, %v661, %v662
      %v664 = vrot.slane %v184, 5
      %v665 = vrot.slane %v664, 4
      %v666 = vrot.slane %v185, 5
      %v667 = vsel %vm649, %v665, %v666
      %v668 = vrot.slane %v666, 4
      %v669 = vrot.slane %v186, 5
      %v670 = vsel %vm649, %v668, %v669
      %v671 = vrot.slane %v190, 5
      %v672 = vrot.slane %v671, 4
      %v673 = vrot.slane %v191, 5
      %v674 = vsel %vm649, %v672, %v673
      %v675 = vrot.slane %v673, 4
      %v676 = vrot.slane %v192, 5
      %v677 = vsel %vm649, %v675, %v676
      %v678 = vrot.slane %v196, 5
      %v679 = vrot.slane %v678, 4
      %v680 = vrot.slane %v197, 5
      %v681 = vsel %vm649, %v679, %v680
      %v682 = vrot.slane %v680, 4
      %v683 = vrot.slane %v198, 5
      %v684 = vsel %vm649, %v682, %v683
      %v685 = vrot.slane %v202, 5
      %v686 = vrot.slane %v685, 4
      %v687 = vrot.slane %v203, 5
      %v688 = vsel %vm649, %v686, %v687
      %v689 = vrot.slane %v687, 4
      %v690 = vrot.slane %v204, 5
      %v691 = vsel %vm649, %v689, %v690
      %v692 = vrot.slane %v208, 5
      %v693 = vrot.slane %v692, 4
      %v694 = vrot.slane %v209, 5
      %v695 = vsel %vm649, %v693, %v694
      %v696 = vrot.slane %v694, 4
      %v697 = vrot.slane %v210, 5
      %v698 = vsel %vm649, %v696, %v697
      %v699 = vrot.slane %v214, 5
      %v700 = vrot.slane %v699, 4
      %v701 = vrot.slane %v215, 5
      %v702 = vsel %vm649, %v700, %v701
      %v703 = vrot.slane %v701, 4
      %v704 = vrot.slane %v216, 5
      %v705 = vsel %vm649, %v703, %v704
      %s706 = scalar_lea.vmem %s1, 4
      %v707 = vld [vmem:[%s706] sm:$0x3]
      %v708 = vunpack.c.l.b16 %v653
      %v709 = vunpack.c.l.b16 %v656
      %v710 = vunpack.c.l.b16 %v660
      %v711 = vunpack.c.l.b16 %v663
      %v712 = vunpack.c.l.b16 %v667
      %v713 = vunpack.c.l.b16 %v670
      %v714 = vunpack.c.l.b16 %v674
      %v715 = vunpack.c.l.b16 %v677
      %v716 = vunpack.c.l.b16 %v681
      %v717 = vunpack.c.l.b16 %v684
      %v718 = vunpack.c.l.b16 %v688
      %v719 = vunpack.c.l.b16 %v691
      %v720 = vunpack.c.l.b16 %v695
      %v721 = vunpack.c.l.b16 %v698
      %v722 = vunpack.c.l.b16 %v702
      %v723 = vunpack.c.l.b16 %v705
      %v724 = vpack.c.b16 %v709, %v708
      %v725 = vpack.c.b16 %v711, %v710
      %v726 = vpack.c.b16 %v713, %v712
      %v727 = vpack.c.b16 %v715, %v714
      %v728 = vpack.c.b16 %v717, %v716
      %v729 = vpack.c.b16 %v719, %v718
      %v730 = vpack.c.b16 %v721, %v720
      %v731 = vpack.c.b16 %v723, %v722
      %v733 = vsel %vm445, %v724, 0
      %v736 = vsel %vm445, %v725, 0
      %v739 = vsel %vm445, %v726, 0
      %v742 = vsel %vm445, %v727, 0
      %v745 = vsel %vm445, %v728, 0
      %v748 = vsel %vm445, %v729, 0
      %v751 = vsel %vm445, %v730, 0
      %v754 = vsel %vm445, %v731, 0
      %v757 = vsel %vm470, %v707, 0
      %759 = vmatpush.bf16.msra.mxu0 0
      %760 = vmatpush.bf16.msra.mxu0 0
      %761 = vmatpush.bf16.msra.mxu0 0
      %762 = vmatpush.bf16.msra.mxu0 0
      %763 = vmatpush.bf16.msra.mxu0 0
      %764 = vmatpush.bf16.msra.mxu0 0
      %765 = vmatpush.bf16.msra.mxu0 0
      %766 = vmatpush.bf16.msra.mxu0 %v757
      %767 = vmatmul.bf16.gmra.mxu0 %v733
      %v768 = vpop.f32.mrf.mxu0
      %v769 = vadd.f32 0.0, %v768
      %v770 = vpop.f32.mrf.mxu0
      %v771 = vadd.f32 0.0, %v770
      %772 = vmatmul.bf16.gmra.mxu0 %v736
      %v773 = vpop.f32.mrf.mxu0
      %v774 = vadd.f32 0.0, %v773
      %v775 = vpop.f32.mrf.mxu0
      %v776 = vadd.f32 0.0, %v775
      %777 = vmatmul.bf16.gmra.mxu0 %v739
      %v778 = vpop.f32.mrf.mxu0
      %v779 = vadd.f32 0.0, %v778
      %v780 = vpop.f32.mrf.mxu0
      %v781 = vadd.f32 0.0, %v780
      %782 = vmatmul.bf16.gmra.mxu0 %v742
      %v783 = vpop.f32.mrf.mxu0
      %v784 = vadd.f32 0.0, %v783
      %v785 = vpop.f32.mrf.mxu0
      %v786 = vadd.f32 0.0, %v785
      %787 = vmatmul.bf16.gmra.mxu0 %v745
      %v788 = vpop.f32.mrf.mxu0
      %v789 = vadd.f32 0.0, %v788
      %v790 = vpop.f32.mrf.mxu0
      %v791 = vadd.f32 0.0, %v790
      %792 = vmatmul.bf16.gmra.mxu0 %v748
      %v793 = vpop.f32.mrf.mxu0
      %v794 = vadd.f32 0.0, %v793
      %v795 = vpop.f32.mrf.mxu0
      %v796 = vadd.f32 0.0, %v795
      %797 = vmatmul.bf16.gmra.mxu0 %v751
      %v798 = vpop.f32.mrf.mxu0
      %v799 = vadd.f32 0.0, %v798
      %v800 = vpop.f32.mrf.mxu0
      %v801 = vadd.f32 0.0, %v800
      %802 = vmatmul.bf16.gmra.mxu0 %v754
      %v803 = vpop.f32.mrf.mxu0
      %v804 = vadd.f32 0.0, %v803
      %v805 = vpop.f32.mrf.mxu0
      %v806 = vadd.f32 0.0, %v805
      %807 = vdwg.mxu0
      %v808 = vadd.f32 %v600, %v769
      %v809 = vadd.f32 %v602, %v771
      %v810 = vadd.f32 %v605, %v774
      %v811 = vadd.f32 %v607, %v776
      %v812 = vadd.f32 %v610, %v779
      %v813 = vadd.f32 %v612, %v781
      %v814 = vadd.f32 %v615, %v784
      %v815 = vadd.f32 %v617, %v786
      %v816 = vadd.f32 %v620, %v789
      %v817 = vadd.f32 %v622, %v791
      %v818 = vadd.f32 %v625, %v794
      %v819 = vadd.f32 %v627, %v796
      %v820 = vadd.f32 %v630, %v799
      %v821 = vadd.f32 %v632, %v801
      %v822 = vadd.f32 %v635, %v804
      %v823 = vadd.f32 %v637, %v806
      %s824 = scalar_lea.vmem %s1, 6
      %v825 = vld [vmem:[%s824] sm:$0x3]
      %v842 = vunpack.c.l.b16 %v175
      %v843 = vunpack.c.l.b16 %v176
      %v844 = vunpack.c.l.b16 %v181
      %v845 = vunpack.c.l.b16 %v182
      %v846 = vunpack.c.l.b16 %v187
      %v847 = vunpack.c.l.b16 %v188
      %v848 = vunpack.c.l.b16 %v193
      %v849 = vunpack.c.l.b16 %v194
      %v850 = vunpack.c.l.b16 %v199
      %v851 = vunpack.c.l.b16 %v200
      %v852 = vunpack.c.l.b16 %v205
      %v853 = vunpack.c.l.b16 %v206
      %v854 = vunpack.c.l.b16 %v211
      %v855 = vunpack.c.l.b16 %v212
      %v856 = vunpack.c.l.b16 %v217
      %v857 = vunpack.c.l.b16 %v218
      %v858 = vpack.c.b16 %v843, %v842
      %v859 = vpack.c.b16 %v845, %v844
      %v860 = vpack.c.b16 %v847, %v846
      %v861 = vpack.c.b16 %v849, %v848
      %v862 = vpack.c.b16 %v851, %v850
      %v863 = vpack.c.b16 %v853, %v852
      %v864 = vpack.c.b16 %v855, %v854
      %v865 = vpack.c.b16 %v857, %v856
      %v867 = vsel %vm445, %v858, 0
      %v870 = vsel %vm445, %v859, 0
      %v873 = vsel %vm445, %v860, 0
      %v876 = vsel %vm445, %v861, 0
      %v879 = vsel %vm445, %v862, 0
      %v882 = vsel %vm445, %v863, 0
      %v885 = vsel %vm445, %v864, 0
      %v888 = vsel %vm445, %v865, 0
      %v891 = vsel %vm470, %v825, 0
      %893 = vmatpush.bf16.msra.mxu0 0
      %894 = vmatpush.bf16.msra.mxu0 0
      %895 = vmatpush.bf16.msra.mxu0 0
      %896 = vmatpush.bf16.msra.mxu0 0
      %897 = vmatpush.bf16.msra.mxu0 0
      %898 = vmatpush.bf16.msra.mxu0 0
      %899 = vmatpush.bf16.msra.mxu0 0
      %900 = vmatpush.bf16.msra.mxu0 %v891
      %901 = vmatmul.bf16.gmra.mxu0 %v867
      %v902 = vpop.f32.mrf.mxu0
      %v903 = vadd.f32 0.0, %v902
      %v904 = vpop.f32.mrf.mxu0
      %v905 = vadd.f32 0.0, %v904
      %906 = vmatmul.bf16.gmra.mxu0 %v870
      %v907 = vpop.f32.mrf.mxu0
      %v908 = vadd.f32 0.0, %v907
      %v909 = vpop.f32.mrf.mxu0
      %v910 = vadd.f32 0.0, %v909
      %911 = vmatmul.bf16.gmra.mxu0 %v873
      %v912 = vpop.f32.mrf.mxu0
      %v913 = vadd.f32 0.0, %v912
      %v914 = vpop.f32.mrf.mxu0
      %v915 = vadd.f32 0.0, %v914
      %916 = vmatmul.bf16.gmra.mxu0 %v876
      %v917 = vpop.f32.mrf.mxu0
      %v918 = vadd.f32 0.0, %v917
      %v919 = vpop.f32.mrf.mxu0
      %v920 = vadd.f32 0.0, %v919
      %921 = vmatmul.bf16.gmra.mxu0 %v879
      %v922 = vpop.f32.mrf.mxu0
      %v923 = vadd.f32 0.0, %v922
      %v924 = vpop.f32.mrf.mxu0
      %v925 = vadd.f32 0.0, %v924
      %926 = vmatmul.bf16.gmra.mxu0 %v882
      %v927 = vpop.f32.mrf.mxu0
      %v928 = vadd.f32 0.0, %v927
      %v929 = vpop.f32.mrf.mxu0
      %v930 = vadd.f32 0.0, %v929
      %931 = vmatmul.bf16.gmra.mxu0 %v885
      %v932 = vpop.f32.mrf.mxu0
      %v933 = vadd.f32 0.0, %v932
      %v934 = vpop.f32.mrf.mxu0
      %v935 = vadd.f32 0.0, %v934
      %936 = vmatmul.bf16.gmra.mxu0 %v888
      %v937 = vpop.f32.mrf.mxu0
      %v938 = vadd.f32 0.0, %v937
      %v939 = vpop.f32.mrf.mxu0
      %v940 = vadd.f32 0.0, %v939
      %941 = vdwg.mxu0
      %v942 = vadd.f32 %v808, %v903
      %v943 = vadd.f32 %v809, %v905
      %v944 = vadd.f32 %v810, %v908
      %v945 = vadd.f32 %v811, %v910
      %v946 = vadd.f32 %v812, %v913
      %v947 = vadd.f32 %v813, %v915
      %v948 = vadd.f32 %v814, %v918
      %v949 = vadd.f32 %v815, %v920
      %v950 = vadd.f32 %v816, %v923
      %v951 = vadd.f32 %v817, %v925
      %v952 = vadd.f32 %v818, %v928
      %v953 = vadd.f32 %v819, %v930
      %v954 = vadd.f32 %v820, %v933
      %v955 = vadd.f32 %v821, %v935
      %v956 = vadd.f32 %v822, %v938
      %v957 = vadd.f32 %v823, %v940
      %v959 = vshrl.u32 %v175, 16
      %v961 = vrot.slane %v959, 4
      %v962 = vshll.u32 %v175, 16
      %v964 = vrot.slane %v962, 5
      %v965 = vor.u32 %v961, %v964
      %v966 = vrot.slane %v965, 4
      %v968 = vshll.u32 %v176, 16
      %v970 = vrot.slane %v968, 5
      %v971 = vsel %vm226, %v966, %v970
      %v972 = vshrl.u32 %v176, 16
      %v974 = vrot.slane %v972, 4
      %v975 = vor.u32 %v974, %v970
      %v976 = vrot.slane %v975, 4
      %v978 = vshll.u32 %v177, 16
      %v980 = vrot.slane %v978, 5
      %v981 = vsel %vm226, %v976, %v980
      %v983 = vshrl.u32 %v181, 16
      %v985 = vrot.slane %v983, 4
      %v986 = vshll.u32 %v181, 16
      %v988 = vrot.slane %v986, 5
      %v989 = vor.u32 %v985, %v988
      %v990 = vrot.slane %v989, 4
      %v992 = vshll.u32 %v182, 16
      %v994 = vrot.slane %v992, 5
      %v995 = vsel %vm226, %v990, %v994
      %v996 = vshrl.u32 %v182, 16
      %v998 = vrot.slane %v996, 4
      %v999 = vor.u32 %v998, %v994
      %v1000 = vrot.slane %v999, 4
      %v1002 = vshll.u32 %v183, 16
      %v1004 = vrot.slane %v1002, 5
      %v1005 = vsel %vm226, %v1000, %v1004
      %v1007 = vshrl.u32 %v187, 16
      %v1009 = vrot.slane %v1007, 4
      %v1010 = vshll.u32 %v187, 16
      %v1012 = vrot.slane %v1010, 5
      %v1013 = vor.u32 %v1009, %v1012
      %v1014 = vrot.slane %v1013, 4
      %v1016 = vshll.u32 %v188, 16
      %v1018 = vrot.slane %v1016, 5
      %v1019 = vsel %vm226, %v1014, %v1018
      %v1020 = vshrl.u32 %v188, 16
      %v1022 = vrot.slane %v1020, 4
      %v1023 = vor.u32 %v1022, %v1018
      %v1024 = vrot.slane %v1023, 4
      %v1026 = vshll.u32 %v189, 16
      %v1028 = vrot.slane %v1026, 5
      %v1029 = vsel %vm226, %v1024, %v1028
      %v1031 = vshrl.u32 %v193, 16
      %v1033 = vrot.slane %v1031, 4
      %v1034 = vshll.u32 %v193, 16
      %v1036 = vrot.slane %v1034, 5
      %v1037 = vor.u32 %v1033, %v1036
      %v1038 = vrot.slane %v1037, 4
      %v1040 = vshll.u32 %v194, 16
      %v1042 = vrot.slane %v1040, 5
      %v1043 = vsel %vm226, %v1038, %v1042
      %v1044 = vshrl.u32 %v194, 16
      %v1046 = vrot.slane %v1044, 4
      %v1047 = vor.u32 %v1046, %v1042
      %v1048 = vrot.slane %v1047, 4
      %v1050 = vshll.u32 %v195, 16
      %v1052 = vrot.slane %v1050, 5
      %v1053 = vsel %vm226, %v1048, %v1052
      %v1055 = vshrl.u32 %v199, 16
      %v1057 = vrot.slane %v1055, 4
      %v1058 = vshll.u32 %v199, 16
      %v1060 = vrot.slane %v1058, 5
      %v1061 = vor.u32 %v1057, %v1060
      %v1062 = vrot.slane %v1061, 4
      %v1064 = vshll.u32 %v200, 16
      %v1066 = vrot.slane %v1064, 5
      %v1067 = vsel %vm226, %v1062, %v1066
      %v1068 = vshrl.u32 %v200, 16
      %v1070 = vrot.slane %v1068, 4
      %v1071 = vor.u32 %v1070, %v1066
      %v1072 = vrot.slane %v1071, 4
      %v1074 = vshll.u32 %v201, 16
      %v1076 = vrot.slane %v1074, 5
      %v1077 = vsel %vm226, %v1072, %v1076
      %v1079 = vshrl.u32 %v205, 16
      %v1081 = vrot.slane %v1079, 4
      %v1082 = vshll.u32 %v205, 16
      %v1084 = vrot.slane %v1082, 5
      %v1085 = vor.u32 %v1081, %v1084
      %v1086 = vrot.slane %v1085, 4
      %v1088 = vshll.u32 %v206, 16
      %v1090 = vrot.slane %v1088, 5
      %v1091 = vsel %vm226, %v1086, %v1090
      %v1092 = vshrl.u32 %v206, 16
      %v1094 = vrot.slane %v1092, 4
      %v1095 = vor.u32 %v1094, %v1090
      %v1096 = vrot.slane %v1095, 4
      %v1098 = vshll.u32 %v207, 16
      %v1100 = vrot.slane %v1098, 5
      %v1101 = vsel %vm226, %v1096, %v1100
      %v1103 = vshrl.u32 %v211, 16
      %v1105 = vrot.slane %v1103, 4
      %v1106 = vshll.u32 %v211, 16
      %v1108 = vrot.slane %v1106, 5
      %v1109 = vor.u32 %v1105, %v1108
      %v1110 = vrot.slane %v1109, 4
      %v1112 = vshll.u32 %v212, 16
      %v1114 = vrot.slane %v1112, 5
      %v1115 = vsel %vm226, %v1110, %v1114
      %v1116 = vshrl.u32 %v212, 16
      %v1118 = vrot.slane %v1116, 4
      %v1119 = vor.u32 %v1118, %v1114
      %v1120 = vrot.slane %v1119, 4
      %v1122 = vshll.u32 %v213, 16
      %v1124 = vrot.slane %v1122, 5
      %v1125 = vsel %vm226, %v1120, %v1124
      %v1127 = vshrl.u32 %v217, 16
      %v1129 = vrot.slane %v1127, 4
      %v1130 = vshll.u32 %v217, 16
      %v1132 = vrot.slane %v1130, 5
      %v1133 = vor.u32 %v1129, %v1132
      %v1134 = vrot.slane %v1133, 4
      %v1136 = vshll.u32 %v218, 16
      %v1138 = vrot.slane %v1136, 5
      %v1139 = vsel %vm226, %v1134, %v1138
      %v1140 = vshrl.u32 %v218, 16
      %v1142 = vrot.slane %v1140, 4
      %v1143 = vor.u32 %v1142, %v1138
      %v1144 = vrot.slane %v1143, 4
      %v1146 = vshll.u32 %v219, 16
      %v1148 = vrot.slane %v1146, 5
      %v1149 = vsel %vm226, %v1144, %v1148
      %s1150 = scalar_lea.vmem %s1, 8
      %v1151 = vld [vmem:[%s1150] sm:$0x3]
      %v1152 = vunpack.c.l.b16 %v971
      %v1153 = vunpack.c.l.b16 %v981
      %v1154 = vunpack.c.l.b16 %v995
      %v1155 = vunpack.c.l.b16 %v1005
      %v1156 = vunpack.c.l.b16 %v1019
      %v1157 = vunpack.c.l.b16 %v1029
      %v1158 = vunpack.c.l.b16 %v1043
      %v1159 = vunpack.c.l.b16 %v1053
      %v1160 = vunpack.c.l.b16 %v1067
      %v1161 = vunpack.c.l.b16 %v1077
      %v1162 = vunpack.c.l.b16 %v1091
      %v1163 = vunpack.c.l.b16 %v1101
      %v1164 = vunpack.c.l.b16 %v1115
      %v1165 = vunpack.c.l.b16 %v1125
      %v1166 = vunpack.c.l.b16 %v1139
      %v1167 = vunpack.c.l.b16 %v1149
      %v1168 = vpack.c.b16 %v1153, %v1152
      %v1169 = vpack.c.b16 %v1155, %v1154
      %v1170 = vpack.c.b16 %v1157, %v1156
      %v1171 = vpack.c.b16 %v1159, %v1158
      %v1172 = vpack.c.b16 %v1161, %v1160
      %v1173 = vpack.c.b16 %v1163, %v1162
      %v1174 = vpack.c.b16 %v1165, %v1164
      %v1175 = vpack.c.b16 %v1167, %v1166
      %v1177 = vsel %vm445, %v1168, 0
      %v1180 = vsel %vm445, %v1169, 0
      %v1183 = vsel %vm445, %v1170, 0
      %v1186 = vsel %vm445, %v1171, 0
      %v1189 = vsel %vm445, %v1172, 0
      %v1192 = vsel %vm445, %v1173, 0
      %v1195 = vsel %vm445, %v1174, 0
      %v1198 = vsel %vm445, %v1175, 0
      %v1201 = vsel %vm470, %v1151, 0
      %1203 = vmatpush.bf16.msra.mxu0 0
      %1204 = vmatpush.bf16.msra.mxu0 0
      %1205 = vmatpush.bf16.msra.mxu0 0
      %1206 = vmatpush.bf16.msra.mxu0 0
      %1207 = vmatpush.bf16.msra.mxu0 0
      %1208 = vmatpush.bf16.msra.mxu0 0
      %1209 = vmatpush.bf16.msra.mxu0 0
      %1210 = vmatpush.bf16.msra.mxu0 %v1201
      %1211 = vmatmul.bf16.gmra.mxu0 %v1177
      %v1212 = vpop.f32.mrf.mxu0
      %v1213 = vadd.f32 0.0, %v1212
      %v1214 = vpop.f32.mrf.mxu0
      %v1215 = vadd.f32 0.0, %v1214
      %1216 = vmatmul.bf16.gmra.mxu0 %v1180
      %v1217 = vpop.f32.mrf.mxu0
      %v1218 = vadd.f32 0.0, %v1217
      %v1219 = vpop.f32.mrf.mxu0
      %v1220 = vadd.f32 0.0, %v1219
      %1221 = vmatmul.bf16.gmra.mxu0 %v1183
      %v1222 = vpop.f32.mrf.mxu0
      %v1223 = vadd.f32 0.0, %v1222
      %v1224 = vpop.f32.mrf.mxu0
      %v1225 = vadd.f32 0.0, %v1224
      %1226 = vmatmul.bf16.gmra.mxu0 %v1186
      %v1227 = vpop.f32.mrf.mxu0
      %v1228 = vadd.f32 0.0, %v1227
      %v1229 = vpop.f32.mrf.mxu0
      %v1230 = vadd.f32 0.0, %v1229
      %1231 = vmatmul.bf16.gmra.mxu0 %v1189
      %v1232 = vpop.f32.mrf.mxu0
      %v1233 = vadd.f32 0.0, %v1232
      %v1234 = vpop.f32.mrf.mxu0
      %v1235 = vadd.f32 0.0, %v1234
      %1236 = vmatmul.bf16.gmra.mxu0 %v1192
      %v1237 = vpop.f32.mrf.mxu0
      %v1238 = vadd.f32 0.0, %v1237
      %v1239 = vpop.f32.mrf.mxu0
      %v1240 = vadd.f32 0.0, %v1239
      %1241 = vmatmul.bf16.gmra.mxu0 %v1195
      %v1242 = vpop.f32.mrf.mxu0
      %v1243 = vadd.f32 0.0, %v1242
      %v1244 = vpop.f32.mrf.mxu0
      %v1245 = vadd.f32 0.0, %v1244
      %1246 = vmatmul.bf16.gmra.mxu0 %v1198
      %v1247 = vpop.f32.mrf.mxu0
      %v1248 = vadd.f32 0.0, %v1247
      %v1249 = vpop.f32.mrf.mxu0
      %v1250 = vadd.f32 0.0, %v1249
      %1251 = vdwg.mxu0
      %v1252 = vadd.f32 %v942, %v1213
      %v1253 = vadd.f32 %v943, %v1215
      %v1254 = vadd.f32 %v944, %v1218
      %v1255 = vadd.f32 %v945, %v1220
      %v1256 = vadd.f32 %v946, %v1223
      %v1257 = vadd.f32 %v947, %v1225
      %v1258 = vadd.f32 %v948, %v1228
      %v1259 = vadd.f32 %v949, %v1230
      %v1260 = vadd.f32 %v950, %v1233
      %v1261 = vadd.f32 %v951, %v1235
      %v1262 = vadd.f32 %v952, %v1238
      %v1263 = vadd.f32 %v953, %v1240
      %v1264 = vadd.f32 %v954, %v1243
      %v1265 = vadd.f32 %v955, %v1245
      %v1266 = vadd.f32 %v956, %v1248
      %v1267 = vadd.f32 %v957, %v1250
      %v1276 = vrot.slane %v175, 5
      %v1277 = vrot.slane %v1276, 4
      %v1278 = vrot.slane %v176, 5
      %v1279 = vsel %vm649, %v1277, %v1278
      %v1280 = vrot.slane %v1278, 4
      %v1281 = vrot.slane %v177, 5
      %v1282 = vsel %vm649, %v1280, %v1281
      %v1283 = vrot.slane %v181, 5
      %v1284 = vrot.slane %v1283, 4
      %v1285 = vrot.slane %v182, 5
      %v1286 = vsel %vm649, %v1284, %v1285
      %v1287 = vrot.slane %v1285, 4
      %v1288 = vrot.slane %v183, 5
      %v1289 = vsel %vm649, %v1287, %v1288
      %v1290 = vrot.slane %v187, 5
      %v1291 = vrot.slane %v1290, 4
      %v1292 = vrot.slane %v188, 5
      %v1293 = vsel %vm649, %v1291, %v1292
      %v1294 = vrot.slane %v1292, 4
      %v1295 = vrot.slane %v189, 5
      %v1296 = vsel %vm649, %v1294, %v1295
      %v1297 = vrot.slane %v193, 5
      %v1298 = vrot.slane %v1297, 4
      %v1299 = vrot.slane %v194, 5
      %v1300 = vsel %vm649, %v1298, %v1299
      %v1301 = vrot.slane %v1299, 4
      %v1302 = vrot.slane %v195, 5
      %v1303 = vsel %vm649, %v1301, %v1302
      %v1304 = vrot.slane %v199, 5
      %v1305 = vrot.slane %v1304, 4
      %v1306 = vrot.slane %v200, 5
      %v1307 = vsel %vm649, %v1305, %v1306
      %v1308 = vrot.slane %v1306, 4
      %v1309 = vrot.slane %v201, 5
      %v1310 = vsel %vm649, %v1308, %v1309
      %v1311 = vrot.slane %v205, 5
      %v1312 = vrot.slane %v1311, 4
      %v1313 = vrot.slane %v206, 5
      %v1314 = vsel %vm649, %v1312, %v1313
      %v1315 = vrot.slane %v1313, 4
      %v1316 = vrot.slane %v207, 5
      %v1317 = vsel %vm649, %v1315, %v1316
      %v1318 = vrot.slane %v211, 5
      %v1319 = vrot.slane %v1318, 4
      %v1320 = vrot.slane %v212, 5
      %v1321 = vsel %vm649, %v1319, %v1320
      %v1322 = vrot.slane %v1320, 4
      %v1323 = vrot.slane %v213, 5
      %v1324 = vsel %vm649, %v1322, %v1323
      %v1325 = vrot.slane %v217, 5
      %v1326 = vrot.slane %v1325, 4
      %v1327 = vrot.slane %v218, 5
      %v1328 = vsel %vm649, %v1326, %v1327
      %v1329 = vrot.slane %v1327, 4
      %v1330 = vrot.slane %v219, 5
      %v1331 = vsel %vm649, %v1329, %v1330
      %s1332 = scalar_lea.vmem %s1, 10
      %v1333 = vld [vmem:[%s1332] sm:$0x3]
      %v1334 = vunpack.c.l.b16 %v1279
      %v1335 = vunpack.c.l.b16 %v1282
      %v1336 = vunpack.c.l.b16 %v1286
      %v1337 = vunpack.c.l.b16 %v1289
      %v1338 = vunpack.c.l.b16 %v1293
      %v1339 = vunpack.c.l.b16 %v1296
      %v1340 = vunpack.c.l.b16 %v1300
      %v1341 = vunpack.c.l.b16 %v1303
      %v1342 = vunpack.c.l.b16 %v1307
      %v1343 = vunpack.c.l.b16 %v1310
      %v1344 = vunpack.c.l.b16 %v1314
      %v1345 = vunpack.c.l.b16 %v1317
      %v1346 = vunpack.c.l.b16 %v1321
      %v1347 = vunpack.c.l.b16 %v1324
      %v1348 = vunpack.c.l.b16 %v1328
      %v1349 = vunpack.c.l.b16 %v1331
      %v1350 = vpack.c.b16 %v1335, %v1334
      %v1351 = vpack.c.b16 %v1337, %v1336
      %v1352 = vpack.c.b16 %v1339, %v1338
      %v1353 = vpack.c.b16 %v1341, %v1340
      %v1354 = vpack.c.b16 %v1343, %v1342
      %v1355 = vpack.c.b16 %v1345, %v1344
      %v1356 = vpack.c.b16 %v1347, %v1346
      %v1357 = vpack.c.b16 %v1349, %v1348
      %v1359 = vsel %vm445, %v1350, 0
      %v1362 = vsel %vm445, %v1351, 0
      %v1365 = vsel %vm445, %v1352, 0
      %v1368 = vsel %vm445, %v1353, 0
      %v1371 = vsel %vm445, %v1354, 0
      %v1374 = vsel %vm445, %v1355, 0
      %v1377 = vsel %vm445, %v1356, 0
      %v1380 = vsel %vm445, %v1357, 0
      %v1383 = vsel %vm470, %v1333, 0
      %1385 = vmatpush.bf16.msra.mxu0 0
      %1386 = vmatpush.bf16.msra.mxu0 0
      %1387 = vmatpush.bf16.msra.mxu0 0
      %1388 = vmatpush.bf16.msra.mxu0 0
      %1389 = vmatpush.bf16.msra.mxu0 0
      %1390 = vmatpush.bf16.msra.mxu0 0
      %1391 = vmatpush.bf16.msra.mxu0 0
      %1392 = vmatpush.bf16.msra.mxu0 %v1383
      %1393 = vmatmul.bf16.gmra.mxu0 %v1359
      %v1394 = vpop.f32.mrf.mxu0
      %v1395 = vadd.f32 0.0, %v1394
      %v1396 = vpop.f32.mrf.mxu0
      %v1397 = vadd.f32 0.0, %v1396
      %1398 = vmatmul.bf16.gmra.mxu0 %v1362
      %v1399 = vpop.f32.mrf.mxu0
      %v1400 = vadd.f32 0.0, %v1399
      %v1401 = vpop.f32.mrf.mxu0
      %v1402 = vadd.f32 0.0, %v1401
      %1403 = vmatmul.bf16.gmra.mxu0 %v1365
      %v1404 = vpop.f32.mrf.mxu0
      %v1405 = vadd.f32 0.0, %v1404
      %v1406 = vpop.f32.mrf.mxu0
      %v1407 = vadd.f32 0.0, %v1406
      %1408 = vmatmul.bf16.gmra.mxu0 %v1368
      %v1409 = vpop.f32.mrf.mxu0
      %v1410 = vadd.f32 0.0, %v1409
      %v1411 = vpop.f32.mrf.mxu0
      %v1412 = vadd.f32 0.0, %v1411
      %1413 = vmatmul.bf16.gmra.mxu0 %v1371
      %v1414 = vpop.f32.mrf.mxu0
      %v1415 = vadd.f32 0.0, %v1414
      %v1416 = vpop.f32.mrf.mxu0
      %v1417 = vadd.f32 0.0, %v1416
      %1418 = vmatmul.bf16.gmra.mxu0 %v1374
      %v1419 = vpop.f32.mrf.mxu0
      %v1420 = vadd.f32 0.0, %v1419
      %v1421 = vpop.f32.mrf.mxu0
      %v1422 = vadd.f32 0.0, %v1421
      %1423 = vmatmul.bf16.gmra.mxu0 %v1377
      %v1424 = vpop.f32.mrf.mxu0
      %v1425 = vadd.f32 0.0, %v1424
      %v1426 = vpop.f32.mrf.mxu0
      %v1427 = vadd.f32 0.0, %v1426
      %1428 = vmatmul.bf16.gmra.mxu0 %v1380
      %v1429 = vpop.f32.mrf.mxu0
      %v1430 = vadd.f32 0.0, %v1429
      %v1431 = vpop.f32.mrf.mxu0
      %v1432 = vadd.f32 0.0, %v1431
      %1433 = vdwg.mxu0
      %v1434 = vadd.f32 %v1252, %v1395
      %v1435 = vadd.f32 %v1253, %v1397
      %v1436 = vadd.f32 %v1254, %v1400
      %v1437 = vadd.f32 %v1255, %v1402
      %v1438 = vadd.f32 %v1256, %v1405
      %v1439 = vadd.f32 %v1257, %v1407
      %v1440 = vadd.f32 %v1258, %v1410
      %v1441 = vadd.f32 %v1259, %v1412
      %v1442 = vadd.f32 %v1260, %v1415
      %v1443 = vadd.f32 %v1261, %v1417
      %v1444 = vadd.f32 %v1262, %v1420
      %v1445 = vadd.f32 %v1263, %v1422
      %v1446 = vadd.f32 %v1264, %v1425
      %v1447 = vadd.f32 %v1265, %v1427
      %v1448 = vadd.f32 %v1266, %v1430
      %v1449 = vadd.f32 %v1267, %v1432
      %s1450 = scalar_lea.vmem %s1, 12
      %v1451 = vld [vmem:[%s1450] sm:$0x3]
      %v1454 = vunpack.c.l.b16 %v220
      %v1455 = vunpack.c.l.b16 %v221
      %v1456 = vpack.c.b16 %v1455, %v1454
      %v1458 = vsel %vm445, %v1456, 0
      %v1461 = vsel %vm470, %v1451, 0
      %1463 = vmatpush.bf16.msra.mxu0 0
      %1464 = vmatpush.bf16.msra.mxu0 0
      %1465 = vmatpush.bf16.msra.mxu0 0
      %1466 = vmatpush.bf16.msra.mxu0 0
      %1467 = vmatpush.bf16.msra.mxu0 0
      %1468 = vmatpush.bf16.msra.mxu0 0
      %1469 = vmatpush.bf16.msra.mxu0 0
      %1470 = vmatpush.bf16.msra.mxu0 %v1461
      %1471 = vmatmul.bf16.gmra.mxu0 %v567
      %v1472 = vpop.f32.mrf.mxu0
      %v1473 = vadd.f32 0.0, %v1472
      %v1474 = vpop.f32.mrf.mxu0
      %v1475 = vadd.f32 0.0, %v1474
      %1476 = vmatmul.bf16.gmra.mxu0 %v570
      %v1477 = vpop.f32.mrf.mxu0
      %v1478 = vadd.f32 0.0, %v1477
      %v1479 = vpop.f32.mrf.mxu0
      %v1480 = vadd.f32 0.0, %v1479
      %1481 = vmatmul.bf16.gmra.mxu0 %v573
      %v1482 = vpop.f32.mrf.mxu0
      %v1483 = vadd.f32 0.0, %v1482
      %v1484 = vpop.f32.mrf.mxu0
      %v1485 = vadd.f32 0.0, %v1484
      %1486 = vmatmul.bf16.gmra.mxu0 %v576
      %v1487 = vpop.f32.mrf.mxu0
      %v1488 = vadd.f32 0.0, %v1487
      %v1489 = vpop.f32.mrf.mxu0
      %v1490 = vadd.f32 0.0, %v1489
      %1491 = vmatmul.bf16.gmra.mxu0 %v579
      %v1492 = vpop.f32.mrf.mxu0
      %v1493 = vadd.f32 0.0, %v1492
      %v1494 = vpop.f32.mrf.mxu0
      %v1495 = vadd.f32 0.0, %v1494
      %1496 = vmatmul.bf16.gmra.mxu0 %v582
      %v1497 = vpop.f32.mrf.mxu0
      %v1498 = vadd.f32 0.0, %v1497
      %v1499 = vpop.f32.mrf.mxu0
      %v1500 = vadd.f32 0.0, %v1499
      %1501 = vmatmul.bf16.gmra.mxu0 %v585
      %v1502 = vpop.f32.mrf.mxu0
      %v1503 = vadd.f32 0.0, %v1502
      %v1504 = vpop.f32.mrf.mxu0
      %v1505 = vadd.f32 0.0, %v1504
      %1506 = vmatmul.bf16.gmra.mxu0 %v1458
      %v1507 = vpop.f32.mrf.mxu0
      %v1508 = vadd.f32 0.0, %v1507
      %v1509 = vpop.f32.mrf.mxu0
      %v1510 = vadd.f32 0.0, %v1509
      %1511 = vdwg.mxu0
      %v1512 = vadd.f32 %v1434, %v1473
      %v1513 = vadd.f32 %v1435, %v1475
      %v1514 = vadd.f32 %v1436, %v1478
      %v1515 = vadd.f32 %v1437, %v1480
      %v1516 = vadd.f32 %v1438, %v1483
      %v1517 = vadd.f32 %v1439, %v1485
      %v1518 = vadd.f32 %v1440, %v1488
      %v1519 = vadd.f32 %v1441, %v1490
      %v1520 = vadd.f32 %v1442, %v1493
      %v1521 = vadd.f32 %v1443, %v1495
      %v1522 = vadd.f32 %v1444, %v1498
      %v1523 = vadd.f32 %v1445, %v1500
      %v1524 = vadd.f32 %v1446, %v1503
      %v1525 = vadd.f32 %v1447, %v1505
      %v1526 = vadd.f32 %v1448, %v1508
      %v1527 = vadd.f32 %v1449, %v1510
      %v1529 = vshrl.u32 %v220, 16
      %v1531 = vrot.slane %v1529, 4
      %v1532 = vshll.u32 %v220, 16
      %v1534 = vrot.slane %v1532, 5
      %v1535 = vor.u32 %v1531, %v1534
      %v1536 = vrot.slane %v1535, 4
      %v1538 = vshll.u32 %v221, 16
      %v1540 = vrot.slane %v1538, 5
      %v1541 = vsel %vm226, %v1536, %v1540
      %v1542 = vshrl.u32 %v221, 16
      %v1544 = vrot.slane %v1542, 4
      %v1545 = vor.u32 %v1544, %v1540
      %v1546 = vrot.slane %v1545, 4
      %v1548 = vshll.u32 %v222, 16
      %v1550 = vrot.slane %v1548, 5
      %v1551 = vsel %vm226, %v1546, %v1550
      %s1552 = scalar_lea.vmem %s1, 14
      %v1553 = vld [vmem:[%s1552] sm:$0x3]
      %v1554 = vunpack.c.l.b16 %v1541
      %v1555 = vunpack.c.l.b16 %v1551
      %v1556 = vpack.c.b16 %v1555, %v1554
      %v1558 = vsel %vm445, %v1556, 0
      %v1561 = vsel %vm470, %v1553, 0
      %1563 = vmatpush.bf16.msra.mxu0 0
      %1564 = vmatpush.bf16.msra.mxu0 0
      %1565 = vmatpush.bf16.msra.mxu0 0
      %1566 = vmatpush.bf16.msra.mxu0 0
      %1567 = vmatpush.bf16.msra.mxu0 0
      %1568 = vmatpush.bf16.msra.mxu0 0
      %1569 = vmatpush.bf16.msra.mxu0 0
      %1570 = vmatpush.bf16.msra.mxu0 %v1561
      %1571 = vmatmul.bf16.gmra.mxu0 %v450
      %v1572 = vpop.f32.mrf.mxu0
      %v1573 = vadd.f32 0.0, %v1572
      %v1574 = vpop.f32.mrf.mxu0
      %v1575 = vadd.f32 0.0, %v1574
      %1576 = vmatmul.bf16.gmra.mxu0 %v453
      %v1577 = vpop.f32.mrf.mxu0
      %v1578 = vadd.f32 0.0, %v1577
      %v1579 = vpop.f32.mrf.mxu0
      %v1580 = vadd.f32 0.0, %v1579
      %1581 = vmatmul.bf16.gmra.mxu0 %v456
      %v1582 = vpop.f32.mrf.mxu0
      %v1583 = vadd.f32 0.0, %v1582
      %v1584 = vpop.f32.mrf.mxu0
      %v1585 = vadd.f32 0.0, %v1584
      %1586 = vmatmul.bf16.gmra.mxu0 %v459
      %v1587 = vpop.f32.mrf.mxu0
      %v1588 = vadd.f32 0.0, %v1587
      %v1589 = vpop.f32.mrf.mxu0
      %v1590 = vadd.f32 0.0, %v1589
      %1591 = vmatmul.bf16.gmra.mxu0 %v462
      %v1592 = vpop.f32.mrf.mxu0
      %v1593 = vadd.f32 0.0, %v1592
      %v1594 = vpop.f32.mrf.mxu0
      %v1595 = vadd.f32 0.0, %v1594
      %1596 = vmatmul.bf16.gmra.mxu0 %v465
      %v1597 = vpop.f32.mrf.mxu0
      %v1598 = vadd.f32 0.0, %v1597
      %v1599 = vpop.f32.mrf.mxu0
      %v1600 = vadd.f32 0.0, %v1599
      %1601 = vmatmul.bf16.gmra.mxu0 %v468
      %v1602 = vpop.f32.mrf.mxu0
      %v1603 = vadd.f32 0.0, %v1602
      %v1604 = vpop.f32.mrf.mxu0
      %v1605 = vadd.f32 0.0, %v1604
      %1606 = vmatmul.bf16.gmra.mxu0 %v1558
      %v1607 = vpop.f32.mrf.mxu0
      %v1608 = vadd.f32 0.0, %v1607
      %v1609 = vpop.f32.mrf.mxu0
      %v1610 = vadd.f32 0.0, %v1609
      %1611 = vdwg.mxu0
      %v1612 = vadd.f32 %v1512, %v1573
      %v1613 = vadd.f32 %v1513, %v1575
      %v1614 = vadd.f32 %v1514, %v1578
      %v1615 = vadd.f32 %v1515, %v1580
      %v1616 = vadd.f32 %v1516, %v1583
      %v1617 = vadd.f32 %v1517, %v1585
      %v1618 = vadd.f32 %v1518, %v1588
      %v1619 = vadd.f32 %v1519, %v1590
      %v1620 = vadd.f32 %v1520, %v1593
      %v1621 = vadd.f32 %v1521, %v1595
      %v1622 = vadd.f32 %v1522, %v1598
      %v1623 = vadd.f32 %v1523, %v1600
      %v1624 = vadd.f32 %v1524, %v1603
      %v1625 = vadd.f32 %v1525, %v1605
      %v1626 = vadd.f32 %v1526, %v1608
      %v1627 = vadd.f32 %v1527, %v1610
      %v1629 = vrot.slane %v220, 5
      %v1630 = vrot.slane %v1629, 4
      %v1631 = vrot.slane %v221, 5
      %v1632 = vsel %vm649, %v1630, %v1631
      %v1633 = vrot.slane %v1631, 4
      %v1634 = vrot.slane %v222, 5
      %v1635 = vsel %vm649, %v1633, %v1634
      %s1636 = scalar_lea.vmem %s1, 16
      %v1637 = vld [vmem:[%s1636] sm:$0x3]
      %v1638 = vunpack.c.l.b16 %v1632
      %v1639 = vunpack.c.l.b16 %v1635
      %v1640 = vpack.c.b16 %v1639, %v1638
      %v1642 = vsel %vm445, %v1640, 0
      %v1645 = vsel %vm470, %v1637, 0
      %1647 = vmatpush.bf16.msra.mxu0 0
      %1648 = vmatpush.bf16.msra.mxu0 0
      %1649 = vmatpush.bf16.msra.mxu0 0
      %1650 = vmatpush.bf16.msra.mxu0 0
      %1651 = vmatpush.bf16.msra.mxu0 0
      %1652 = vmatpush.bf16.msra.mxu0 0
      %1653 = vmatpush.bf16.msra.mxu0 0
      %1654 = vmatpush.bf16.msra.mxu0 %v1645
      %1655 = vmatmul.bf16.gmra.mxu0 %v736
      %v1656 = vpop.f32.mrf.mxu0
      %v1657 = vadd.f32 0.0, %v1656
      %v1658 = vpop.f32.mrf.mxu0
      %v1659 = vadd.f32 0.0, %v1658
      %1660 = vmatmul.bf16.gmra.mxu0 %v739
      %v1661 = vpop.f32.mrf.mxu0
      %v1662 = vadd.f32 0.0, %v1661
      %v1663 = vpop.f32.mrf.mxu0
      %v1664 = vadd.f32 0.0, %v1663
      %1665 = vmatmul.bf16.gmra.mxu0 %v742
      %v1666 = vpop.f32.mrf.mxu0
      %v1667 = vadd.f32 0.0, %v1666
      %v1668 = vpop.f32.mrf.mxu0
      %v1669 = vadd.f32 0.0, %v1668
      %1670 = vmatmul.bf16.gmra.mxu0 %v745
      %v1671 = vpop.f32.mrf.mxu0
      %v1672 = vadd.f32 0.0, %v1671
      %v1673 = vpop.f32.mrf.mxu0
      %v1674 = vadd.f32 0.0, %v1673
      %1675 = vmatmul.bf16.gmra.mxu0 %v748
      %v1676 = vpop.f32.mrf.mxu0
      %v1677 = vadd.f32 0.0, %v1676
      %v1678 = vpop.f32.mrf.mxu0
      %v1679 = vadd.f32 0.0, %v1678
      %1680 = vmatmul.bf16.gmra.mxu0 %v751
      %v1681 = vpop.f32.mrf.mxu0
      %v1682 = vadd.f32 0.0, %v1681
      %v1683 = vpop.f32.mrf.mxu0
      %v1684 = vadd.f32 0.0, %v1683
      %1685 = vmatmul.bf16.gmra.mxu0 %v754
      %v1686 = vpop.f32.mrf.mxu0
      %v1687 = vadd.f32 0.0, %v1686
      %v1688 = vpop.f32.mrf.mxu0
      %v1689 = vadd.f32 0.0, %v1688
      %1690 = vmatmul.bf16.gmra.mxu0 %v1642
      %v1691 = vpop.f32.mrf.mxu0
      %v1692 = vadd.f32 0.0, %v1691
      %v1693 = vpop.f32.mrf.mxu0
      %v1694 = vadd.f32 0.0, %v1693
      %1695 = vdwg.mxu0
      %v1696 = vadd.f32 %v1612, %v1657
      %v1697 = vadd.f32 %v1613, %v1659
      %v1698 = vadd.f32 %v1614, %v1662
      %v1699 = vadd.f32 %v1615, %v1664
      %v1700 = vadd.f32 %v1616, %v1667
      %v1701 = vadd.f32 %v1617, %v1669
      %v1702 = vadd.f32 %v1618, %v1672
      %v1703 = vadd.f32 %v1619, %v1674
      %v1704 = vadd.f32 %v1620, %v1677
      %v1705 = vadd.f32 %v1621, %v1679
      %v1706 = vadd.f32 %v1622, %v1682
      %v1707 = vadd.f32 %v1623, %v1684
      %v1708 = vadd.f32 %v1624, %v1687
      %v1709 = vadd.f32 %v1625, %v1689
      %v1710 = vadd.f32 %v1626, %v1692
      %v1711 = vadd.f32 %v1627, %v1694
      %v1712 = vld [vmem:[%s2] sm:$0x1]
      %v1714 = vperm.slane %v1712, 0
      %v1716 = vadd.f32 %v1696, %v1714
      %v1717 = vadd.f32 %v1697, %v1714
      %v1718 = vadd.f32 %v1698, %v1714
      %v1719 = vadd.f32 %v1699, %v1714
      %v1720 = vadd.f32 %v1700, %v1714
      %v1721 = vadd.f32 %v1701, %v1714
      %v1722 = vadd.f32 %v1702, %v1714
      %v1723 = vadd.f32 %v1703, %v1714
      %v1724 = vadd.f32 %v1704, %v1714
      %v1725 = vadd.f32 %v1705, %v1714
      %v1726 = vadd.f32 %v1706, %v1714
      %v1727 = vadd.f32 %v1707, %v1714
      %v1728 = vadd.f32 %v1708, %v1714
      %v1729 = vadd.f32 %v1709, %v1714
      %v1730 = vadd.f32 %v1710, %v1714
      %v1731 = vadd.f32 %v1711, %v1714
      %v1732 = vmax.f32 %v1716, 0.0
      %v1733 = vmax.f32 %v1717, 0.0
      %v1734 = vmax.f32 %v1718, 0.0
      %v1735 = vmax.f32 %v1719, 0.0
      %v1736 = vmax.f32 %v1720, 0.0
      %v1737 = vmax.f32 %v1721, 0.0
      %v1738 = vmax.f32 %v1722, 0.0
      %v1739 = vmax.f32 %v1723, 0.0
      %v1740 = vmax.f32 %v1724, 0.0
      %v1741 = vmax.f32 %v1725, 0.0
      %v1742 = vmax.f32 %v1726, 0.0
      %v1743 = vmax.f32 %v1727, 0.0
      %v1744 = vmax.f32 %v1728, 0.0
      %v1745 = vmax.f32 %v1729, 0.0
      %v1746 = vmax.f32 %v1730, 0.0
      %v1747 = vmax.f32 %v1731, 0.0
      %v1748 = vpack.c.bf16 %v1732, %v1732
      %v1749 = vpack.c.bf16 %v1733, %v1733
      %v1750 = vpack.c.bf16 %v1734, %v1734
      %v1751 = vpack.c.bf16 %v1735, %v1735
      %v1752 = vpack.c.bf16 %v1736, %v1736
      %v1753 = vpack.c.bf16 %v1737, %v1737
      %v1754 = vpack.c.bf16 %v1738, %v1738
      %v1755 = vpack.c.bf16 %v1739, %v1739
      %v1756 = vpack.c.bf16 %v1740, %v1740
      %v1757 = vpack.c.bf16 %v1741, %v1741
      %v1758 = vpack.c.bf16 %v1742, %v1742
      %v1759 = vpack.c.bf16 %v1743, %v1743
      %v1760 = vpack.c.bf16 %v1744, %v1744
      %v1761 = vpack.c.bf16 %v1745, %v1745
      %v1762 = vpack.c.bf16 %v1746, %v1746
      %v1763 = vpack.c.bf16 %v1747, %v1747
      %vm1764 = vcmask 27648
      %1765 = vst.msk [vmem:[%s170] sm:$0xf] %vm1764, %v1748
      %1766 = vst.msk [vmem:[%s170 + $0x4] sm:$0xf] %vm1764, %v1749
      %1767 = vst.msk [vmem:[%s170 + $0x8] sm:$0xf] %vm1764, %v1750
      %1768 = vst.msk [vmem:[%s170 + $0xc] sm:$0xf] %vm1764, %v1751
      %1769 = vst.msk [vmem:[%s170 + $0x10] sm:$0xf] %vm1764, %v1752
      %1770 = vst.msk [vmem:[%s170 + $0x14] sm:$0xf] %vm1764, %v1753
      %1771 = vst.msk [vmem:[%s170 + $0x18] sm:$0xf] %vm1764, %v1754
      %1772 = vst.msk [vmem:[%s170 + $0x1c] sm:$0xf] %vm1764, %v1755
      %1773 = vst.msk [vmem:[%s170 + $0x20] sm:$0xf] %vm1764, %v1756
      %1774 = vst.msk [vmem:[%s170 + $0x24] sm:$0xf] %vm1764, %v1757
      %1775 = vst.msk [vmem:[%s170 + $0x28] sm:$0xf] %vm1764, %v1758
      %1776 = vst.msk [vmem:[%s170 + $0x2c] sm:$0xf] %vm1764, %v1759
      %1777 = vst.msk [vmem:[%s170 + $0x30] sm:$0xf] %vm1764, %v1760
      %1778 = vst.msk [vmem:[%s170 + $0x34] sm:$0xf] %vm1764, %v1761
      %1779 = vst.msk [vmem:[%s170 + $0x38] sm:$0xf] %vm1764, %v1762
      %1780 = vst.msk [vmem:[%s170 + $0x3c] sm:$0xf] %vm1764, %v1763
      %p1781 = scmp.lt.s32.totalorder %s14, 1
      %s1782 = scalar_select %p1781, %s14, 1
      %s1783 = smul.addr %s1782, 16
      %s1784 = smul.addr %s1783, 4
      %s1785 = scalar_lea.vmem %s3, %s1784
      // Predicated region
      $region33: #{bottleneck_forward.5} parent=31 // pred_check
        %p1786 = pneg %p100
      $region34: #{bottleneck_forward.5} parent=31 // pred_check_branch
        %1788 = sbr.rel (%p1786) target = $region36
      $region35: #{bottleneck_forward.5} parent=31 // pred_region
        _
      $region36: #{bottleneck_forward.5} parent=31 // pred_fallthru
        _
    $region32: #{bottleneck_forward.5} parent=5 // pred_fallthru
      _
    %p1789 = scmp.le.s32.totalorder 2, %s9
    // Predicated region
    $region37: #{bottleneck_forward.5} parent=5 // pred_check
      %p1790 = pneg %p1789
    $region38: #{bottleneck_forward.5} parent=5 // pred_check_branch
      %1792 = sbr.rel (%p1790) target = $region40
    $region39: #{bottleneck_forward.5} parent=5 // pred_region
      %s1793 = ssub.s32 %s9, 2
      // Predicated region
      $region41: #{bottleneck_forward.5} parent=39 // pred_check
        %p1794 = pneg %p106
      $region42: #{bottleneck_forward.5} parent=39 // pred_check_branch
        %1796 = sbr.rel (%p1794) target = $region44
      $region43: #{bottleneck_forward.5} parent=39 // pred_region
        %p1797 = scmp.lt.s32.totalorder %s15, 1
        %s1798 = scalar_select %p1797, %s15, 1
        %s1799 = smul.addr %s1798, 16
        %s1800 = smul.addr %s1799, 4
        %s1801 = scalar_lea.vmem %s3, %s1800
      $region44: #{bottleneck_forward.5} parent=39 // pred_fallthru
        _
    $region40: #{bottleneck_forward.5} parent=5 // pred_fallthru
      _
  $region6: #{bottleneck_forward.5} parent=0 // loop_footer
    %s13 = sadd.s32 1, %s9
  $region7: #{bottleneck_forward.5} parent=0 // loop_footer_branch
    %8 = sbr.rel target = $region3
  $region8: #{bottleneck_forward.5} parent=0 // loop_exit
    _

</llo_original>
